<compile_context>
chip_gen: v6e
topology: v6e:2x2x1
jax: 0.10.0
libtpu: 0.0.40
codegen_flags: <defaults>
</compile_context>

<pallas_src>
import functools
import math

import jax
import jax.numpy as jnp
from jax import lax
from jax.experimental import pallas as pl
from jax.experimental.pallas import tpu as pltpu


def _rdb_conv_kernel(x_ref, w_ref, b_ref, out_ref, col_ref, *,
                     H, W, K, pad, Cin, G, NB):
    # x_ref:   (NB, H, W, Cin)        un-padded NHWC input block
    # w_ref:   (K*K*Cin, G)           weights, rows ordered (dy, dx, cin)
    # b_ref:   (1, G)                 bias
    # out_ref: (NB, H, W, G)          relu(conv(x))   (concat done in wrapper)
    # col_ref: VMEM (NB, H, W, K*K*Cin)  im2col LHS scratch
    dt = x_ref.dtype

    # im2col assembly: per tap, copy the valid shifted window and zero-fill only the
    # out-of-image border strips for that tap (no full padded-input buffer, no full
    # memset).  All slice bounds are Python ints -> static, fully unrolled.
    for dy in range(K):
        for dx in range(K):
            oy, ox = dy - pad, dx - pad
            c0 = (dy * K + dx) * Cin
            y0, y1 = max(0, -oy), min(H, H - oy)
            x0, x1 = max(0, -ox), min(W, W - ox)
            col_ref[:, y0:y1, x0:x1, c0:c0 + Cin] = (
                x_ref[:, y0 + oy:y1 + oy, x0 + ox:x1 + ox, :])
            if y0 > 0:       # rows reading above the image -> zeros
                col_ref[:, 0:y0, :, c0:c0 + Cin] = jnp.zeros((NB, y0, W, Cin), dt)
            if y1 < H:       # rows reading below the image -> zeros
                col_ref[:, y1:H, :, c0:c0 + Cin] = jnp.zeros((NB, H - y1, W, Cin), dt)
            if x0 > 0:       # cols reading left of the image -> zeros
                col_ref[:, y0:y1, 0:x0, c0:c0 + Cin] = jnp.zeros(
                    (NB, y1 - y0, x0, Cin), dt)
            if x1 < W:       # cols reading right of the image -> zeros
                col_ref[:, y0:y1, x1:W, c0:c0 + Cin] = jnp.zeros(
                    (NB, y1 - y0, W - x1, Cin), dt)

    # Single fused MXU matmul: contraction depth K*K*Cin, f32 accumulation,
    # then bias + ReLU on the VPU and one full-block store.
    M = NB * H * W
    lhs = col_ref[...].reshape(M, K * K * Cin)
    acc = jnp.dot(lhs, w_ref[...], preferred_element_type=jnp.float32)   # (M, G)
    acc = acc + b_ref[...].astype(jnp.float32)                            # (1, G) bcast
    conv = jnp.maximum(acc, 0.0)
    out_ref[...] = conv.reshape(NB, H, W, G).astype(out_ref.dtype)


def _tile_padded_bytes(shape, dtype):
    """VMEM footprint with (8,128) tiling of the last two dims (conservative)."""
    shape = tuple(shape)
    if len(shape) == 1:
        shape = (1,) + shape
    *lead, s2, s1 = shape
    lead_n = 1
    for d in lead:
        lead_n *= int(d)
    s2p = -(-int(s2) // 8) * 8
    s1p = -(-int(s1) // 128) * 128
    return lead_n * s2p * s1p * jnp.dtype(dtype).itemsize


def _pick_batch_block(N, per_image_bytes, budget_bytes=12 << 20):
    """Largest divisor of N whose per-step working set fits the budget."""
    nb = int(max(1, min(N, budget_bytes // max(per_image_bytes, 1))))
    while N % nb:
        nb -= 1
    return nb


def rdb_conv_forward(x_nchw, weight, bias, kSize=3, nb=None):
    """x_nchw: (N, Cin, H, W); weight: (G, Cin, K, K); bias: (G,).
    Returns (N, Cin + G, H, W) -- same semantics as the PyTorch RDB_Conv."""
    N, Cin, H, W = x_nchw.shape
    G = weight.shape[0]
    K = kSize
    pad = (K - 1) // 2
    dt = x_nchw.dtype
    KKC = K * K * Cin

    # Per-image VMEM working set (tile-padded): double-buffered in/out blocks +
    # im2col scratch + loaded im2col value + f32 accumulator.
    per_image = (2 * _tile_padded_bytes((1, H, W, Cin), dt)
                 + 2 * _tile_padded_bytes((1, H, W, G), dt)
                 + _tile_padded_bytes((1, H, W, KKC), dt)
                 + _tile_padded_bytes((H * W, KKC), dt)
                 + _tile_padded_bytes((H * W, G), jnp.float32))
    if nb is None:
        nb = _pick_batch_block(N, per_image)
    assert N % nb == 0, "batch block must divide N"

    # Wrapper-side glue kept minimal: one NCHW->NHWC layout pass (channels on lanes)
    # plus tiny one-time weight/bias reshapes; no padding pass.
    x_nhwc = jnp.transpose(x_nchw, (0, 2, 3, 1))                          # (N,H,W,Cin)
    w_mat = jnp.transpose(weight, (2, 3, 1, 0)).reshape(KKC, G)           # rows (dy,dx,cin)
    b_mat = bias.reshape(1, G)

    kernel = functools.partial(_rdb_conv_kernel, H=H, W=W, K=K, pad=pad,
                               Cin=Cin, G=G, NB=nb)

    w_bytes = 2 * (_tile_padded_bytes((KKC, G), dt) + _tile_padded_bytes((1, G), dt))
    vmem_limit = int(min(64 << 20, max(16 << 20, nb * per_image + w_bytes + (4 << 20))))

    conv_nhwg = pl.pallas_call(
        kernel,
        out_shape=jax.ShapeDtypeStruct((N, H, W, G), dt),
        grid_spec=pltpu.PrefetchScalarGridSpec(
            num_scalar_prefetch=0,
            grid=(N // nb,),
            in_specs=[
                pl.BlockSpec((nb, H, W, Cin), lambda n: (n, 0, 0, 0)),
                pl.BlockSpec((KKC, G), lambda n: (0, 0)),   # resident across steps
                pl.BlockSpec((1, G), lambda n: (0, 0)),
            ],
            out_specs=pl.BlockSpec((nb, H, W, G), lambda n: (n, 0, 0, 0)),
            scratch_shapes=[
                pltpu.VMEM((nb, H, W, KKC), dt),             # im2col LHS
            ],
        ),
        compiler_params=pltpu.CompilerParams(
            dimension_semantics=("parallel",),
            vmem_limit_bytes=vmem_limit,
        ),
    )(x_nhwc, w_mat, b_mat)

    # Channel concat with the passthrough input as a full-width XLA copy
    # (avoids masked sub-128-lane concat stores in-kernel).
    conv_nchw = jnp.transpose(conv_nhwg, (0, 3, 1, 2))
    return jnp.concatenate([x_nchw, conv_nchw], axis=1)


def _reference(x_nchw, weight, bias):
    # Pure-JAX reference (XLA conv) for correctness checking.
    out = lax.conv_general_dilated(
        x_nchw, weight, window_strides=(1, 1), padding="SAME",
        dimension_numbers=("NCHW", "OIHW", "NCHW"))
    out = jnp.maximum(out + bias[None, :, None, None], 0.0)
    return jnp.concatenate([x_nchw, out], axis=1)


if __name__ == "__main__":
    key = jax.random.PRNGKey(0)
    kx, kw, kb = jax.random.split(key, 3)

    N, Cin, H, W = 2, 4, 16, 16
    G, K = 8, 3

    x = jax.random.normal(kx, (N, Cin, H, W), dtype=jnp.float32)
    weight = jax.random.normal(kw, (G, Cin, K, K), dtype=jnp.float32) * 0.1
    bias = jax.random.normal(kb, (G,), dtype=jnp.float32) * 0.1

    out = rdb_conv_forward(x, weight, bias, kSize=K)
    out = jax.block_until_ready(out)

    ref = _reference(x, weight, bias)
    assert out.shape == (N, Cin + G, H, W)
    assert jnp.allclose(out, ref, atol=1e-4, rtol=1e-4)

    print("KERNEL_OK")
</pallas_src>

<mosaic_0001>
module attributes {stable_mosaic.version = 11 : i64} {
  func.func @_rdb_conv_kernel(%arg0: i32, %arg1: memref<2x16x16x4xf32, #tpu.memory_space<vmem>>, %arg2: memref<36x8xf32, #tpu.memory_space<vmem>>, %arg3: memref<1x8xf32, #tpu.memory_space<vmem>>, %arg4: memref<2x16x16x8xf32, #tpu.memory_space<vmem>>, %arg5: memref<2x16x16x36xf32, #tpu.memory_space<vmem>>) attributes {dimension_semantics = [#tpu.dimension_semantics<parallel>], iteration_bounds = array<i64: 1>, scalar_prefetch = 0 : i64, scratch_operands = 1 : i64, tpu.core_type = #tpu.core_type<tc>, window_params = [{transform_indices = @transform_0, window_bounds = array<i64: 2, 16, 16, 4>}, {pipeline_mode = #tpu.pipeline_mode<synchronous>, transform_indices = @transform_1, window_bounds = array<i64: 36, 8>}, {pipeline_mode = #tpu.pipeline_mode<synchronous>, transform_indices = @transform_2, window_bounds = array<i64: 1, 8>}, {transform_indices = @transform_3, window_bounds = array<i64: 2, 16, 16, 8>}]} {
    %c0 = arith.constant 0 : index
    %c0_0 = arith.constant 0 : index
    %c0_1 = arith.constant 0 : index
    %c0_2 = arith.constant 0 : index
    %0 = vector.load %arg1[%c0, %c0_0, %c0_1, %c0_2] : memref<2x16x16x4xf32, #tpu.memory_space<vmem>>, vector<2x15x15x4xf32>
    %c0_3 = arith.constant 0 : index
    %c1 = arith.constant 1 : index
    %c1_4 = arith.constant 1 : index
    %c0_5 = arith.constant 0 : index
    %1 = vector.load %arg5[%c0_3, %c1, %c1_4, %c0_5] : memref<2x16x16x36xf32, #tpu.memory_space<vmem>>, vector<2x15x15x4xf32>
    tpu.vector_store %arg5[%c0_3, %c1, %c1_4, %c0_5], %0 {strides = array<i32>} : memref<2x16x16x36xf32, #tpu.memory_space<vmem>>, vector<2x15x15x4xf32>,
    %cst = arith.constant 0.000000e+00 : f32
    %2 = vector.broadcast %cst : f32 to vector<2x1x16x4xf32>
    %c0_6 = arith.constant 0 : index
    %c0_7 = arith.constant 0 : index
    %c0_8 = arith.constant 0 : index
    %c0_9 = arith.constant 0 : index
    %3 = vector.load %arg5[%c0_6, %c0_7, %c0_8, %c0_9] : memref<2x16x16x36xf32, #tpu.memory_space<vmem>>, vector<2x1x16x4xf32>
    tpu.vector_store %arg5[%c0_6, %c0_7, %c0_8, %c0_9], %2 {strides = array<i32>} : memref<2x16x16x36xf32, #tpu.memory_space<vmem>>, vector<2x1x16x4xf32>,
    %cst_10 = arith.constant 0.000000e+00 : f32
    %4 = vector.broadcast %cst_10 : f32 to vector<2x15x1x4xf32>
    %c0_11 = arith.constant 0 : index
    %c1_12 = arith.constant 1 : index
    %c0_13 = arith.constant 0 : index
    %c0_14 = arith.constant 0 : index
    %5 = vector.load %arg5[%c0_11, %c1_12, %c0_13, %c0_14] : memref<2x16x16x36xf32, #tpu.memory_space<vmem>>, vector<2x15x1x4xf32>
    tpu.vector_store %arg5[%c0_11, %c1_12, %c0_13, %c0_14], %4 {strides = array<i32>} : memref<2x16x16x36xf32, #tpu.memory_space<vmem>>, vector<2x15x1x4xf32>,
    %c0_15 = arith.constant 0 : index
    %c0_16 = arith.constant 0 : index
    %c0_17 = arith.constant 0 : index
    %c0_18 = arith.constant 0 : index
    %6 = vector.load %arg1[%c0_15, %c0_16, %c0_17, %c0_18] : memref<2x16x16x4xf32, #tpu.memory_space<vmem>>, vector<2x15x16x4xf32>
    %c0_19 = arith.constant 0 : index
    %c1_20 = arith.constant 1 : index
    %c0_21 = arith.constant 0 : index
    %c4 = arith.constant 4 : index
    %7 = vector.load %arg5[%c0_19, %c1_20, %c0_21, %c4] : memref<2x16x16x36xf32, #tpu.memory_space<vmem>>, vector<2x15x16x4xf32>
    tpu.vector_store %arg5[%c0_19, %c1_20, %c0_21, %c4], %6 {strides = array<i32>} : memref<2x16x16x36xf32, #tpu.memory_space<vmem>>, vector<2x15x16x4xf32>,
    %cst_22 = arith.constant 0.000000e+00 : f32
    %8 = vector.broadcast %cst_22 : f32 to vector<2x1x16x4xf32>
    %c0_23 = arith.constant 0 : index
    %c0_24 = arith.constant 0 : index
    %c0_25 = arith.constant 0 : index
    %c4_26 = arith.constant 4 : index
    %9 = vector.load %arg5[%c0_23, %c0_24, %c0_25, %c4_26] : memref<2x16x16x36xf32, #tpu.memory_space<vmem>>, vector<2x1x16x4xf32>
    tpu.vector_store %arg5[%c0_23, %c0_24, %c0_25, %c4_26], %8 {strides = array<i32>} : memref<2x16x16x36xf32, #tpu.memory_space<vmem>>, vector<2x1x16x4xf32>,
    %c0_27 = arith.constant 0 : index
    %c0_28 = arith.constant 0 : index
    %c1_29 = arith.constant 1 : index
    %c0_30 = arith.constant 0 : index
    %10 = vector.load %arg1[%c0_27, %c0_28, %c1_29, %c0_30] : memref<2x16x16x4xf32, #tpu.memory_space<vmem>>, vector<2x15x15x4xf32>
    %c0_31 = arith.constant 0 : index
    %c1_32 = arith.constant 1 : index
    %c0_33 = arith.constant 0 : index
    %c8 = arith.constant 8 : index
    %11 = vector.load %arg5[%c0_31, %c1_32, %c0_33, %c8] : memref<2x16x16x36xf32, #tpu.memory_space<vmem>>, vector<2x15x15x4xf32>
    tpu.vector_store %arg5[%c0_31, %c1_32, %c0_33, %c8], %10 {strides = array<i32>} : memref<2x16x16x36xf32, #tpu.memory_space<vmem>>, vector<2x15x15x4xf32>,
    %cst_34 = arith.constant 0.000000e+00 : f32
    %12 = vector.broadcast %cst_34 : f32 to vector<2x1x16x4xf32>
    %c0_35 = arith.constant 0 : index
    %c0_36 = arith.constant 0 : index
    %c0_37 = arith.constant 0 : index
    %c8_38 = arith.constant 8 : index
    %13 = vector.load %arg5[%c0_35, %c0_36, %c0_37, %c8_38] : memref<2x16x16x36xf32, #tpu.memory_space<vmem>>, vector<2x1x16x4xf32>
    tpu.vector_store %arg5[%c0_35, %c0_36, %c0_37, %c8_38], %12 {strides = array<i32>} : memref<2x16x16x36xf32, #tpu.memory_space<vmem>>, vector<2x1x16x4xf32>,
    %cst_39 = arith.constant 0.000000e+00 : f32
    %14 = vector.broadcast %cst_39 : f32 to vector<2x15x1x4xf32>
    %c0_40 = arith.constant 0 : index
    %c1_41 = arith.constant 1 : index
    %c15 = arith.constant 15 : index
    %c8_42 = arith.constant 8 : index
    %15 = vector.load %arg5[%c0_40, %c1_41, %c15, %c8_42] : memref<2x16x16x36xf32, #tpu.memory_space<vmem>>, vector<2x15x1x4xf32>
    tpu.vector_store %arg5[%c0_40, %c1_41, %c15, %c8_42], %14 {strides = array<i32>} : memref<2x16x16x36xf32, #tpu.memory_space<vmem>>, vector<2x15x1x4xf32>,
    %c0_43 = arith.constant 0 : index
    %c0_44 = arith.constant 0 : index
    %c0_45 = arith.constant 0 : index
    %c0_46 = arith.constant 0 : index
    %16 = vector.load %arg1[%c0_43, %c0_44, %c0_45, %c0_46] : memref<2x16x16x4xf32, #tpu.memory_space<vmem>>, vector<2x16x15x4xf32>
    %c0_47 = arith.constant 0 : index
    %c0_48 = arith.constant 0 : index
    %c1_49 = arith.constant 1 : index
    %c12 = arith.constant 12 : index
    %17 = vector.load %arg5[%c0_47, %c0_48, %c1_49, %c12] : memref<2x16x16x36xf32, #tpu.memory_space<vmem>>, vector<2x16x15x4xf32>
    tpu.vector_store %arg5[%c0_47, %c0_48, %c1_49, %c12], %16 {strides = array<i32>} : memref<2x16x16x36xf32, #tpu.memory_space<vmem>>, vector<2x16x15x4xf32>,
    %cst_50 = arith.constant 0.000000e+00 : f32
    %18 = vector.broadcast %cst_50 : f32 to vector<2x16x1x4xf32>
    %c0_51 = arith.constant 0 : index
    %c0_52 = arith.constant 0 : index
    %c0_53 = arith.constant 0 : index
    %c12_54 = arith.constant 12 : index
    %19 = vector.load %arg5[%c0_51, %c0_52, %c0_53, %c12_54] : memref<2x16x16x36xf32, #tpu.memory_space<vmem>>, vector<2x16x1x4xf32>
    tpu.vector_store %arg5[%c0_51, %c0_52, %c0_53, %c12_54], %18 {strides = array<i32>} : memref<2x16x16x36xf32, #tpu.memory_space<vmem>>, vector<2x16x1x4xf32>,
    %c0_55 = arith.constant 0 : index
    %c0_56 = arith.constant 0 : index
    %c0_57 = arith.constant 0 : index
    %c0_58 = arith.constant 0 : index
    %20 = vector.load %arg1[%c0_55, %c0_56, %c0_57, %c0_58] : memref<2x16x16x4xf32, #tpu.memory_space<vmem>>, vector<2x16x16x4xf32>
    %c0_59 = arith.constant 0 : index
    %c0_60 = arith.constant 0 : index
    %c0_61 = arith.constant 0 : index
    %c16 = arith.constant 16 : index
    %21 = vector.load %arg5[%c0_59, %c0_60, %c0_61, %c16] : memref<2x16x16x36xf32, #tpu.memory_space<vmem>>, vector<2x16x16x4xf32>
    tpu.vector_store %arg5[%c0_59, %c0_60, %c0_61, %c16], %20 {strides = array<i32>} : memref<2x16x16x36xf32, #tpu.memory_space<vmem>>, vector<2x16x16x4xf32>,
    %c0_62 = arith.constant 0 : index
    %c0_63 = arith.constant 0 : index
    %c1_64 = arith.constant 1 : index
    %c0_65 = arith.constant 0 : index
    %22 = vector.load %arg1[%c0_62, %c0_63, %c1_64, %c0_65] : memref<2x16x16x4xf32, #tpu.memory_space<vmem>>, vector<2x16x15x4xf32>
    %c0_66 = arith.constant 0 : index
    %c0_67 = arith.constant 0 : index
    %c0_68 = arith.constant 0 : index
    %c20 = arith.constant 20 : index
    %23 = vector.load %arg5[%c0_66, %c0_67, %c0_68, %c20] : memref<2x16x16x36xf32, #tpu.memory_space<vmem>>, vector<2x16x15x4xf32>
    tpu.vector_store %arg5[%c0_66, %c0_67, %c0_68, %c20], %22 {strides = array<i32>} : memref<2x16x16x36xf32, #tpu.memory_space<vmem>>, vector<2x16x15x4xf32>,
    %cst_69 = arith.constant 0.000000e+00 : f32
    %24 = vector.broadcast %cst_69 : f32 to vector<2x16x1x4xf32>
    %c0_70 = arith.constant 0 : index
    %c0_71 = arith.constant 0 : index
    %c15_72 = arith.constant 15 : index
    %c20_73 = arith.constant 20 : index
    %25 = vector.load %arg5[%c0_70, %c0_71, %c15_72, %c20_73] : memref<2x16x16x36xf32, #tpu.memory_space<vmem>>, vector<2x16x1x4xf32>
    tpu.vector_store %arg5[%c0_70, %c0_71, %c15_72, %c20_73], %24 {strides = array<i32>} : memref<2x16x16x36xf32, #tpu.memory_space<vmem>>, vector<2x16x1x4xf32>,
    %c0_74 = arith.constant 0 : index
    %c1_75 = arith.constant 1 : index
    %c0_76 = arith.constant 0 : index
    %c0_77 = arith.constant 0 : index
    %26 = vector.load %arg1[%c0_74, %c1_75, %c0_76, %c0_77] : memref<2x16x16x4xf32, #tpu.memory_space<vmem>>, vector<2x15x15x4xf32>
    %c0_78 = arith.constant 0 : index
    %c0_79 = arith.constant 0 : index
    %c1_80 = arith.constant 1 : index
    %c24 = arith.constant 24 : index
    %27 = vector.load %arg5[%c0_78, %c0_79, %c1_80, %c24] : memref<2x16x16x36xf32, #tpu.memory_space<vmem>>, vector<2x15x15x4xf32>
    tpu.vector_store %arg5[%c0_78, %c0_79, %c1_80, %c24], %26 {strides = array<i32>} : memref<2x16x16x36xf32, #tpu.memory_space<vmem>>, vector<2x15x15x4xf32>,
    %cst_81 = arith.constant 0.000000e+00 : f32
    %28 = vector.broadcast %cst_81 : f32 to vector<2x1x16x4xf32>
    %c0_82 = arith.constant 0 : index
    %c15_83 = arith.constant 15 : index
    %c0_84 = arith.constant 0 : index
    %c24_85 = arith.constant 24 : index
    %29 = vector.load %arg5[%c0_82, %c15_83, %c0_84, %c24_85] : memref<2x16x16x36xf32, #tpu.memory_space<vmem>>, vector<2x1x16x4xf32>
    tpu.vector_store %arg5[%c0_82, %c15_83, %c0_84, %c24_85], %28 {strides = array<i32>} : memref<2x16x16x36xf32, #tpu.memory_space<vmem>>, vector<2x1x16x4xf32>,
    %cst_86 = arith.constant 0.000000e+00 : f32
    %30 = vector.broadcast %cst_86 : f32 to vector<2x15x1x4xf32>
    %c0_87 = arith.constant 0 : index
    %c0_88 = arith.constant 0 : index
    %c0_89 = arith.constant 0 : index
    %c24_90 = arith.constant 24 : index
    %31 = vector.load %arg5[%c0_87, %c0_88, %c0_89, %c24_90] : memref<2x16x16x36xf32, #tpu.memory_space<vmem>>, vector<2x15x1x4xf32>
    tpu.vector_store %arg5[%c0_87, %c0_88, %c0_89, %c24_90], %30 {strides = array<i32>} : memref<2x16x16x36xf32, #tpu.memory_space<vmem>>, vector<2x15x1x4xf32>,
    %c0_91 = arith.constant 0 : index
    %c1_92 = arith.constant 1 : index
    %c0_93 = arith.constant 0 : index
    %c0_94 = arith.constant 0 : index
    %32 = vector.load %arg1[%c0_91, %c1_92, %c0_93, %c0_94] : memref<2x16x16x4xf32, #tpu.memory_space<vmem>>, vector<2x15x16x4xf32>
    %c0_95 = arith.constant 0 : index
    %c0_96 = arith.constant 0 : index
    %c0_97 = arith.constant 0 : index
    %c28 = arith.constant 28 : index
    %33 = vector.load %arg5[%c0_95, %c0_96, %c0_97, %c28] : memref<2x16x16x36xf32, #tpu.memory_space<vmem>>, vector<2x15x16x4xf32>
    tpu.vector_store %arg5[%c0_95, %c0_96, %c0_97, %c28], %32 {strides = array<i32>} : memref<2x16x16x36xf32, #tpu.memory_space<vmem>>, vector<2x15x16x4xf32>,
    %cst_98 = arith.constant 0.000000e+00 : f32
    %34 = vector.broadcast %cst_98 : f32 to vector<2x1x16x4xf32>
    %c0_99 = arith.constant 0 : index
    %c15_100 = arith.constant 15 : index
    %c0_101 = arith.constant 0 : index
    %c28_102 = arith.constant 28 : index
    %35 = vector.load %arg5[%c0_99, %c15_100, %c0_101, %c28_102] : memref<2x16x16x36xf32, #tpu.memory_space<vmem>>, vector<2x1x16x4xf32>
    tpu.vector_store %arg5[%c0_99, %c15_100, %c0_101, %c28_102], %34 {strides = array<i32>} : memref<2x16x16x36xf32, #tpu.memory_space<vmem>>, vector<2x1x16x4xf32>,
    %c0_103 = arith.constant 0 : index
    %c1_104 = arith.constant 1 : index
    %c1_105 = arith.constant 1 : index
    %c0_106 = arith.constant 0 : index
    %36 = vector.load %arg1[%c0_103, %c1_104, %c1_105, %c0_106] : memref<2x16x16x4xf32, #tpu.memory_space<vmem>>, vector<2x15x15x4xf32>
    %c0_107 = arith.constant 0 : index
    %c0_108 = arith.constant 0 : index
    %c0_109 = arith.constant 0 : index
    %c32 = arith.constant 32 : index
    %37 = vector.load %arg5[%c0_107, %c0_108, %c0_109, %c32] : memref<2x16x16x36xf32, #tpu.memory_space<vmem>>, vector<2x15x15x4xf32>
    tpu.vector_store %arg5[%c0_107, %c0_108, %c0_109, %c32], %36 {strides = array<i32>} : memref<2x16x16x36xf32, #tpu.memory_space<vmem>>, vector<2x15x15x4xf32>,
    %cst_110 = arith.constant 0.000000e+00 : f32
    %38 = vector.broadcast %cst_110 : f32 to vector<2x1x16x4xf32>
    %c0_111 = arith.constant 0 : index
    %c15_112 = arith.constant 15 : index
    %c0_113 = arith.constant 0 : index
    %c32_114 = arith.constant 32 : index
    %39 = vector.load %arg5[%c0_111, %c15_112, %c0_113, %c32_114] : memref<2x16x16x36xf32, #tpu.memory_space<vmem>>, vector<2x1x16x4xf32>
    tpu.vector_store %arg5[%c0_111, %c15_112, %c0_113, %c32_114], %38 {strides = array<i32>} : memref<2x16x16x36xf32, #tpu.memory_space<vmem>>, vector<2x1x16x4xf32>,
    %cst_115 = arith.constant 0.000000e+00 : f32
    %40 = vector.broadcast %cst_115 : f32 to vector<2x15x1x4xf32>
    %c0_116 = arith.constant 0 : index
    %c0_117 = arith.constant 0 : index
    %c15_118 = arith.constant 15 : index
    %c32_119 = arith.constant 32 : index
    %41 = vector.load %arg5[%c0_116, %c0_117, %c15_118, %c32_119] : memref<2x16x16x36xf32, #tpu.memory_space<vmem>>, vector<2x15x1x4xf32>
    tpu.vector_store %arg5[%c0_116, %c0_117, %c15_118, %c32_119], %40 {strides = array<i32>} : memref<2x16x16x36xf32, #tpu.memory_space<vmem>>, vector<2x15x1x4xf32>,
    %c0_120 = arith.constant 0 : index
    %c0_121 = arith.constant 0 : index
    %c0_122 = arith.constant 0 : index
    %c0_123 = arith.constant 0 : index
    %42 = vector.load %arg5[%c0_120, %c0_121, %c0_122, %c0_123] : memref<2x16x16x36xf32, #tpu.memory_space<vmem>>, vector<2x16x16x36xf32>
    %43 = vector.shape_cast %42 : vector<2x16x16x36xf32> to vector<512x36xf32>
    %c0_124 = arith.constant 0 : index
    %c0_125 = arith.constant 0 : index
    %44 = vector.load %arg2[%c0_124, %c0_125] : memref<36x8xf32, #tpu.memory_space<vmem>>, vector<36x8xf32>
    %cst_126 = arith.constant dense<0.000000e+00> : vector<512x8xf32>
    %45 = tpu.matmul %43, %44, %cst_126 {dimension_numbers = #tpu.dot_dimension_numbers<[1], [0], [0], [1], [0, 0, 1, 1], [], []>} : vector<512x36xf32>, vector<36x8xf32>, vector<512x8xf32> -> vector<512x8xf32>
    %c0_127 = arith.constant 0 : index
    %c0_128 = arith.constant 0 : index
    %46 = vector.load %arg3[%c0_127, %c0_128] : memref<1x8xf32, #tpu.memory_space<vmem>>, vector<1x8xf32>
    %47 = vector.broadcast %46 : vector<1x8xf32> to vector<512x8xf32>
    %48 = arith.addf %45, %47 : vector<512x8xf32>
    %cst_129 = arith.constant 0.000000e+00 : f32
    %49 = vector.broadcast %cst_129 : f32 to vector<512x8xf32>
    %50 = arith.maximumf %48, %49 : vector<512x8xf32>
    %51 = vector.shape_cast %50 : vector<512x8xf32> to vector<2x16x16x8xf32>
    %c0_130 = arith.constant 0 : index
    %c0_131 = arith.constant 0 : index
    %c0_132 = arith.constant 0 : index
    %c0_133 = arith.constant 0 : index
    %52 = vector.load %arg4[%c0_130, %c0_131, %c0_132, %c0_133] : memref<2x16x16x8xf32, #tpu.memory_space<vmem>>, vector<2x16x16x8xf32>
    tpu.vector_store %arg4[%c0_130, %c0_131, %c0_132, %c0_133], %51 {strides = array<i32>} : memref<2x16x16x8xf32, #tpu.memory_space<vmem>>, vector<2x16x16x8xf32>,
    return
  }
  func.func @transform_0(%arg0: i32) -> (i32, i32, i32, i32) {
    %c0_i32 = arith.constant 0 : i32
    %c0_i32_0 = arith.constant 0 : i32
    %c0_i32_1 = arith.constant 0 : i32
    %c0_i32_2 = arith.constant 0 : i32
    return %arg0, %c0_i32, %c0_i32_0, %c0_i32_1 : i32, i32, i32, i32
  }
  func.func @transform_1(%arg0: i32) -> (i32, i32) {
    %c0_i32 = arith.constant 0 : i32
    %c0_i32_0 = arith.constant 0 : i32
    %c0_i32_1 = arith.constant 0 : i32
    return %c0_i32, %c0_i32_0 : i32, i32
  }
  func.func @transform_2(%arg0: i32) -> (i32, i32) {
    %c0_i32 = arith.constant 0 : i32
    %c0_i32_0 = arith.constant 0 : i32
    %c0_i32_1 = arith.constant 0 : i32
    return %c0_i32, %c0_i32_0 : i32, i32
  }
  func.func @transform_3(%arg0: i32) -> (i32, i32, i32, i32) {
    %c0_i32 = arith.constant 0 : i32
    %c0_i32_0 = arith.constant 0 : i32
    %c0_i32_1 = arith.constant 0 : i32
    %c0_i32_2 = arith.constant 0 : i32
    return %arg0, %c0_i32, %c0_i32_0, %c0_i32_1 : i32, i32, i32, i32
  }
}

</mosaic_0001>

<llo_original>
// kernel: tpu_custom_call.1
$region0: #{tpu_custom_call.1}
  #allocation0 [shape = 'u32[]', space=smem, size = 0x4, offset = 0x4, fixed_abs, tag = 'smem constant byte address 0x4 - core index']
  #allocation1 [shape = 'u32[144,128]{1,0:T(1,128)}', space=vmem, size = 0x12000, scoped, tag = 'internal scratch']
  #allocation2 [shape = 'f32[2,16,16,36]{3,2,1,0:T(8,128)}', space=vmem, size = 0x40000, scoped, tag = 'scratch operand']
  %s0 = inlined_call_operand.vmem [shape: f32[2,16,16,4], index: 0, kind: input, shape index: {}]
  %s1 = inlined_call_operand.vmem [shape: f32[36,8], index: 1, kind: input, shape index: {}]
  %s2 = inlined_call_operand.vmem [shape: f32[1,8], index: 2, kind: input, shape index: {}]
  %s3 = inlined_call_operand.vmem [shape: f32[2,16,16,8], index: 3, kind: output, shape index: {}]
  %s4 = sld [smem:[#allocation0]]
  $region22: #{tpu_custom_call.1} parent=0
    _
  %s6 = ssub.s32 1, %s4
  %s7 = scalar_select 0, %s6, %s4
  // Predicated region
  $region2: #{tpu_custom_call.1} parent=0 // pred_check
    _
  $region3: #{tpu_custom_call.1} parent=0 // pred_check_branch
    %9 = sbr.rel (0) target = $region5
  $region4: #{tpu_custom_call.1} parent=0 // pred_region
    _
  $region5: #{tpu_custom_call.1} parent=0 // pred_fallthru
    _
  // Predicated region
  $region6: #{tpu_custom_call.1} parent=0 // pred_check
    _
  $region7: #{tpu_custom_call.1} parent=0 // pred_check_branch
    %11 = sbr.rel (0) target = $region9
  $region8: #{tpu_custom_call.1} parent=0 // pred_region
    _
  $region9: #{tpu_custom_call.1} parent=0 // pred_fallthru
    _
  // Predicated region
  $region10: #{tpu_custom_call.1} parent=0 // pred_check
    _
  $region11: #{tpu_custom_call.1} parent=0 // pred_check_branch
    %13 = sbr.rel (0) target = $region13
  $region12: #{tpu_custom_call.1} parent=0 // pred_region
    _
  $region13: #{tpu_custom_call.1} parent=0 // pred_fallthru
    _
  %v14 = vld [vmem:[%s0] sm:$0xff]
  %v15 = vld [vmem:[%s0 + $0x8] sm:$0x7f]
  %v16 = vld [vmem:[%s0 + $0x10] sm:$0xff]
  %v17 = vld [vmem:[%s0 + $0x18] sm:$0x7f]
  %v18 = vld [vmem:[%s0 + $0x20] sm:$0xff]
  %v19 = vld [vmem:[%s0 + $0x28] sm:$0x7f]
  %v20 = vld [vmem:[%s0 + $0x30] sm:$0xff]
  %v21 = vld [vmem:[%s0 + $0x38] sm:$0x7f]
  %v22 = vld [vmem:[%s0 + $0x40] sm:$0xff]
  %v23 = vld [vmem:[%s0 + $0x48] sm:$0x7f]
  %v24 = vld [vmem:[%s0 + $0x50] sm:$0xff]
  %v25 = vld [vmem:[%s0 + $0x58] sm:$0x7f]
  %v26 = vld [vmem:[%s0 + $0x60] sm:$0xff]
  %v27 = vld [vmem:[%s0 + $0x68] sm:$0x7f]
  %v28 = vld [vmem:[%s0 + $0x70] sm:$0xff]
  %v29 = vld [vmem:[%s0 + $0x78] sm:$0x7f]
  %v30 = vld [vmem:[%s0 + $0x80] sm:$0xff]
  %v31 = vld [vmem:[%s0 + $0x88] sm:$0x7f]
  %v32 = vld [vmem:[%s0 + $0x90] sm:$0xff]
  %v33 = vld [vmem:[%s0 + $0x98] sm:$0x7f]
  %v34 = vld [vmem:[%s0 + $0xa0] sm:$0xff]
  %v35 = vld [vmem:[%s0 + $0xa8] sm:$0x7f]
  %v36 = vld [vmem:[%s0 + $0xb0] sm:$0xff]
  %v37 = vld [vmem:[%s0 + $0xb8] sm:$0x7f]
  %v38 = vld [vmem:[%s0 + $0xc0] sm:$0xff]
  %v39 = vld [vmem:[%s0 + $0xc8] sm:$0x7f]
  %v40 = vld [vmem:[%s0 + $0xd0] sm:$0xff]
  %v41 = vld [vmem:[%s0 + $0xd8] sm:$0x7f]
  %v42 = vld [vmem:[%s0 + $0xe0] sm:$0xff]
  %v43 = vld [vmem:[%s0 + $0xe8] sm:$0x7f]
  %v44 = vld [vmem:[%s0 + $0x100] sm:$0xff]
  %v45 = vld [vmem:[%s0 + $0x108] sm:$0x7f]
  %v46 = vld [vmem:[%s0 + $0x110] sm:$0xff]
  %v47 = vld [vmem:[%s0 + $0x118] sm:$0x7f]
  %v48 = vld [vmem:[%s0 + $0x120] sm:$0xff]
  %v49 = vld [vmem:[%s0 + $0x128] sm:$0x7f]
  %v50 = vld [vmem:[%s0 + $0x130] sm:$0xff]
  %v51 = vld [vmem:[%s0 + $0x138] sm:$0x7f]
  %v52 = vld [vmem:[%s0 + $0x140] sm:$0xff]
  %v53 = vld [vmem:[%s0 + $0x148] sm:$0x7f]
  %v54 = vld [vmem:[%s0 + $0x150] sm:$0xff]
  %v55 = vld [vmem:[%s0 + $0x158] sm:$0x7f]
  %v56 = vld [vmem:[%s0 + $0x160] sm:$0xff]
  %v57 = vld [vmem:[%s0 + $0x168] sm:$0x7f]
  %v58 = vld [vmem:[%s0 + $0x170] sm:$0xff]
  %v59 = vld [vmem:[%s0 + $0x178] sm:$0x7f]
  %v60 = vld [vmem:[%s0 + $0x180] sm:$0xff]
  %v61 = vld [vmem:[%s0 + $0x188] sm:$0x7f]
  %v62 = vld [vmem:[%s0 + $0x190] sm:$0xff]
  %v63 = vld [vmem:[%s0 + $0x198] sm:$0x7f]
  %v64 = vld [vmem:[%s0 + $0x1a0] sm:$0xff]
  %v65 = vld [vmem:[%s0 + $0x1a8] sm:$0x7f]
  %v66 = vld [vmem:[%s0 + $0x1b0] sm:$0xff]
  %v67 = vld [vmem:[%s0 + $0x1b8] sm:$0x7f]
  %v68 = vld [vmem:[%s0 + $0x1c0] sm:$0xff]
  %v69 = vld [vmem:[%s0 + $0x1c8] sm:$0x7f]
  %v70 = vld [vmem:[%s0 + $0x1d0] sm:$0xff]
  %v71 = vld [vmem:[%s0 + $0x1d8] sm:$0x7f]
  %v72 = vld [vmem:[%s0 + $0x1e0] sm:$0xff]
  %v73 = vld [vmem:[%s0 + $0x1e8] sm:$0x7f]
  %s74 = scalar_lea.vmem [#allocation2], 16
  %vm75 = vcmask 31744
  %76 = vst.msk [vmem:[%s74 + $0x1] sm:$0xff] %vm75, %v14
  %vm77 = vcmask 30720
  %78 = vst.msk [vmem:[%s74 + $0x9] sm:$0x7f] %vm77, %v15
  %79 = vst.msk [vmem:[%s74 + $0x11] sm:$0xff] %vm75, %v16
  %80 = vst.msk [vmem:[%s74 + $0x19] sm:$0x7f] %vm77, %v17
  %81 = vst.msk [vmem:[%s74 + $0x21] sm:$0xff] %vm75, %v18
  %82 = vst.msk [vmem:[%s74 + $0x29] sm:$0x7f] %vm77, %v19
  %83 = vst.msk [vmem:[%s74 + $0x31] sm:$0xff] %vm75, %v20
  %84 = vst.msk [vmem:[%s74 + $0x39] sm:$0x7f] %vm77, %v21
  %85 = vst.msk [vmem:[%s74 + $0x41] sm:$0xff] %vm75, %v22
  %86 = vst.msk [vmem:[%s74 + $0x49] sm:$0x7f] %vm77, %v23
  %87 = vst.msk [vmem:[%s74 + $0x51] sm:$0xff] %vm75, %v24
  %88 = vst.msk [vmem:[%s74 + $0x59] sm:$0x7f] %vm77, %v25
  %89 = vst.msk [vmem:[%s74 + $0x61] sm:$0xff] %vm75, %v26
  %90 = vst.msk [vmem:[%s74 + $0x69] sm:$0x7f] %vm77, %v27
  %91 = vst.msk [vmem:[%s74 + $0x71] sm:$0xff] %vm75, %v28
  %92 = vst.msk [vmem:[%s74 + $0x79] sm:$0x7f] %vm77, %v29
  %93 = vst.msk [vmem:[%s74 + $0x81] sm:$0xff] %vm75, %v30
  %94 = vst.msk [vmem:[%s74 + $0x89] sm:$0x7f] %vm77, %v31
  %95 = vst.msk [vmem:[%s74 + $0x91] sm:$0xff] %vm75, %v32
  %96 = vst.msk [vmem:[%s74 + $0x99] sm:$0x7f] %vm77, %v33
  %97 = vst.msk [vmem:[%s74 + $0xa1] sm:$0xff] %vm75, %v34
  %98 = vst.msk [vmem:[%s74 + $0xa9] sm:$0x7f] %vm77, %v35
  %99 = vst.msk [vmem:[%s74 + $0xb1] sm:$0xff] %vm75, %v36
  %100 = vst.msk [vmem:[%s74 + $0xb9] sm:$0x7f] %vm77, %v37
  %101 = vst.msk [vmem:[%s74 + $0xc1] sm:$0xff] %vm75, %v38
  %102 = vst.msk [vmem:[%s74 + $0xc9] sm:$0x7f] %vm77, %v39
  %103 = vst.msk [vmem:[%s74 + $0xd1] sm:$0xff] %vm75, %v40
  %104 = vst.msk [vmem:[%s74 + $0xd9] sm:$0x7f] %vm77, %v41
  %105 = vst.msk [vmem:[%s74 + $0xe1] sm:$0xff] %vm75, %v42
  %106 = vst.msk [vmem:[%s74 + $0xe9] sm:$0x7f] %vm77, %v43
  %107 = vst.msk [vmem:[%s74 + $0x101] sm:$0xff] %vm75, %v44
  %108 = vst.msk [vmem:[%s74 + $0x109] sm:$0x7f] %vm77, %v45
  %109 = vst.msk [vmem:[%s74 + $0x111] sm:$0xff] %vm75, %v46
  %110 = vst.msk [vmem:[%s74 + $0x119] sm:$0x7f] %vm77, %v47
  %111 = vst.msk [vmem:[%s74 + $0x121] sm:$0xff] %vm75, %v48
  %112 = vst.msk [vmem:[%s74 + $0x129] sm:$0x7f] %vm77, %v49
  %113 = vst.msk [vmem:[%s74 + $0x131] sm:$0xff] %vm75, %v50
  %114 = vst.msk [vmem:[%s74 + $0x139] sm:$0x7f] %vm77, %v51
  %115 = vst.msk [vmem:[%s74 + $0x141] sm:$0xff] %vm75, %v52
  %116 = vst.msk [vmem:[%s74 + $0x149] sm:$0x7f] %vm77, %v53
  %117 = vst.msk [vmem:[%s74 + $0x151] sm:$0xff] %vm75, %v54
  %118 = vst.msk [vmem:[%s74 + $0x159] sm:$0x7f] %vm77, %v55
  %119 = vst.msk [vmem:[%s74 + $0x161] sm:$0xff] %vm75, %v56
  %120 = vst.msk [vmem:[%s74 + $0x169] sm:$0x7f] %vm77, %v57
  %121 = vst.msk [vmem:[%s74 + $0x171] sm:$0xff] %vm75, %v58
  %122 = vst.msk [vmem:[%s74 + $0x179] sm:$0x7f] %vm77, %v59
  %123 = vst.msk [vmem:[%s74 + $0x181] sm:$0xff] %vm75, %v60
  %124 = vst.msk [vmem:[%s74 + $0x189] sm:$0x7f] %vm77, %v61
  %125 = vst.msk [vmem:[%s74 + $0x191] sm:$0xff] %vm75, %v62
  %126 = vst.msk [vmem:[%s74 + $0x199] sm:$0x7f] %vm77, %v63
  %127 = vst.msk [vmem:[%s74 + $0x1a1] sm:$0xff] %vm75, %v64
  %128 = vst.msk [vmem:[%s74 + $0x1a9] sm:$0x7f] %vm77, %v65
  %129 = vst.msk [vmem:[%s74 + $0x1b1] sm:$0xff] %vm75, %v66
  %130 = vst.msk [vmem:[%s74 + $0x1b9] sm:$0x7f] %vm77, %v67
  %131 = vst.msk [vmem:[%s74 + $0x1c1] sm:$0xff] %vm75, %v68
  %132 = vst.msk [vmem:[%s74 + $0x1c9] sm:$0x7f] %vm77, %v69
  %133 = vst.msk [vmem:[%s74 + $0x1d1] sm:$0xff] %vm75, %v70
  %134 = vst.msk [vmem:[%s74 + $0x1d9] sm:$0x7f] %vm77, %v71
  %135 = vst.msk [vmem:[%s74 + $0x1e1] sm:$0xff] %vm75, %v72
  %136 = vst.msk [vmem:[%s74 + $0x1e9] sm:$0x7f] %vm77, %v73
  %137 = vst.msk [vmem:[#allocation2] sm:$0xff] %vm75, 0.0
  %138 = vst.msk [vmem:[#allocation2 + $0x8] sm:$0xff] %vm75, 0.0
  %139 = vst.msk [vmem:[#allocation2 + $0x100] sm:$0xff] %vm75, 0.0
  %140 = vst.msk [vmem:[#allocation2 + $0x108] sm:$0xff] %vm75, 0.0
  %vm141 = vcmask 24576
  %142 = vst.msk [vmem:[%s74] sm:$0x1] %vm141, 0.0
  %143 = vst.msk [vmem:[%s74 + $0x10] sm:$0x1] %vm141, 0.0
  %144 = vst.msk [vmem:[%s74 + $0x20] sm:$0x1] %vm141, 0.0
  %145 = vst.msk [vmem:[%s74 + $0x30] sm:$0x1] %vm141, 0.0
  %146 = vst.msk [vmem:[%s74 + $0x40] sm:$0x1] %vm141, 0.0
  %147 = vst.msk [vmem:[%s74 + $0x50] sm:$0x1] %vm141, 0.0
  %148 = vst.msk [vmem:[%s74 + $0x60] sm:$0x1] %vm141, 0.0
  %149 = vst.msk [vmem:[%s74 + $0x70] sm:$0x1] %vm141, 0.0
  %150 = vst.msk [vmem:[%s74 + $0x80] sm:$0x1] %vm141, 0.0
  %151 = vst.msk [vmem:[%s74 + $0x90] sm:$0x1] %vm141, 0.0
  %152 = vst.msk [vmem:[%s74 + $0xa0] sm:$0x1] %vm141, 0.0
  %153 = vst.msk [vmem:[%s74 + $0xb0] sm:$0x1] %vm141, 0.0
  %154 = vst.msk [vmem:[%s74 + $0xc0] sm:$0x1] %vm141, 0.0
  %155 = vst.msk [vmem:[%s74 + $0xd0] sm:$0x1] %vm141, 0.0
  %156 = vst.msk [vmem:[%s74 + $0xe0] sm:$0x1] %vm141, 0.0
  %157 = vst.msk [vmem:[%s74 + $0x100] sm:$0x1] %vm141, 0.0
  %158 = vst.msk [vmem:[%s74 + $0x110] sm:$0x1] %vm141, 0.0
  %159 = vst.msk [vmem:[%s74 + $0x120] sm:$0x1] %vm141, 0.0
  %160 = vst.msk [vmem:[%s74 + $0x130] sm:$0x1] %vm141, 0.0
  %161 = vst.msk [vmem:[%s74 + $0x140] sm:$0x1] %vm141, 0.0
  %162 = vst.msk [vmem:[%s74 + $0x150] sm:$0x1] %vm141, 0.0
  %163 = vst.msk [vmem:[%s74 + $0x160] sm:$0x1] %vm141, 0.0
  %164 = vst.msk [vmem:[%s74 + $0x170] sm:$0x1] %vm141, 0.0
  %165 = vst.msk [vmem:[%s74 + $0x180] sm:$0x1] %vm141, 0.0
  %166 = vst.msk [vmem:[%s74 + $0x190] sm:$0x1] %vm141, 0.0
  %167 = vst.msk [vmem:[%s74 + $0x1a0] sm:$0x1] %vm141, 0.0
  %168 = vst.msk [vmem:[%s74 + $0x1b0] sm:$0x1] %vm141, 0.0
  %169 = vst.msk [vmem:[%s74 + $0x1c0] sm:$0x1] %vm141, 0.0
  %170 = vst.msk [vmem:[%s74 + $0x1d0] sm:$0x1] %vm141, 0.0
  %171 = vst.msk [vmem:[%s74 + $0x1e0] sm:$0x1] %vm141, 0.0
  %v172 = vld [vmem:[%s0] sm:$0xff]
  %v173 = vld [vmem:[%s0 + $0x8] sm:$0xff]
  %v174 = vld [vmem:[%s0 + $0x10] sm:$0xff]
  %v175 = vld [vmem:[%s0 + $0x18] sm:$0xff]
  %v176 = vld [vmem:[%s0 + $0x20] sm:$0xff]
  %v177 = vld [vmem:[%s0 + $0x28] sm:$0xff]
  %v178 = vld [vmem:[%s0 + $0x30] sm:$0xff]
  %v179 = vld [vmem:[%s0 + $0x38] sm:$0xff]
  %v180 = vld [vmem:[%s0 + $0x40] sm:$0xff]
  %v181 = vld [vmem:[%s0 + $0x48] sm:$0xff]
  %v182 = vld [vmem:[%s0 + $0x50] sm:$0xff]
  %v183 = vld [vmem:[%s0 + $0x58] sm:$0xff]
  %v184 = vld [vmem:[%s0 + $0x60] sm:$0xff]
  %v185 = vld [vmem:[%s0 + $0x68] sm:$0xff]
  %v186 = vld [vmem:[%s0 + $0x70] sm:$0xff]
  %v187 = vld [vmem:[%s0 + $0x78] sm:$0xff]
  %v188 = vld [vmem:[%s0 + $0x80] sm:$0xff]
  %v189 = vld [vmem:[%s0 + $0x88] sm:$0xff]
  %v190 = vld [vmem:[%s0 + $0x90] sm:$0xff]
  %v191 = vld [vmem:[%s0 + $0x98] sm:$0xff]
  %v192 = vld [vmem:[%s0 + $0xa0] sm:$0xff]
  %v193 = vld [vmem:[%s0 + $0xa8] sm:$0xff]
  %v194 = vld [vmem:[%s0 + $0xb0] sm:$0xff]
  %v195 = vld [vmem:[%s0 + $0xb8] sm:$0xff]
  %v196 = vld [vmem:[%s0 + $0xc0] sm:$0xff]
  %v197 = vld [vmem:[%s0 + $0xc8] sm:$0xff]
  %v198 = vld [vmem:[%s0 + $0xd0] sm:$0xff]
  %v199 = vld [vmem:[%s0 + $0xd8] sm:$0xff]
  %v200 = vld [vmem:[%s0 + $0xe0] sm:$0xff]
  %v201 = vld [vmem:[%s0 + $0xe8] sm:$0xff]
  %v202 = vld [vmem:[%s0 + $0x100] sm:$0xff]
  %v203 = vld [vmem:[%s0 + $0x108] sm:$0xff]
  %v204 = vld [vmem:[%s0 + $0x110] sm:$0xff]
  %v205 = vld [vmem:[%s0 + $0x118] sm:$0xff]
  %v206 = vld [vmem:[%s0 + $0x120] sm:$0xff]
  %v207 = vld [vmem:[%s0 + $0x128] sm:$0xff]
  %v208 = vld [vmem:[%s0 + $0x130] sm:$0xff]
  %v209 = vld [vmem:[%s0 + $0x138] sm:$0xff]
  %v210 = vld [vmem:[%s0 + $0x140] sm:$0xff]
  %v211 = vld [vmem:[%s0 + $0x148] sm:$0xff]
  %v212 = vld [vmem:[%s0 + $0x150] sm:$0xff]
  %v213 = vld [vmem:[%s0 + $0x158] sm:$0xff]
  %v214 = vld [vmem:[%s0 + $0x160] sm:$0xff]
  %v215 = vld [vmem:[%s0 + $0x168] sm:$0xff]
  %v216 = vld [vmem:[%s0 + $0x170] sm:$0xff]
  %v217 = vld [vmem:[%s0 + $0x178] sm:$0xff]
  %v218 = vld [vmem:[%s0 + $0x180] sm:$0xff]
  %v219 = vld [vmem:[%s0 + $0x188] sm:$0xff]
  %v220 = vld [vmem:[%s0 + $0x190] sm:$0xff]
  %v221 = vld [vmem:[%s0 + $0x198] sm:$0xff]
  %v222 = vld [vmem:[%s0 + $0x1a0] sm:$0xff]
  %v223 = vld [vmem:[%s0 + $0x1a8] sm:$0xff]
  %v224 = vld [vmem:[%s0 + $0x1b0] sm:$0xff]
  %v225 = vld [vmem:[%s0 + $0x1b8] sm:$0xff]
  %v226 = vld [vmem:[%s0 + $0x1c0] sm:$0xff]
  %v227 = vld [vmem:[%s0 + $0x1c8] sm:$0xff]
  %v228 = vld [vmem:[%s0 + $0x1d0] sm:$0xff]
  %v229 = vld [vmem:[%s0 + $0x1d8] sm:$0xff]
  %v230 = vld [vmem:[%s0 + $0x1e0] sm:$0xff]
  %v231 = vld [vmem:[%s0 + $0x1e8] sm:$0xff]
  %292 = vrot.lane.b32.xlu0 %v172, 4
  %v293 = vpop.permute.xlu0 %292
  %294 = vrot.lane.b32.xlu0 %v173, 4
  %v295 = vpop.permute.xlu0 %294
  %296 = vrot.lane.b32.xlu0 %v174, 4
  %v297 = vpop.permute.xlu0 %296
  %298 = vrot.lane.b32.xlu0 %v175, 4
  %v299 = vpop.permute.xlu0 %298
  %300 = vrot.lane.b32.xlu0 %v176, 4
  %v301 = vpop.permute.xlu0 %300
  %302 = vrot.lane.b32.xlu0 %v177, 4
  %v303 = vpop.permute.xlu0 %302
  %304 = vrot.lane.b32.xlu0 %v178, 4
  %v305 = vpop.permute.xlu0 %304
  %306 = vrot.lane.b32.xlu0 %v179, 4
  %v307 = vpop.permute.xlu0 %306
  %308 = vrot.lane.b32.xlu0 %v180, 4
  %v309 = vpop.permute.xlu0 %308
  %310 = vrot.lane.b32.xlu0 %v181, 4
  %v311 = vpop.permute.xlu0 %310
  %312 = vrot.lane.b32.xlu0 %v182, 4
  %v313 = vpop.permute.xlu0 %312
  %314 = vrot.lane.b32.xlu0 %v183, 4
  %v315 = vpop.permute.xlu0 %314
  %316 = vrot.lane.b32.xlu0 %v184, 4
  %v317 = vpop.permute.xlu0 %316
  %318 = vrot.lane.b32.xlu0 %v185, 4
  %v319 = vpop.permute.xlu0 %318
  %320 = vrot.lane.b32.xlu0 %v186, 4
  %v321 = vpop.permute.xlu0 %320
  %322 = vrot.lane.b32.xlu0 %v187, 4
  %v323 = vpop.permute.xlu0 %322
  %324 = vrot.lane.b32.xlu0 %v188, 4
  %v325 = vpop.permute.xlu0 %324
  %326 = vrot.lane.b32.xlu0 %v189, 4
  %v327 = vpop.permute.xlu0 %326
  %328 = vrot.lane.b32.xlu0 %v190, 4
  %v329 = vpop.permute.xlu0 %328
  %330 = vrot.lane.b32.xlu0 %v191, 4
  %v331 = vpop.permute.xlu0 %330
  %332 = vrot.lane.b32.xlu0 %v192, 4
  %v333 = vpop.permute.xlu0 %332
  %334 = vrot.lane.b32.xlu0 %v193, 4
  %v335 = vpop.permute.xlu0 %334
  %336 = vrot.lane.b32.xlu0 %v194, 4
  %v337 = vpop.permute.xlu0 %336
  %338 = vrot.lane.b32.xlu0 %v195, 4
  %v339 = vpop.permute.xlu0 %338
  %340 = vrot.lane.b32.xlu0 %v196, 4
  %v341 = vpop.permute.xlu0 %340
  %342 = vrot.lane.b32.xlu0 %v197, 4
  %v343 = vpop.permute.xlu0 %342
  %344 = vrot.lane.b32.xlu0 %v198, 4
  %v345 = vpop.permute.xlu0 %344
  %346 = vrot.lane.b32.xlu0 %v199, 4
  %v347 = vpop.permute.xlu0 %346
  %348 = vrot.lane.b32.xlu0 %v200, 4
  %v349 = vpop.permute.xlu0 %348
  %350 = vrot.lane.b32.xlu0 %v201, 4
  %v351 = vpop.permute.xlu0 %350
  %352 = vrot.lane.b32.xlu0 %v202, 4
  %v353 = vpop.permute.xlu0 %352
  %354 = vrot.lane.b32.xlu0 %v203, 4
  %v355 = vpop.permute.xlu0 %354
  %356 = vrot.lane.b32.xlu0 %v204, 4
  %v357 = vpop.permute.xlu0 %356
  %358 = vrot.lane.b32.xlu0 %v205, 4
  %v359 = vpop.permute.xlu0 %358
  %360 = vrot.lane.b32.xlu0 %v206, 4
  %v361 = vpop.permute.xlu0 %360
  %362 = vrot.lane.b32.xlu0 %v207, 4
  %v363 = vpop.permute.xlu0 %362
  %364 = vrot.lane.b32.xlu0 %v208, 4
  %v365 = vpop.permute.xlu0 %364
  %366 = vrot.lane.b32.xlu0 %v209, 4
  %v367 = vpop.permute.xlu0 %366
  %368 = vrot.lane.b32.xlu0 %v210, 4
  %v369 = vpop.permute.xlu0 %368
  %370 = vrot.lane.b32.xlu0 %v211, 4
  %v371 = vpop.permute.xlu0 %370
  %372 = vrot.lane.b32.xlu0 %v212, 4
  %v373 = vpop.permute.xlu0 %372
  %374 = vrot.lane.b32.xlu0 %v213, 4
  %v375 = vpop.permute.xlu0 %374
  %376 = vrot.lane.b32.xlu0 %v214, 4
  %v377 = vpop.permute.xlu0 %376
  %378 = vrot.lane.b32.xlu0 %v215, 4
  %v379 = vpop.permute.xlu0 %378
  %380 = vrot.lane.b32.xlu0 %v216, 4
  %v381 = vpop.permute.xlu0 %380
  %382 = vrot.lane.b32.xlu0 %v217, 4
  %v383 = vpop.permute.xlu0 %382
  %384 = vrot.lane.b32.xlu0 %v218, 4
  %v385 = vpop.permute.xlu0 %384
  %386 = vrot.lane.b32.xlu0 %v219, 4
  %v387 = vpop.permute.xlu0 %386
  %388 = vrot.lane.b32.xlu0 %v220, 4
  %v389 = vpop.permute.xlu0 %388
  %390 = vrot.lane.b32.xlu0 %v221, 4
  %v391 = vpop.permute.xlu0 %390
  %392 = vrot.lane.b32.xlu0 %v222, 4
  %v393 = vpop.permute.xlu0 %392
  %394 = vrot.lane.b32.xlu0 %v223, 4
  %v395 = vpop.permute.xlu0 %394
  %396 = vrot.lane.b32.xlu0 %v224, 4
  %v397 = vpop.permute.xlu0 %396
  %398 = vrot.lane.b32.xlu0 %v225, 4
  %v399 = vpop.permute.xlu0 %398
  %400 = vrot.lane.b32.xlu0 %v226, 4
  %v401 = vpop.permute.xlu0 %400
  %402 = vrot.lane.b32.xlu0 %v227, 4
  %v403 = vpop.permute.xlu0 %402
  %404 = vrot.lane.b32.xlu0 %v228, 4
  %v405 = vpop.permute.xlu0 %404
  %406 = vrot.lane.b32.xlu0 %v229, 4
  %v407 = vpop.permute.xlu0 %406
  %408 = vrot.lane.b32.xlu0 %v230, 4
  %v409 = vpop.permute.xlu0 %408
  %410 = vrot.lane.b32.xlu0 %v231, 4
  %v411 = vpop.permute.xlu0 %410
  %vm472 = vcmask 64544
  %473 = vst.msk [vmem:[%s74] sm:$0xff] %vm472, %v293
  %474 = vst.msk [vmem:[%s74 + $0x8] sm:$0xff] %vm472, %v295
  %475 = vst.msk [vmem:[%s74 + $0x10] sm:$0xff] %vm472, %v297
  %476 = vst.msk [vmem:[%s74 + $0x18] sm:$0xff] %vm472, %v299
  %477 = vst.msk [vmem:[%s74 + $0x20] sm:$0xff] %vm472, %v301
  %478 = vst.msk [vmem:[%s74 + $0x28] sm:$0xff] %vm472, %v303
  %479 = vst.msk [vmem:[%s74 + $0x30] sm:$0xff] %vm472, %v305
  %480 = vst.msk [vmem:[%s74 + $0x38] sm:$0xff] %vm472, %v307
  %481 = vst.msk [vmem:[%s74 + $0x40] sm:$0xff] %vm472, %v309
  %482 = vst.msk [vmem:[%s74 + $0x48] sm:$0xff] %vm472, %v311
  %483 = vst.msk [vmem:[%s74 + $0x50] sm:$0xff] %vm472, %v313
  %484 = vst.msk [vmem:[%s74 + $0x58] sm:$0xff] %vm472, %v315
  %485 = vst.msk [vmem:[%s74 + $0x60] sm:$0xff] %vm472, %v317
  %486 = vst.msk [vmem:[%s74 + $0x68] sm:$0xff] %vm472, %v319
  %487 = vst.msk [vmem:[%s74 + $0x70] sm:$0xff] %vm472, %v321
  %488 = vst.msk [vmem:[%s74 + $0x78] sm:$0xff] %vm472, %v323
  %489 = vst.msk [vmem:[%s74 + $0x80] sm:$0xff] %vm472, %v325
  %490 = vst.msk [vmem:[%s74 + $0x88] sm:$0xff] %vm472, %v327
  %491 = vst.msk [vmem:[%s74 + $0x90] sm:$0xff] %vm472, %v329
  %492 = vst.msk [vmem:[%s74 + $0x98] sm:$0xff] %vm472, %v331
  %493 = vst.msk [vmem:[%s74 + $0xa0] sm:$0xff] %vm472, %v333
  %494 = vst.msk [vmem:[%s74 + $0xa8] sm:$0xff] %vm472, %v335
  %495 = vst.msk [vmem:[%s74 + $0xb0] sm:$0xff] %vm472, %v337
  %496 = vst.msk [vmem:[%s74 + $0xb8] sm:$0xff] %vm472, %v339
  %497 = vst.msk [vmem:[%s74 + $0xc0] sm:$0xff] %vm472, %v341
  %498 = vst.msk [vmem:[%s74 + $0xc8] sm:$0xff] %vm472, %v343
  %499 = vst.msk [vmem:[%s74 + $0xd0] sm:$0xff] %vm472, %v345
  %500 = vst.msk [vmem:[%s74 + $0xd8] sm:$0xff] %vm472, %v347
  %501 = vst.msk [vmem:[%s74 + $0xe0] sm:$0xff] %vm472, %v349
  %502 = vst.msk [vmem:[%s74 + $0xe8] sm:$0xff] %vm472, %v351
  %503 = vst.msk [vmem:[%s74 + $0x100] sm:$0xff] %vm472, %v353
  %504 = vst.msk [vmem:[%s74 + $0x108] sm:$0xff] %vm472, %v355
  %505 = vst.msk [vmem:[%s74 + $0x110] sm:$0xff] %vm472, %v357
  %506 = vst.msk [vmem:[%s74 + $0x118] sm:$0xff] %vm472, %v359
  %507 = vst.msk [vmem:[%s74 + $0x120] sm:$0xff] %vm472, %v361
  %508 = vst.msk [vmem:[%s74 + $0x128] sm:$0xff] %vm472, %v363
  %509 = vst.msk [vmem:[%s74 + $0x130] sm:$0xff] %vm472, %v365
  %510 = vst.msk [vmem:[%s74 + $0x138] sm:$0xff] %vm472, %v367
  %511 = vst.msk [vmem:[%s74 + $0x140] sm:$0xff] %vm472, %v369
  %512 = vst.msk [vmem:[%s74 + $0x148] sm:$0xff] %vm472, %v371
  %513 = vst.msk [vmem:[%s74 + $0x150] sm:$0xff] %vm472, %v373
  %514 = vst.msk [vmem:[%s74 + $0x158] sm:$0xff] %vm472, %v375
  %515 = vst.msk [vmem:[%s74 + $0x160] sm:$0xff] %vm472, %v377
  %516 = vst.msk [vmem:[%s74 + $0x168] sm:$0xff] %vm472, %v379
  %517 = vst.msk [vmem:[%s74 + $0x170] sm:$0xff] %vm472, %v381
  %518 = vst.msk [vmem:[%s74 + $0x178] sm:$0xff] %vm472, %v383
  %519 = vst.msk [vmem:[%s74 + $0x180] sm:$0xff] %vm472, %v385
  %520 = vst.msk [vmem:[%s74 + $0x188] sm:$0xff] %vm472, %v387
  %521 = vst.msk [vmem:[%s74 + $0x190] sm:$0xff] %vm472, %v389
  %522 = vst.msk [vmem:[%s74 + $0x198] sm:$0xff] %vm472, %v391
  %523 = vst.msk [vmem:[%s74 + $0x1a0] sm:$0xff] %vm472, %v393
  %524 = vst.msk [vmem:[%s74 + $0x1a8] sm:$0xff] %vm472, %v395
  %525 = vst.msk [vmem:[%s74 + $0x1b0] sm:$0xff] %vm472, %v397
  %526 = vst.msk [vmem:[%s74 + $0x1b8] sm:$0xff] %vm472, %v399
  %527 = vst.msk [vmem:[%s74 + $0x1c0] sm:$0xff] %vm472, %v401
  %528 = vst.msk [vmem:[%s74 + $0x1c8] sm:$0xff] %vm472, %v403
  %529 = vst.msk [vmem:[%s74 + $0x1d0] sm:$0xff] %vm472, %v405
  %530 = vst.msk [vmem:[%s74 + $0x1d8] sm:$0xff] %vm472, %v407
  %531 = vst.msk [vmem:[%s74 + $0x1e0] sm:$0xff] %vm472, %v409
  %532 = vst.msk [vmem:[%s74 + $0x1e8] sm:$0xff] %vm472, %v411
  %533 = vst.msk [vmem:[#allocation2] sm:$0xff] %vm472, 0.0
  %534 = vst.msk [vmem:[#allocation2 + $0x8] sm:$0xff] %vm472, 0.0
  %535 = vst.msk [vmem:[#allocation2 + $0x100] sm:$0xff] %vm472, 0.0
  %536 = vst.msk [vmem:[#allocation2 + $0x108] sm:$0xff] %vm472, 0.0
  %v537 = vld [vmem:[%s0 + $0x1] sm:$0xff]
  %v538 = vld [vmem:[%s0 + $0x9] sm:$0x7f]
  %v539 = vld [vmem:[%s0 + $0x11] sm:$0xff]
  %v540 = vld [vmem:[%s0 + $0x19] sm:$0x7f]
  %v541 = vld [vmem:[%s0 + $0x21] sm:$0xff]
  %v542 = vld [vmem:[%s0 + $0x29] sm:$0x7f]
  %v543 = vld [vmem:[%s0 + $0x31] sm:$0xff]
  %v544 = vld [vmem:[%s0 + $0x39] sm:$0x7f]
  %v545 = vld [vmem:[%s0 + $0x41] sm:$0xff]
  %v546 = vld [vmem:[%s0 + $0x49] sm:$0x7f]
  %v547 = vld [vmem:[%s0 + $0x51] sm:$0xff]
  %v548 = vld [vmem:[%s0 + $0x59] sm:$0x7f]
  %v549 = vld [vmem:[%s0 + $0x61] sm:$0xff]
  %v550 = vld [vmem:[%s0 + $0x69] sm:$0x7f]
  %v551 = vld [vmem:[%s0 + $0x71] sm:$0xff]
  %v552 = vld [vmem:[%s0 + $0x79] sm:$0x7f]
  %v553 = vld [vmem:[%s0 + $0x81] sm:$0xff]
  %v554 = vld [vmem:[%s0 + $0x89] sm:$0x7f]
  %v555 = vld [vmem:[%s0 + $0x91] sm:$0xff]
  %v556 = vld [vmem:[%s0 + $0x99] sm:$0x7f]
  %v557 = vld [vmem:[%s0 + $0xa1] sm:$0xff]
  %v558 = vld [vmem:[%s0 + $0xa9] sm:$0x7f]
  %v559 = vld [vmem:[%s0 + $0xb1] sm:$0xff]
  %v560 = vld [vmem:[%s0 + $0xb9] sm:$0x7f]
  %v561 = vld [vmem:[%s0 + $0xc1] sm:$0xff]
  %v562 = vld [vmem:[%s0 + $0xc9] sm:$0x7f]
  %v563 = vld [vmem:[%s0 + $0xd1] sm:$0xff]
  %v564 = vld [vmem:[%s0 + $0xd9] sm:$0x7f]
  %v565 = vld [vmem:[%s0 + $0xe1] sm:$0xff]
  %v566 = vld [vmem:[%s0 + $0xe9] sm:$0x7f]
  %v567 = vld [vmem:[%s0 + $0x101] sm:$0xff]
  %v568 = vld [vmem:[%s0 + $0x109] sm:$0x7f]
  %v569 = vld [vmem:[%s0 + $0x111] sm:$0xff]
  %v570 = vld [vmem:[%s0 + $0x119] sm:$0x7f]
  %v571 = vld [vmem:[%s0 + $0x121] sm:$0xff]
  %v572 = vld [vmem:[%s0 + $0x129] sm:$0x7f]
  %v573 = vld [vmem:[%s0 + $0x131] sm:$0xff]
  %v574 = vld [vmem:[%s0 + $0x139] sm:$0x7f]
  %v575 = vld [vmem:[%s0 + $0x141] sm:$0xff]
  %v576 = vld [vmem:[%s0 + $0x149] sm:$0x7f]
  %v577 = vld [vmem:[%s0 + $0x151] sm:$0xff]
  %v578 = vld [vmem:[%s0 + $0x159] sm:$0x7f]
  %v579 = vld [vmem:[%s0 + $0x161] sm:$0xff]
  %v580 = vld [vmem:[%s0 + $0x169] sm:$0x7f]
  %v581 = vld [vmem:[%s0 + $0x171] sm:$0xff]
  %v582 = vld [vmem:[%s0 + $0x179] sm:$0x7f]
  %v583 = vld [vmem:[%s0 + $0x181] sm:$0xff]
  %v584 = vld [vmem:[%s0 + $0x189] sm:$0x7f]
  %v585 = vld [vmem:[%s0 + $0x191] sm:$0xff]
  %v586 = vld [vmem:[%s0 + $0x199] sm:$0x7f]
  %v587 = vld [vmem:[%s0 + $0x1a1] sm:$0xff]
  %v588 = vld [vmem:[%s0 + $0x1a9] sm:$0x7f]
  %v589 = vld [vmem:[%s0 + $0x1b1] sm:$0xff]
  %v590 = vld [vmem:[%s0 + $0x1b9] sm:$0x7f]
  %v591 = vld [vmem:[%s0 + $0x1c1] sm:$0xff]
  %v592 = vld [vmem:[%s0 + $0x1c9] sm:$0x7f]
  %v593 = vld [vmem:[%s0 + $0x1d1] sm:$0xff]
  %v594 = vld [vmem:[%s0 + $0x1d9] sm:$0x7f]
  %v595 = vld [vmem:[%s0 + $0x1e1] sm:$0xff]
  %v596 = vld [vmem:[%s0 + $0x1e9] sm:$0x7f]
  %657 = vrot.lane.b32.xlu0 %v537, 8
  %v658 = vpop.permute.xlu0 %657
  %659 = vrot.lane.b32.xlu0 %v538, 8
  %v660 = vpop.permute.xlu0 %659
  %661 = vrot.lane.b32.xlu0 %v539, 8
  %v662 = vpop.permute.xlu0 %661
  %663 = vrot.lane.b32.xlu0 %v540, 8
  %v664 = vpop.permute.xlu0 %663
  %665 = vrot.lane.b32.xlu0 %v541, 8
  %v666 = vpop.permute.xlu0 %665
  %667 = vrot.lane.b32.xlu0 %v542, 8
  %v668 = vpop.permute.xlu0 %667
  %669 = vrot.lane.b32.xlu0 %v543, 8
  %v670 = vpop.permute.xlu0 %669
  %671 = vrot.lane.b32.xlu0 %v544, 8
  %v672 = vpop.permute.xlu0 %671
  %673 = vrot.lane.b32.xlu0 %v545, 8
  %v674 = vpop.permute.xlu0 %673
  %675 = vrot.lane.b32.xlu0 %v546, 8
  %v676 = vpop.permute.xlu0 %675
  %677 = vrot.lane.b32.xlu0 %v547, 8
  %v678 = vpop.permute.xlu0 %677
  %679 = vrot.lane.b32.xlu0 %v548, 8
  %v680 = vpop.permute.xlu0 %679
  %681 = vrot.lane.b32.xlu0 %v549, 8
  %v682 = vpop.permute.xlu0 %681
  %683 = vrot.lane.b32.xlu0 %v550, 8
  %v684 = vpop.permute.xlu0 %683
  %685 = vrot.lane.b32.xlu0 %v551, 8
  %v686 = vpop.permute.xlu0 %685
  %687 = vrot.lane.b32.xlu0 %v552, 8
  %v688 = vpop.permute.xlu0 %687
  %689 = vrot.lane.b32.xlu0 %v553, 8
  %v690 = vpop.permute.xlu0 %689
  %691 = vrot.lane.b32.xlu0 %v554, 8
  %v692 = vpop.permute.xlu0 %691
  %693 = vrot.lane.b32.xlu0 %v555, 8
  %v694 = vpop.permute.xlu0 %693
  %695 = vrot.lane.b32.xlu0 %v556, 8
  %v696 = vpop.permute.xlu0 %695
  %697 = vrot.lane.b32.xlu0 %v557, 8
  %v698 = vpop.permute.xlu0 %697
  %699 = vrot.lane.b32.xlu0 %v558, 8
  %v700 = vpop.permute.xlu0 %699
  %701 = vrot.lane.b32.xlu0 %v559, 8
  %v702 = vpop.permute.xlu0 %701
  %703 = vrot.lane.b32.xlu0 %v560, 8
  %v704 = vpop.permute.xlu0 %703
  %705 = vrot.lane.b32.xlu0 %v561, 8
  %v706 = vpop.permute.xlu0 %705
  %707 = vrot.lane.b32.xlu0 %v562, 8
  %v708 = vpop.permute.xlu0 %707
  %709 = vrot.lane.b32.xlu0 %v563, 8
  %v710 = vpop.permute.xlu0 %709
  %711 = vrot.lane.b32.xlu0 %v564, 8
  %v712 = vpop.permute.xlu0 %711
  %713 = vrot.lane.b32.xlu0 %v565, 8
  %v714 = vpop.permute.xlu0 %713
  %715 = vrot.lane.b32.xlu0 %v566, 8
  %v716 = vpop.permute.xlu0 %715
  %717 = vrot.lane.b32.xlu0 %v567, 8
  %v718 = vpop.permute.xlu0 %717
  %719 = vrot.lane.b32.xlu0 %v568, 8
  %v720 = vpop.permute.xlu0 %719
  %721 = vrot.lane.b32.xlu0 %v569, 8
  %v722 = vpop.permute.xlu0 %721
  %723 = vrot.lane.b32.xlu0 %v570, 8
  %v724 = vpop.permute.xlu0 %723
  %725 = vrot.lane.b32.xlu0 %v571, 8
  %v726 = vpop.permute.xlu0 %725
  %727 = vrot.lane.b32.xlu0 %v572, 8
  %v728 = vpop.permute.xlu0 %727
  %729 = vrot.lane.b32.xlu0 %v573, 8
  %v730 = vpop.permute.xlu0 %729
  %731 = vrot.lane.b32.xlu0 %v574, 8
  %v732 = vpop.permute.xlu0 %731
  %733 = vrot.lane.b32.xlu0 %v575, 8
  %v734 = vpop.permute.xlu0 %733
  %735 = vrot.lane.b32.xlu0 %v576, 8
  %v736 = vpop.permute.xlu0 %735
  %737 = vrot.lane.b32.xlu0 %v577, 8
  %v738 = vpop.permute.xlu0 %737
  %739 = vrot.lane.b32.xlu0 %v578, 8
  %v740 = vpop.permute.xlu0 %739
  %741 = vrot.lane.b32.xlu0 %v579, 8
  %v742 = vpop.permute.xlu0 %741
  %743 = vrot.lane.b32.xlu0 %v580, 8
  %v744 = vpop.permute.xlu0 %743
  %745 = vrot.lane.b32.xlu0 %v581, 8
  %v746 = vpop.permute.xlu0 %745
  %747 = vrot.lane.b32.xlu0 %v582, 8
  %v748 = vpop.permute.xlu0 %747
  %749 = vrot.lane.b32.xlu0 %v583, 8
  %v750 = vpop.permute.xlu0 %749
  %751 = vrot.lane.b32.xlu0 %v584, 8
  %v752 = vpop.permute.xlu0 %751
  %753 = vrot.lane.b32.xlu0 %v585, 8
  %v754 = vpop.permute.xlu0 %753
  %755 = vrot.lane.b32.xlu0 %v586, 8
  %v756 = vpop.permute.xlu0 %755
  %757 = vrot.lane.b32.xlu0 %v587, 8
  %v758 = vpop.permute.xlu0 %757
  %759 = vrot.lane.b32.xlu0 %v588, 8
  %v760 = vpop.permute.xlu0 %759
  %761 = vrot.lane.b32.xlu0 %v589, 8
  %v762 = vpop.permute.xlu0 %761
  %763 = vrot.lane.b32.xlu0 %v590, 8
  %v764 = vpop.permute.xlu0 %763
  %765 = vrot.lane.b32.xlu0 %v591, 8
  %v766 = vpop.permute.xlu0 %765
  %767 = vrot.lane.b32.xlu0 %v592, 8
  %v768 = vpop.permute.xlu0 %767
  %769 = vrot.lane.b32.xlu0 %v593, 8
  %v770 = vpop.permute.xlu0 %769
  %771 = vrot.lane.b32.xlu0 %v594, 8
  %v772 = vpop.permute.xlu0 %771
  %773 = vrot.lane.b32.xlu0 %v595, 8
  %v774 = vpop.permute.xlu0 %773
  %775 = vrot.lane.b32.xlu0 %v596, 8
  %v776 = vpop.permute.xlu0 %775
  %vm837 = vcmask 97344
  %838 = vst.msk [vmem:[%s74] sm:$0xff] %vm837, %v658
  %vm839 = vcmask 96320
  %840 = vst.msk [vmem:[%s74 + $0x8] sm:$0x7f] %vm839, %v660
  %841 = vst.msk [vmem:[%s74 + $0x10] sm:$0xff] %vm837, %v662
  %842 = vst.msk [vmem:[%s74 + $0x18] sm:$0x7f] %vm839, %v664
  %843 = vst.msk [vmem:[%s74 + $0x20] sm:$0xff] %vm837, %v666
  %844 = vst.msk [vmem:[%s74 + $0x28] sm:$0x7f] %vm839, %v668
  %845 = vst.msk [vmem:[%s74 + $0x30] sm:$0xff] %vm837, %v670
  %846 = vst.msk [vmem:[%s74 + $0x38] sm:$0x7f] %vm839, %v672
  %847 = vst.msk [vmem:[%s74 + $0x40] sm:$0xff] %vm837, %v674
  %848 = vst.msk [vmem:[%s74 + $0x48] sm:$0x7f] %vm839, %v676
  %849 = vst.msk [vmem:[%s74 + $0x50] sm:$0xff] %vm837, %v678
  %850 = vst.msk [vmem:[%s74 + $0x58] sm:$0x7f] %vm839, %v680
  %851 = vst.msk [vmem:[%s74 + $0x60] sm:$0xff] %vm837, %v682
  %852 = vst.msk [vmem:[%s74 + $0x68] sm:$0x7f] %vm839, %v684
  %853 = vst.msk [vmem:[%s74 + $0x70] sm:$0xff] %vm837, %v686
  %854 = vst.msk [vmem:[%s74 + $0x78] sm:$0x7f] %vm839, %v688
  %855 = vst.msk [vmem:[%s74 + $0x80] sm:$0xff] %vm837, %v690
  %856 = vst.msk [vmem:[%s74 + $0x88] sm:$0x7f] %vm839, %v692
  %857 = vst.msk [vmem:[%s74 + $0x90] sm:$0xff] %vm837, %v694
  %858 = vst.msk [vmem:[%s74 + $0x98] sm:$0x7f] %vm839, %v696
  %859 = vst.msk [vmem:[%s74 + $0xa0] sm:$0xff] %vm837, %v698
  %860 = vst.msk [vmem:[%s74 + $0xa8] sm:$0x7f] %vm839, %v700
  %861 = vst.msk [vmem:[%s74 + $0xb0] sm:$0xff] %vm837, %v702
  %862 = vst.msk [vmem:[%s74 + $0xb8] sm:$0x7f] %vm839, %v704
  %863 = vst.msk [vmem:[%s74 + $0xc0] sm:$0xff] %vm837, %v706
  %864 = vst.msk [vmem:[%s74 + $0xc8] sm:$0x7f] %vm839, %v708
  %865 = vst.msk [vmem:[%s74 + $0xd0] sm:$0xff] %vm837, %v710
  %866 = vst.msk [vmem:[%s74 + $0xd8] sm:$0x7f] %vm839, %v712
  %867 = vst.msk [vmem:[%s74 + $0xe0] sm:$0xff] %vm837, %v714
  %868 = vst.msk [vmem:[%s74 + $0xe8] sm:$0x7f] %vm839, %v716
  %869 = vst.msk [vmem:[%s74 + $0x100] sm:$0xff] %vm837, %v718
  %870 = vst.msk [vmem:[%s74 + $0x108] sm:$0x7f] %vm839, %v720
  %871 = vst.msk [vmem:[%s74 + $0x110] sm:$0xff] %vm837, %v722
  %872 = vst.msk [vmem:[%s74 + $0x118] sm:$0x7f] %vm839, %v724
  %873 = vst.msk [vmem:[%s74 + $0x120] sm:$0xff] %vm837, %v726
  %874 = vst.msk [vmem:[%s74 + $0x128] sm:$0x7f] %vm839, %v728
  %875 = vst.msk [vmem:[%s74 + $0x130] sm:$0xff] %vm837, %v730
  %876 = vst.msk [vmem:[%s74 + $0x138] sm:$0x7f] %vm839, %v732
  %877 = vst.msk [vmem:[%s74 + $0x140] sm:$0xff] %vm837, %v734
  %878 = vst.msk [vmem:[%s74 + $0x148] sm:$0x7f] %vm839, %v736
  %879 = vst.msk [vmem:[%s74 + $0x150] sm:$0xff] %vm837, %v738
  %880 = vst.msk [vmem:[%s74 + $0x158] sm:$0x7f] %vm839, %v740
  %881 = vst.msk [vmem:[%s74 + $0x160] sm:$0xff] %vm837, %v742
  %882 = vst.msk [vmem:[%s74 + $0x168] sm:$0x7f] %vm839, %v744
  %883 = vst.msk [vmem:[%s74 + $0x170] sm:$0xff] %vm837, %v746
  %884 = vst.msk [vmem:[%s74 + $0x178] sm:$0x7f] %vm839, %v748
  %885 = vst.msk [vmem:[%s74 + $0x180] sm:$0xff] %vm837, %v750
  %886 = vst.msk [vmem:[%s74 + $0x188] sm:$0x7f] %vm839, %v752
  %887 = vst.msk [vmem:[%s74 + $0x190] sm:$0xff] %vm837, %v754
  %888 = vst.msk [vmem:[%s74 + $0x198] sm:$0x7f] %vm839, %v756
  %889 = vst.msk [vmem:[%s74 + $0x1a0] sm:$0xff] %vm837, %v758
  %890 = vst.msk [vmem:[%s74 + $0x1a8] sm:$0x7f] %vm839, %v760
  %891 = vst.msk [vmem:[%s74 + $0x1b0] sm:$0xff] %vm837, %v762
  %892 = vst.msk [vmem:[%s74 + $0x1b8] sm:$0x7f] %vm839, %v764
  %893 = vst.msk [vmem:[%s74 + $0x1c0] sm:$0xff] %vm837, %v766
  %894 = vst.msk [vmem:[%s74 + $0x1c8] sm:$0x7f] %vm839, %v768
  %895 = vst.msk [vmem:[%s74 + $0x1d0] sm:$0xff] %vm837, %v770
  %896 = vst.msk [vmem:[%s74 + $0x1d8] sm:$0x7f] %vm839, %v772
  %897 = vst.msk [vmem:[%s74 + $0x1e0] sm:$0xff] %vm837, %v774
  %898 = vst.msk [vmem:[%s74 + $0x1e8] sm:$0x7f] %vm839, %v776
  %899 = vst.msk [vmem:[#allocation2] sm:$0xff] %vm837, 0.0
  %900 = vst.msk [vmem:[#allocation2 + $0x8] sm:$0xff] %vm837, 0.0
  %901 = vst.msk [vmem:[#allocation2 + $0x100] sm:$0xff] %vm837, 0.0
  %902 = vst.msk [vmem:[#allocation2 + $0x108] sm:$0xff] %vm837, 0.0
  %vm903 = vcmask 90176
  %904 = vst.msk [vmem:[%s74 + $0xf] sm:$0x1] %vm903, 0.0
  %905 = vst.msk [vmem:[%s74 + $0x1f] sm:$0x1] %vm903, 0.0
  %906 = vst.msk [vmem:[%s74 + $0x2f] sm:$0x1] %vm903, 0.0
  %907 = vst.msk [vmem:[%s74 + $0x3f] sm:$0x1] %vm903, 0.0
  %908 = vst.msk [vmem:[%s74 + $0x4f] sm:$0x1] %vm903, 0.0
  %909 = vst.msk [vmem:[%s74 + $0x5f] sm:$0x1] %vm903, 0.0
  %910 = vst.msk [vmem:[%s74 + $0x6f] sm:$0x1] %vm903, 0.0
  %911 = vst.msk [vmem:[%s74 + $0x7f] sm:$0x1] %vm903, 0.0
  %912 = vst.msk [vmem:[%s74 + $0x8f] sm:$0x1] %vm903, 0.0
  %913 = vst.msk [vmem:[%s74 + $0x9f] sm:$0x1] %vm903, 0.0
  %914 = vst.msk [vmem:[%s74 + $0xaf] sm:$0x1] %vm903, 0.0
  %915 = vst.msk [vmem:[%s74 + $0xbf] sm:$0x1] %vm903, 0.0
  %916 = vst.msk [vmem:[%s74 + $0xcf] sm:$0x1] %vm903, 0.0
  %917 = vst.msk [vmem:[%s74 + $0xdf] sm:$0x1] %vm903, 0.0
  %918 = vst.msk [vmem:[%s74 + $0xef] sm:$0x1] %vm903, 0.0
  %919 = vst.msk [vmem:[%s74 + $0x10f] sm:$0x1] %vm903, 0.0
  %920 = vst.msk [vmem:[%s74 + $0x11f] sm:$0x1] %vm903, 0.0
  %921 = vst.msk [vmem:[%s74 + $0x12f] sm:$0x1] %vm903, 0.0
  %922 = vst.msk [vmem:[%s74 + $0x13f] sm:$0x1] %vm903, 0.0
  %923 = vst.msk [vmem:[%s74 + $0x14f] sm:$0x1] %vm903, 0.0
  %924 = vst.msk [vmem:[%s74 + $0x15f] sm:$0x1] %vm903, 0.0
  %925 = vst.msk [vmem:[%s74 + $0x16f] sm:$0x1] %vm903, 0.0
  %926 = vst.msk [vmem:[%s74 + $0x17f] sm:$0x1] %vm903, 0.0
  %927 = vst.msk [vmem:[%s74 + $0x18f] sm:$0x1] %vm903, 0.0
  %928 = vst.msk [vmem:[%s74 + $0x19f] sm:$0x1] %vm903, 0.0
  %929 = vst.msk [vmem:[%s74 + $0x1af] sm:$0x1] %vm903, 0.0
  %930 = vst.msk [vmem:[%s74 + $0x1bf] sm:$0x1] %vm903, 0.0
  %931 = vst.msk [vmem:[%s74 + $0x1cf] sm:$0x1] %vm903, 0.0
  %932 = vst.msk [vmem:[%s74 + $0x1df] sm:$0x1] %vm903, 0.0
  %933 = vst.msk [vmem:[%s74 + $0x1ef] sm:$0x1] %vm903, 0.0
  %v934 = vld [vmem:[%s0] sm:$0xff]
  %v935 = vld [vmem:[%s0 + $0x8] sm:$0x7f]
  %v936 = vld [vmem:[%s0 + $0x10] sm:$0xff]
  %v937 = vld [vmem:[%s0 + $0x18] sm:$0x7f]
  %v938 = vld [vmem:[%s0 + $0x20] sm:$0xff]
  %v939 = vld [vmem:[%s0 + $0x28] sm:$0x7f]
  %v940 = vld [vmem:[%s0 + $0x30] sm:$0xff]
  %v941 = vld [vmem:[%s0 + $0x38] sm:$0x7f]
  %v942 = vld [vmem:[%s0 + $0x40] sm:$0xff]
  %v943 = vld [vmem:[%s0 + $0x48] sm:$0x7f]
  %v944 = vld [vmem:[%s0 + $0x50] sm:$0xff]
  %v945 = vld [vmem:[%s0 + $0x58] sm:$0x7f]
  %v946 = vld [vmem:[%s0 + $0x60] sm:$0xff]
  %v947 = vld [vmem:[%s0 + $0x68] sm:$0x7f]
  %v948 = vld [vmem:[%s0 + $0x70] sm:$0xff]
  %v949 = vld [vmem:[%s0 + $0x78] sm:$0x7f]
  %v950 = vld [vmem:[%s0 + $0x80] sm:$0xff]
  %v951 = vld [vmem:[%s0 + $0x88] sm:$0x7f]
  %v952 = vld [vmem:[%s0 + $0x90] sm:$0xff]
  %v953 = vld [vmem:[%s0 + $0x98] sm:$0x7f]
  %v954 = vld [vmem:[%s0 + $0xa0] sm:$0xff]
  %v955 = vld [vmem:[%s0 + $0xa8] sm:$0x7f]
  %v956 = vld [vmem:[%s0 + $0xb0] sm:$0xff]
  %v957 = vld [vmem:[%s0 + $0xb8] sm:$0x7f]
  %v958 = vld [vmem:[%s0 + $0xc0] sm:$0xff]
  %v959 = vld [vmem:[%s0 + $0xc8] sm:$0x7f]
  %v960 = vld [vmem:[%s0 + $0xd0] sm:$0xff]
  %v961 = vld [vmem:[%s0 + $0xd8] sm:$0x7f]
  %v962 = vld [vmem:[%s0 + $0xe0] sm:$0xff]
  %v963 = vld [vmem:[%s0 + $0xe8] sm:$0x7f]
  %v964 = vld [vmem:[%s0 + $0xf0] sm:$0xff]
  %v965 = vld [vmem:[%s0 + $0xf8] sm:$0x7f]
  %v966 = vld [vmem:[%s0 + $0x100] sm:$0xff]
  %v967 = vld [vmem:[%s0 + $0x108] sm:$0x7f]
  %v968 = vld [vmem:[%s0 + $0x110] sm:$0xff]
  %v969 = vld [vmem:[%s0 + $0x118] sm:$0x7f]
  %v970 = vld [vmem:[%s0 + $0x120] sm:$0xff]
  %v971 = vld [vmem:[%s0 + $0x128] sm:$0x7f]
  %v972 = vld [vmem:[%s0 + $0x130] sm:$0xff]
  %v973 = vld [vmem:[%s0 + $0x138] sm:$0x7f]
  %v974 = vld [vmem:[%s0 + $0x140] sm:$0xff]
  %v975 = vld [vmem:[%s0 + $0x148] sm:$0x7f]
  %v976 = vld [vmem:[%s0 + $0x150] sm:$0xff]
  %v977 = vld [vmem:[%s0 + $0x158] sm:$0x7f]
  %v978 = vld [vmem:[%s0 + $0x160] sm:$0xff]
  %v979 = vld [vmem:[%s0 + $0x168] sm:$0x7f]
  %v980 = vld [vmem:[%s0 + $0x170] sm:$0xff]
  %v981 = vld [vmem:[%s0 + $0x178] sm:$0x7f]
  %v982 = vld [vmem:[%s0 + $0x180] sm:$0xff]
  %v983 = vld [vmem:[%s0 + $0x188] sm:$0x7f]
  %v984 = vld [vmem:[%s0 + $0x190] sm:$0xff]
  %v985 = vld [vmem:[%s0 + $0x198] sm:$0x7f]
  %v986 = vld [vmem:[%s0 + $0x1a0] sm:$0xff]
  %v987 = vld [vmem:[%s0 + $0x1a8] sm:$0x7f]
  %v988 = vld [vmem:[%s0 + $0x1b0] sm:$0xff]
  %v989 = vld [vmem:[%s0 + $0x1b8] sm:$0x7f]
  %v990 = vld [vmem:[%s0 + $0x1c0] sm:$0xff]
  %v991 = vld [vmem:[%s0 + $0x1c8] sm:$0x7f]
  %v992 = vld [vmem:[%s0 + $0x1d0] sm:$0xff]
  %v993 = vld [vmem:[%s0 + $0x1d8] sm:$0x7f]
  %v994 = vld [vmem:[%s0 + $0x1e0] sm:$0xff]
  %v995 = vld [vmem:[%s0 + $0x1e8] sm:$0x7f]
  %v996 = vld [vmem:[%s0 + $0x1f0] sm:$0xff]
  %v997 = vld [vmem:[%s0 + $0x1f8] sm:$0x7f]
  %1062 = vrot.lane.b32.xlu0 %v934, 12
  %v1063 = vpop.permute.xlu0 %1062
  %1064 = vrot.lane.b32.xlu0 %v935, 12
  %v1065 = vpop.permute.xlu0 %1064
  %1066 = vrot.lane.b32.xlu0 %v936, 12
  %v1067 = vpop.permute.xlu0 %1066
  %1068 = vrot.lane.b32.xlu0 %v937, 12
  %v1069 = vpop.permute.xlu0 %1068
  %1070 = vrot.lane.b32.xlu0 %v938, 12
  %v1071 = vpop.permute.xlu0 %1070
  %1072 = vrot.lane.b32.xlu0 %v939, 12
  %v1073 = vpop.permute.xlu0 %1072
  %1074 = vrot.lane.b32.xlu0 %v940, 12
  %v1075 = vpop.permute.xlu0 %1074
  %1076 = vrot.lane.b32.xlu0 %v941, 12
  %v1077 = vpop.permute.xlu0 %1076
  %1078 = vrot.lane.b32.xlu0 %v942, 12
  %v1079 = vpop.permute.xlu0 %1078
  %1080 = vrot.lane.b32.xlu0 %v943, 12
  %v1081 = vpop.permute.xlu0 %1080
  %1082 = vrot.lane.b32.xlu0 %v944, 12
  %v1083 = vpop.permute.xlu0 %1082
  %1084 = vrot.lane.b32.xlu0 %v945, 12
  %v1085 = vpop.permute.xlu0 %1084
  %1086 = vrot.lane.b32.xlu0 %v946, 12
  %v1087 = vpop.permute.xlu0 %1086
  %1088 = vrot.lane.b32.xlu0 %v947, 12
  %v1089 = vpop.permute.xlu0 %1088
  %1090 = vrot.lane.b32.xlu0 %v948, 12
  %v1091 = vpop.permute.xlu0 %1090
  %1092 = vrot.lane.b32.xlu0 %v949, 12
  %v1093 = vpop.permute.xlu0 %1092
  %1094 = vrot.lane.b32.xlu0 %v950, 12
  %v1095 = vpop.permute.xlu0 %1094
  %1096 = vrot.lane.b32.xlu0 %v951, 12
  %v1097 = vpop.permute.xlu0 %1096
  %1098 = vrot.lane.b32.xlu0 %v952, 12
  %v1099 = vpop.permute.xlu0 %1098
  %1100 = vrot.lane.b32.xlu0 %v953, 12
  %v1101 = vpop.permute.xlu0 %1100
  %1102 = vrot.lane.b32.xlu0 %v954, 12
  %v1103 = vpop.permute.xlu0 %1102
  %1104 = vrot.lane.b32.xlu0 %v955, 12
  %v1105 = vpop.permute.xlu0 %1104
  %1106 = vrot.lane.b32.xlu0 %v956, 12
  %v1107 = vpop.permute.xlu0 %1106
  %1108 = vrot.lane.b32.xlu0 %v957, 12
  %v1109 = vpop.permute.xlu0 %1108
  %1110 = vrot.lane.b32.xlu0 %v958, 12
  %v1111 = vpop.permute.xlu0 %1110
  %1112 = vrot.lane.b32.xlu0 %v959, 12
  %v1113 = vpop.permute.xlu0 %1112
  %1114 = vrot.lane.b32.xlu0 %v960, 12
  %v1115 = vpop.permute.xlu0 %1114
  %1116 = vrot.lane.b32.xlu0 %v961, 12
  %v1117 = vpop.permute.xlu0 %1116
  %1118 = vrot.lane.b32.xlu0 %v962, 12
  %v1119 = vpop.permute.xlu0 %1118
  %1120 = vrot.lane.b32.xlu0 %v963, 12
  %v1121 = vpop.permute.xlu0 %1120
  %1122 = vrot.lane.b32.xlu0 %v964, 12
  %v1123 = vpop.permute.xlu0 %1122
  %1124 = vrot.lane.b32.xlu0 %v965, 12
  %v1125 = vpop.permute.xlu0 %1124
  %1126 = vrot.lane.b32.xlu0 %v966, 12
  %v1127 = vpop.permute.xlu0 %1126
  %1128 = vrot.lane.b32.xlu0 %v967, 12
  %v1129 = vpop.permute.xlu0 %1128
  %1130 = vrot.lane.b32.xlu0 %v968, 12
  %v1131 = vpop.permute.xlu0 %1130
  %1132 = vrot.lane.b32.xlu0 %v969, 12
  %v1133 = vpop.permute.xlu0 %1132
  %1134 = vrot.lane.b32.xlu0 %v970, 12
  %v1135 = vpop.permute.xlu0 %1134
  %1136 = vrot.lane.b32.xlu0 %v971, 12
  %v1137 = vpop.permute.xlu0 %1136
  %1138 = vrot.lane.b32.xlu0 %v972, 12
  %v1139 = vpop.permute.xlu0 %1138
  %1140 = vrot.lane.b32.xlu0 %v973, 12
  %v1141 = vpop.permute.xlu0 %1140
  %1142 = vrot.lane.b32.xlu0 %v974, 12
  %v1143 = vpop.permute.xlu0 %1142
  %1144 = vrot.lane.b32.xlu0 %v975, 12
  %v1145 = vpop.permute.xlu0 %1144
  %1146 = vrot.lane.b32.xlu0 %v976, 12
  %v1147 = vpop.permute.xlu0 %1146
  %1148 = vrot.lane.b32.xlu0 %v977, 12
  %v1149 = vpop.permute.xlu0 %1148
  %1150 = vrot.lane.b32.xlu0 %v978, 12
  %v1151 = vpop.permute.xlu0 %1150
  %1152 = vrot.lane.b32.xlu0 %v979, 12
  %v1153 = vpop.permute.xlu0 %1152
  %1154 = vrot.lane.b32.xlu0 %v980, 12
  %v1155 = vpop.permute.xlu0 %1154
  %1156 = vrot.lane.b32.xlu0 %v981, 12
  %v1157 = vpop.permute.xlu0 %1156
  %1158 = vrot.lane.b32.xlu0 %v982, 12
  %v1159 = vpop.permute.xlu0 %1158
  %1160 = vrot.lane.b32.xlu0 %v983, 12
  %v1161 = vpop.permute.xlu0 %1160
  %1162 = vrot.lane.b32.xlu0 %v984, 12
  %v1163 = vpop.permute.xlu0 %1162
  %1164 = vrot.lane.b32.xlu0 %v985, 12
  %v1165 = vpop.permute.xlu0 %1164
  %1166 = vrot.lane.b32.xlu0 %v986, 12
  %v1167 = vpop.permute.xlu0 %1166
  %1168 = vrot.lane.b32.xlu0 %v987, 12
  %v1169 = vpop.permute.xlu0 %1168
  %1170 = vrot.lane.b32.xlu0 %v988, 12
  %v1171 = vpop.permute.xlu0 %1170
  %1172 = vrot.lane.b32.xlu0 %v989, 12
  %v1173 = vpop.permute.xlu0 %1172
  %1174 = vrot.lane.b32.xlu0 %v990, 12
  %v1175 = vpop.permute.xlu0 %1174
  %1176 = vrot.lane.b32.xlu0 %v991, 12
  %v1177 = vpop.permute.xlu0 %1176
  %1178 = vrot.lane.b32.xlu0 %v992, 12
  %v1179 = vpop.permute.xlu0 %1178
  %1180 = vrot.lane.b32.xlu0 %v993, 12
  %v1181 = vpop.permute.xlu0 %1180
  %1182 = vrot.lane.b32.xlu0 %v994, 12
  %v1183 = vpop.permute.xlu0 %1182
  %1184 = vrot.lane.b32.xlu0 %v995, 12
  %v1185 = vpop.permute.xlu0 %1184
  %1186 = vrot.lane.b32.xlu0 %v996, 12
  %v1187 = vpop.permute.xlu0 %1186
  %1188 = vrot.lane.b32.xlu0 %v997, 12
  %v1189 = vpop.permute.xlu0 %1188
  %vm1254 = vcmask 130144
  %1255 = vst.msk [vmem:[#allocation2 + $0x1] sm:$0xff] %vm1254, %v1063
  %vm1256 = vcmask 129120
  %1257 = vst.msk [vmem:[#allocation2 + $0x9] sm:$0x7f] %vm1256, %v1065
  %1258 = vst.msk [vmem:[#allocation2 + $0x11] sm:$0xff] %vm1254, %v1067
  %1259 = vst.msk [vmem:[#allocation2 + $0x19] sm:$0x7f] %vm1256, %v1069
  %1260 = vst.msk [vmem:[#allocation2 + $0x21] sm:$0xff] %vm1254, %v1071
  %1261 = vst.msk [vmem:[#allocation2 + $0x29] sm:$0x7f] %vm1256, %v1073
  %1262 = vst.msk [vmem:[#allocation2 + $0x31] sm:$0xff] %vm1254, %v1075
  %1263 = vst.msk [vmem:[#allocation2 + $0x39] sm:$0x7f] %vm1256, %v1077
  %1264 = vst.msk [vmem:[#allocation2 + $0x41] sm:$0xff] %vm1254, %v1079
  %1265 = vst.msk [vmem:[#allocation2 + $0x49] sm:$0x7f] %vm1256, %v1081
  %1266 = vst.msk [vmem:[#allocation2 + $0x51] sm:$0xff] %vm1254, %v1083
  %1267 = vst.msk [vmem:[#allocation2 + $0x59] sm:$0x7f] %vm1256, %v1085
  %1268 = vst.msk [vmem:[#allocation2 + $0x61] sm:$0xff] %vm1254, %v1087
  %1269 = vst.msk [vmem:[#allocation2 + $0x69] sm:$0x7f] %vm1256, %v1089
  %1270 = vst.msk [vmem:[#allocation2 + $0x71] sm:$0xff] %vm1254, %v1091
  %1271 = vst.msk [vmem:[#allocation2 + $0x79] sm:$0x7f] %vm1256, %v1093
  %1272 = vst.msk [vmem:[#allocation2 + $0x81] sm:$0xff] %vm1254, %v1095
  %1273 = vst.msk [vmem:[#allocation2 + $0x89] sm:$0x7f] %vm1256, %v1097
  %1274 = vst.msk [vmem:[#allocation2 + $0x91] sm:$0xff] %vm1254, %v1099
  %1275 = vst.msk [vmem:[#allocation2 + $0x99] sm:$0x7f] %vm1256, %v1101
  %1276 = vst.msk [vmem:[#allocation2 + $0xa1] sm:$0xff] %vm1254, %v1103
  %1277 = vst.msk [vmem:[#allocation2 + $0xa9] sm:$0x7f] %vm1256, %v1105
  %1278 = vst.msk [vmem:[#allocation2 + $0xb1] sm:$0xff] %vm1254, %v1107
  %1279 = vst.msk [vmem:[#allocation2 + $0xb9] sm:$0x7f] %vm1256, %v1109
  %1280 = vst.msk [vmem:[#allocation2 + $0xc1] sm:$0xff] %vm1254, %v1111
  %1281 = vst.msk [vmem:[#allocation2 + $0xc9] sm:$0x7f] %vm1256, %v1113
  %1282 = vst.msk [vmem:[#allocation2 + $0xd1] sm:$0xff] %vm1254, %v1115
  %1283 = vst.msk [vmem:[#allocation2 + $0xd9] sm:$0x7f] %vm1256, %v1117
  %1284 = vst.msk [vmem:[#allocation2 + $0xe1] sm:$0xff] %vm1254, %v1119
  %1285 = vst.msk [vmem:[#allocation2 + $0xe9] sm:$0x7f] %vm1256, %v1121
  %1286 = vst.msk [vmem:[#allocation2 + $0xf1] sm:$0xff] %vm1254, %v1123
  %1287 = vst.msk [vmem:[#allocation2 + $0xf9] sm:$0x7f] %vm1256, %v1125
  %1288 = vst.msk [vmem:[#allocation2 + $0x101] sm:$0xff] %vm1254, %v1127
  %1289 = vst.msk [vmem:[#allocation2 + $0x109] sm:$0x7f] %vm1256, %v1129
  %1290 = vst.msk [vmem:[#allocation2 + $0x111] sm:$0xff] %vm1254, %v1131
  %1291 = vst.msk [vmem:[#allocation2 + $0x119] sm:$0x7f] %vm1256, %v1133
  %1292 = vst.msk [vmem:[#allocation2 + $0x121] sm:$0xff] %vm1254, %v1135
  %1293 = vst.msk [vmem:[#allocation2 + $0x129] sm:$0x7f] %vm1256, %v1137
  %1294 = vst.msk [vmem:[#allocation2 + $0x131] sm:$0xff] %vm1254, %v1139
  %1295 = vst.msk [vmem:[#allocation2 + $0x139] sm:$0x7f] %vm1256, %v1141
  %1296 = vst.msk [vmem:[#allocation2 + $0x141] sm:$0xff] %vm1254, %v1143
  %1297 = vst.msk [vmem:[#allocation2 + $0x149] sm:$0x7f] %vm1256, %v1145
  %1298 = vst.msk [vmem:[#allocation2 + $0x151] sm:$0xff] %vm1254, %v1147
  %1299 = vst.msk [vmem:[#allocation2 + $0x159] sm:$0x7f] %vm1256, %v1149
  %1300 = vst.msk [vmem:[#allocation2 + $0x161] sm:$0xff] %vm1254, %v1151
  %1301 = vst.msk [vmem:[#allocation2 + $0x169] sm:$0x7f] %vm1256, %v1153
  %1302 = vst.msk [vmem:[#allocation2 + $0x171] sm:$0xff] %vm1254, %v1155
  %1303 = vst.msk [vmem:[#allocation2 + $0x179] sm:$0x7f] %vm1256, %v1157
  %1304 = vst.msk [vmem:[#allocation2 + $0x181] sm:$0xff] %vm1254, %v1159
  %1305 = vst.msk [vmem:[#allocation2 + $0x189] sm:$0x7f] %vm1256, %v1161
  %1306 = vst.msk [vmem:[#allocation2 + $0x191] sm:$0xff] %vm1254, %v1163
  %1307 = vst.msk [vmem:[#allocation2 + $0x199] sm:$0x7f] %vm1256, %v1165
  %1308 = vst.msk [vmem:[#allocation2 + $0x1a1] sm:$0xff] %vm1254, %v1167
  %1309 = vst.msk [vmem:[#allocation2 + $0x1a9] sm:$0x7f] %vm1256, %v1169
  %1310 = vst.msk [vmem:[#allocation2 + $0x1b1] sm:$0xff] %vm1254, %v1171
  %1311 = vst.msk [vmem:[#allocation2 + $0x1b9] sm:$0x7f] %vm1256, %v1173
  %1312 = vst.msk [vmem:[#allocation2 + $0x1c1] sm:$0xff] %vm1254, %v1175
  %1313 = vst.msk [vmem:[#allocation2 + $0x1c9] sm:$0x7f] %vm1256, %v1177
  %1314 = vst.msk [vmem:[#allocation2 + $0x1d1] sm:$0xff] %vm1254, %v1179
  %1315 = vst.msk [vmem:[#allocation2 + $0x1d9] sm:$0x7f] %vm1256, %v1181
  %1316 = vst.msk [vmem:[#allocation2 + $0x1e1] sm:$0xff] %vm1254, %v1183
  %1317 = vst.msk [vmem:[#allocation2 + $0x1e9] sm:$0x7f] %vm1256, %v1185
  %1318 = vst.msk [vmem:[#allocation2 + $0x1f1] sm:$0xff] %vm1254, %v1187
  %1319 = vst.msk [vmem:[#allocation2 + $0x1f9] sm:$0x7f] %vm1256, %v1189
  %vm1320 = vcmask 122976
  %1321 = vst.msk [vmem:[#allocation2] sm:$0x1] %vm1320, 0.0
  %1322 = vst.msk [vmem:[#allocation2 + $0x10] sm:$0x1] %vm1320, 0.0
  %1323 = vst.msk [vmem:[#allocation2 + $0x20] sm:$0x1] %vm1320, 0.0
  %1324 = vst.msk [vmem:[#allocation2 + $0x30] sm:$0x1] %vm1320, 0.0
  %1325 = vst.msk [vmem:[#allocation2 + $0x40] sm:$0x1] %vm1320, 0.0
  %1326 = vst.msk [vmem:[#allocation2 + $0x50] sm:$0x1] %vm1320, 0.0
  %1327 = vst.msk [vmem:[#allocation2 + $0x60] sm:$0x1] %vm1320, 0.0
  %1328 = vst.msk [vmem:[#allocation2 + $0x70] sm:$0x1] %vm1320, 0.0
  %1329 = vst.msk [vmem:[#allocation2 + $0x80] sm:$0x1] %vm1320, 0.0
  %1330 = vst.msk [vmem:[#allocation2 + $0x90] sm:$0x1] %vm1320, 0.0
  %1331 = vst.msk [vmem:[#allocation2 + $0xa0] sm:$0x1] %vm1320, 0.0
  %1332 = vst.msk [vmem:[#allocation2 + $0xb0] sm:$0x1] %vm1320, 0.0
  %1333 = vst.msk [vmem:[#allocation2 + $0xc0] sm:$0x1] %vm1320, 0.0
  %1334 = vst.msk [vmem:[#allocation2 + $0xd0] sm:$0x1] %vm1320, 0.0
  %1335 = vst.msk [vmem:[#allocation2 + $0xe0] sm:$0x1] %vm1320, 0.0
  %1336 = vst.msk [vmem:[#allocation2 + $0xf0] sm:$0x1] %vm1320, 0.0
  %1337 = vst.msk [vmem:[#allocation2 + $0x100] sm:$0x1] %vm1320, 0.0
  %1338 = vst.msk [vmem:[#allocation2 + $0x110] sm:$0x1] %vm1320, 0.0
  %1339 = vst.msk [vmem:[#allocation2 + $0x120] sm:$0x1] %vm1320, 0.0
  %1340 = vst.msk [vmem:[#allocation2 + $0x130] sm:$0x1] %vm1320, 0.0
  %1341 = vst.msk [vmem:[#allocation2 + $0x140] sm:$0x1] %vm1320, 0.0
  %1342 = vst.msk [vmem:[#allocation2 + $0x150] sm:$0x1] %vm1320, 0.0
  %1343 = vst.msk [vmem:[#allocation2 + $0x160] sm:$0x1] %vm1320, 0.0
  %1344 = vst.msk [vmem:[#allocation2 + $0x170] sm:$0x1] %vm1320, 0.0
  %1345 = vst.msk [vmem:[#allocation2 + $0x180] sm:$0x1] %vm1320, 0.0
  %1346 = vst.msk [vmem:[#allocation2 + $0x190] sm:$0x1] %vm1320, 0.0
  %1347 = vst.msk [vmem:[#allocation2 + $0x1a0] sm:$0x1] %vm1320, 0.0
  %1348 = vst.msk [vmem:[#allocation2 + $0x1b0] sm:$0x1] %vm1320, 0.0
  %1349 = vst.msk [vmem:[#allocation2 + $0x1c0] sm:$0x1] %vm1320, 0.0
  %1350 = vst.msk [vmem:[#allocation2 + $0x1d0] sm:$0x1] %vm1320, 0.0
  %1351 = vst.msk [vmem:[#allocation2 + $0x1e0] sm:$0x1] %vm1320, 0.0
  %1352 = vst.msk [vmem:[#allocation2 + $0x1f0] sm:$0x1] %vm1320, 0.0
  %v1353 = vld [vmem:[%s0] sm:$0xff]
  %v1354 = vld [vmem:[%s0 + $0x8] sm:$0xff]
  %v1355 = vld [vmem:[%s0 + $0x10] sm:$0xff]
  %v1356 = vld [vmem:[%s0 + $0x18] sm:$0xff]
  %v1357 = vld [vmem:[%s0 + $0x20] sm:$0xff]
  %v1358 = vld [vmem:[%s0 + $0x28] sm:$0xff]
  %v1359 = vld [vmem:[%s0 + $0x30] sm:$0xff]
  %v1360 = vld [vmem:[%s0 + $0x38] sm:$0xff]
  %v1361 = vld [vmem:[%s0 + $0x40] sm:$0xff]
  %v1362 = vld [vmem:[%s0 + $0x48] sm:$0xff]
  %v1363 = vld [vmem:[%s0 + $0x50] sm:$0xff]
  %v1364 = vld [vmem:[%s0 + $0x58] sm:$0xff]
  %v1365 = vld [vmem:[%s0 + $0x60] sm:$0xff]
  %v1366 = vld [vmem:[%s0 + $0x68] sm:$0xff]
  %v1367 = vld [vmem:[%s0 + $0x70] sm:$0xff]
  %v1368 = vld [vmem:[%s0 + $0x78] sm:$0xff]
  %v1369 = vld [vmem:[%s0 + $0x80] sm:$0xff]
  %v1370 = vld [vmem:[%s0 + $0x88] sm:$0xff]
  %v1371 = vld [vmem:[%s0 + $0x90] sm:$0xff]
  %v1372 = vld [vmem:[%s0 + $0x98] sm:$0xff]
  %v1373 = vld [vmem:[%s0 + $0xa0] sm:$0xff]
  %v1374 = vld [vmem:[%s0 + $0xa8] sm:$0xff]
  %v1375 = vld [vmem:[%s0 + $0xb0] sm:$0xff]
  %v1376 = vld [vmem:[%s0 + $0xb8] sm:$0xff]
  %v1377 = vld [vmem:[%s0 + $0xc0] sm:$0xff]
  %v1378 = vld [vmem:[%s0 + $0xc8] sm:$0xff]
  %v1379 = vld [vmem:[%s0 + $0xd0] sm:$0xff]
  %v1380 = vld [vmem:[%s0 + $0xd8] sm:$0xff]
  %v1381 = vld [vmem:[%s0 + $0xe0] sm:$0xff]
  %v1382 = vld [vmem:[%s0 + $0xe8] sm:$0xff]
  %v1383 = vld [vmem:[%s0 + $0xf0] sm:$0xff]
  %v1384 = vld [vmem:[%s0 + $0xf8] sm:$0xff]
  %v1385 = vld [vmem:[%s0 + $0x100] sm:$0xff]
  %v1386 = vld [vmem:[%s0 + $0x108] sm:$0xff]
  %v1387 = vld [vmem:[%s0 + $0x110] sm:$0xff]
  %v1388 = vld [vmem:[%s0 + $0x118] sm:$0xff]
  %v1389 = vld [vmem:[%s0 + $0x120] sm:$0xff]
  %v1390 = vld [vmem:[%s0 + $0x128] sm:$0xff]
  %v1391 = vld [vmem:[%s0 + $0x130] sm:$0xff]
  %v1392 = vld [vmem:[%s0 + $0x138] sm:$0xff]
  %v1393 = vld [vmem:[%s0 + $0x140] sm:$0xff]
  %v1394 = vld [vmem:[%s0 + $0x148] sm:$0xff]
  %v1395 = vld [vmem:[%s0 + $0x150] sm:$0xff]
  %v1396 = vld [vmem:[%s0 + $0x158] sm:$0xff]
  %v1397 = vld [vmem:[%s0 + $0x160] sm:$0xff]
  %v1398 = vld [vmem:[%s0 + $0x168] sm:$0xff]
  %v1399 = vld [vmem:[%s0 + $0x170] sm:$0xff]
  %v1400 = vld [vmem:[%s0 + $0x178] sm:$0xff]
  %v1401 = vld [vmem:[%s0 + $0x180] sm:$0xff]
  %v1402 = vld [vmem:[%s0 + $0x188] sm:$0xff]
  %v1403 = vld [vmem:[%s0 + $0x190] sm:$0xff]
  %v1404 = vld [vmem:[%s0 + $0x198] sm:$0xff]
  %v1405 = vld [vmem:[%s0 + $0x1a0] sm:$0xff]
  %v1406 = vld [vmem:[%s0 + $0x1a8] sm:$0xff]
  %v1407 = vld [vmem:[%s0 + $0x1b0] sm:$0xff]
  %v1408 = vld [vmem:[%s0 + $0x1b8] sm:$0xff]
  %v1409 = vld [vmem:[%s0 + $0x1c0] sm:$0xff]
  %v1410 = vld [vmem:[%s0 + $0x1c8] sm:$0xff]
  %v1411 = vld [vmem:[%s0 + $0x1d0] sm:$0xff]
  %v1412 = vld [vmem:[%s0 + $0x1d8] sm:$0xff]
  %v1413 = vld [vmem:[%s0 + $0x1e0] sm:$0xff]
  %v1414 = vld [vmem:[%s0 + $0x1e8] sm:$0xff]
  %v1415 = vld [vmem:[%s0 + $0x1f0] sm:$0xff]
  %v1416 = vld [vmem:[%s0 + $0x1f8] sm:$0xff]
  %1481 = vrot.lane.b32.xlu0 %v1353, 16
  %v1482 = vpop.permute.xlu0 %1481
  %1483 = vrot.lane.b32.xlu0 %v1354, 16
  %v1484 = vpop.permute.xlu0 %1483
  %1485 = vrot.lane.b32.xlu0 %v1355, 16
  %v1486 = vpop.permute.xlu0 %1485
  %1487 = vrot.lane.b32.xlu0 %v1356, 16
  %v1488 = vpop.permute.xlu0 %1487
  %1489 = vrot.lane.b32.xlu0 %v1357, 16
  %v1490 = vpop.permute.xlu0 %1489
  %1491 = vrot.lane.b32.xlu0 %v1358, 16
  %v1492 = vpop.permute.xlu0 %1491
  %1493 = vrot.lane.b32.xlu0 %v1359, 16
  %v1494 = vpop.permute.xlu0 %1493
  %1495 = vrot.lane.b32.xlu0 %v1360, 16
  %v1496 = vpop.permute.xlu0 %1495
  %1497 = vrot.lane.b32.xlu0 %v1361, 16
  %v1498 = vpop.permute.xlu0 %1497
  %1499 = vrot.lane.b32.xlu0 %v1362, 16
  %v1500 = vpop.permute.xlu0 %1499
  %1501 = vrot.lane.b32.xlu0 %v1363, 16
  %v1502 = vpop.permute.xlu0 %1501
  %1503 = vrot.lane.b32.xlu0 %v1364, 16
  %v1504 = vpop.permute.xlu0 %1503
  %1505 = vrot.lane.b32.xlu0 %v1365, 16
  %v1506 = vpop.permute.xlu0 %1505
  %1507 = vrot.lane.b32.xlu0 %v1366, 16
  %v1508 = vpop.permute.xlu0 %1507
  %1509 = vrot.lane.b32.xlu0 %v1367, 16
  %v1510 = vpop.permute.xlu0 %1509
  %1511 = vrot.lane.b32.xlu0 %v1368, 16
  %v1512 = vpop.permute.xlu0 %1511
  %1513 = vrot.lane.b32.xlu0 %v1369, 16
  %v1514 = vpop.permute.xlu0 %1513
  %1515 = vrot.lane.b32.xlu0 %v1370, 16
  %v1516 = vpop.permute.xlu0 %1515
  %1517 = vrot.lane.b32.xlu0 %v1371, 16
  %v1518 = vpop.permute.xlu0 %1517
  %1519 = vrot.lane.b32.xlu0 %v1372, 16
  %v1520 = vpop.permute.xlu0 %1519
  %1521 = vrot.lane.b32.xlu0 %v1373, 16
  %v1522 = vpop.permute.xlu0 %1521
  %1523 = vrot.lane.b32.xlu0 %v1374, 16
  %v1524 = vpop.permute.xlu0 %1523
  %1525 = vrot.lane.b32.xlu0 %v1375, 16
  %v1526 = vpop.permute.xlu0 %1525
  %1527 = vrot.lane.b32.xlu0 %v1376, 16
  %v1528 = vpop.permute.xlu0 %1527
  %1529 = vrot.lane.b32.xlu0 %v1377, 16
  %v1530 = vpop.permute.xlu0 %1529
  %1531 = vrot.lane.b32.xlu0 %v1378, 16
  %v1532 = vpop.permute.xlu0 %1531
  %1533 = vrot.lane.b32.xlu0 %v1379, 16
  %v1534 = vpop.permute.xlu0 %1533
  %1535 = vrot.lane.b32.xlu0 %v1380, 16
  %v1536 = vpop.permute.xlu0 %1535
  %1537 = vrot.lane.b32.xlu0 %v1381, 16
  %v1538 = vpop.permute.xlu0 %1537
  %1539 = vrot.lane.b32.xlu0 %v1382, 16
  %v1540 = vpop.permute.xlu0 %1539
  %1541 = vrot.lane.b32.xlu0 %v1383, 16
  %v1542 = vpop.permute.xlu0 %1541
  %1543 = vrot.lane.b32.xlu0 %v1384, 16
  %v1544 = vpop.permute.xlu0 %1543
  %1545 = vrot.lane.b32.xlu0 %v1385, 16
  %v1546 = vpop.permute.xlu0 %1545
  %1547 = vrot.lane.b32.xlu0 %v1386, 16
  %v1548 = vpop.permute.xlu0 %1547
  %1549 = vrot.lane.b32.xlu0 %v1387, 16
  %v1550 = vpop.permute.xlu0 %1549
  %1551 = vrot.lane.b32.xlu0 %v1388, 16
  %v1552 = vpop.permute.xlu0 %1551
  %1553 = vrot.lane.b32.xlu0 %v1389, 16
  %v1554 = vpop.permute.xlu0 %1553
  %1555 = vrot.lane.b32.xlu0 %v1390, 16
  %v1556 = vpop.permute.xlu0 %1555
  %1557 = vrot.lane.b32.xlu0 %v1391, 16
  %v1558 = vpop.permute.xlu0 %1557
  %1559 = vrot.lane.b32.xlu0 %v1392, 16
  %v1560 = vpop.permute.xlu0 %1559
  %1561 = vrot.lane.b32.xlu0 %v1393, 16
  %v1562 = vpop.permute.xlu0 %1561
  %1563 = vrot.lane.b32.xlu0 %v1394, 16
  %v1564 = vpop.permute.xlu0 %1563
  %1565 = vrot.lane.b32.xlu0 %v1395, 16
  %v1566 = vpop.permute.xlu0 %1565
  %1567 = vrot.lane.b32.xlu0 %v1396, 16
  %v1568 = vpop.permute.xlu0 %1567
  %1569 = vrot.lane.b32.xlu0 %v1397, 16
  %v1570 = vpop.permute.xlu0 %1569
  %1571 = vrot.lane.b32.xlu0 %v1398, 16
  %v1572 = vpop.permute.xlu0 %1571
  %1573 = vrot.lane.b32.xlu0 %v1399, 16
  %v1574 = vpop.permute.xlu0 %1573
  %1575 = vrot.lane.b32.xlu0 %v1400, 16
  %v1576 = vpop.permute.xlu0 %1575
  %1577 = vrot.lane.b32.xlu0 %v1401, 16
  %v1578 = vpop.permute.xlu0 %1577
  %1579 = vrot.lane.b32.xlu0 %v1402, 16
  %v1580 = vpop.permute.xlu0 %1579
  %1581 = vrot.lane.b32.xlu0 %v1403, 16
  %v1582 = vpop.permute.xlu0 %1581
  %1583 = vrot.lane.b32.xlu0 %v1404, 16
  %v1584 = vpop.permute.xlu0 %1583
  %1585 = vrot.lane.b32.xlu0 %v1405, 16
  %v1586 = vpop.permute.xlu0 %1585
  %1587 = vrot.lane.b32.xlu0 %v1406, 16
  %v1588 = vpop.permute.xlu0 %1587
  %1589 = vrot.lane.b32.xlu0 %v1407, 16
  %v1590 = vpop.permute.xlu0 %1589
  %1591 = vrot.lane.b32.xlu0 %v1408, 16
  %v1592 = vpop.permute.xlu0 %1591
  %1593 = vrot.lane.b32.xlu0 %v1409, 16
  %v1594 = vpop.permute.xlu0 %1593
  %1595 = vrot.lane.b32.xlu0 %v1410, 16
  %v1596 = vpop.permute.xlu0 %1595
  %1597 = vrot.lane.b32.xlu0 %v1411, 16
  %v1598 = vpop.permute.xlu0 %1597
  %1599 = vrot.lane.b32.xlu0 %v1412, 16
  %v1600 = vpop.permute.xlu0 %1599
  %1601 = vrot.lane.b32.xlu0 %v1413, 16
  %v1602 = vpop.permute.xlu0 %1601
  %1603 = vrot.lane.b32.xlu0 %v1414, 16
  %v1604 = vpop.permute.xlu0 %1603
  %1605 = vrot.lane.b32.xlu0 %v1415, 16
  %v1606 = vpop.permute.xlu0 %1605
  %1607 = vrot.lane.b32.xlu0 %v1416, 16
  %v1608 = vpop.permute.xlu0 %1607
  %vm1673 = vcmask 162944
  %1674 = vst.msk [vmem:[#allocation2] sm:$0xff] %vm1673, %v1482
  %1675 = vst.msk [vmem:[#allocation2 + $0x8] sm:$0xff] %vm1673, %v1484
  %1676 = vst.msk [vmem:[#allocation2 + $0x10] sm:$0xff] %vm1673, %v1486
  %1677 = vst.msk [vmem:[#allocation2 + $0x18] sm:$0xff] %vm1673, %v1488
  %1678 = vst.msk [vmem:[#allocation2 + $0x20] sm:$0xff] %vm1673, %v1490
  %1679 = vst.msk [vmem:[#allocation2 + $0x28] sm:$0xff] %vm1673, %v1492
  %1680 = vst.msk [vmem:[#allocation2 + $0x30] sm:$0xff] %vm1673, %v1494
  %1681 = vst.msk [vmem:[#allocation2 + $0x38] sm:$0xff] %vm1673, %v1496
  %1682 = vst.msk [vmem:[#allocation2 + $0x40] sm:$0xff] %vm1673, %v1498
  %1683 = vst.msk [vmem:[#allocation2 + $0x48] sm:$0xff] %vm1673, %v1500
  %1684 = vst.msk [vmem:[#allocation2 + $0x50] sm:$0xff] %vm1673, %v1502
  %1685 = vst.msk [vmem:[#allocation2 + $0x58] sm:$0xff] %vm1673, %v1504
  %1686 = vst.msk [vmem:[#allocation2 + $0x60] sm:$0xff] %vm1673, %v1506
  %1687 = vst.msk [vmem:[#allocation2 + $0x68] sm:$0xff] %vm1673, %v1508
  %1688 = vst.msk [vmem:[#allocation2 + $0x70] sm:$0xff] %vm1673, %v1510
  %1689 = vst.msk [vmem:[#allocation2 + $0x78] sm:$0xff] %vm1673, %v1512
  %1690 = vst.msk [vmem:[#allocation2 + $0x80] sm:$0xff] %vm1673, %v1514
  %1691 = vst.msk [vmem:[#allocation2 + $0x88] sm:$0xff] %vm1673, %v1516
  %1692 = vst.msk [vmem:[#allocation2 + $0x90] sm:$0xff] %vm1673, %v1518
  %1693 = vst.msk [vmem:[#allocation2 + $0x98] sm:$0xff] %vm1673, %v1520
  %1694 = vst.msk [vmem:[#allocation2 + $0xa0] sm:$0xff] %vm1673, %v1522
  %1695 = vst.msk [vmem:[#allocation2 + $0xa8] sm:$0xff] %vm1673, %v1524
  %1696 = vst.msk [vmem:[#allocation2 + $0xb0] sm:$0xff] %vm1673, %v1526
  %1697 = vst.msk [vmem:[#allocation2 + $0xb8] sm:$0xff] %vm1673, %v1528
  %1698 = vst.msk [vmem:[#allocation2 + $0xc0] sm:$0xff] %vm1673, %v1530
  %1699 = vst.msk [vmem:[#allocation2 + $0xc8] sm:$0xff] %vm1673, %v1532
  %1700 = vst.msk [vmem:[#allocation2 + $0xd0] sm:$0xff] %vm1673, %v1534
  %1701 = vst.msk [vmem:[#allocation2 + $0xd8] sm:$0xff] %vm1673, %v1536
  %1702 = vst.msk [vmem:[#allocation2 + $0xe0] sm:$0xff] %vm1673, %v1538
  %1703 = vst.msk [vmem:[#allocation2 + $0xe8] sm:$0xff] %vm1673, %v1540
  %1704 = vst.msk [vmem:[#allocation2 + $0xf0] sm:$0xff] %vm1673, %v1542
  %1705 = vst.msk [vmem:[#allocation2 + $0xf8] sm:$0xff] %vm1673, %v1544
  %1706 = vst.msk [vmem:[#allocation2 + $0x100] sm:$0xff] %vm1673, %v1546
  %1707 = vst.msk [vmem:[#allocation2 + $0x108] sm:$0xff] %vm1673, %v1548
  %1708 = vst.msk [vmem:[#allocation2 + $0x110] sm:$0xff] %vm1673, %v1550
  %1709 = vst.msk [vmem:[#allocation2 + $0x118] sm:$0xff] %vm1673, %v1552
  %1710 = vst.msk [vmem:[#allocation2 + $0x120] sm:$0xff] %vm1673, %v1554
  %1711 = vst.msk [vmem:[#allocation2 + $0x128] sm:$0xff] %vm1673, %v1556
  %1712 = vst.msk [vmem:[#allocation2 + $0x130] sm:$0xff] %vm1673, %v1558
  %1713 = vst.msk [vmem:[#allocation2 + $0x138] sm:$0xff] %vm1673, %v1560
  %1714 = vst.msk [vmem:[#allocation2 + $0x140] sm:$0xff] %vm1673, %v1562
  %1715 = vst.msk [vmem:[#allocation2 + $0x148] sm:$0xff] %vm1673, %v1564
  %1716 = vst.msk [vmem:[#allocation2 + $0x150] sm:$0xff] %vm1673, %v1566
  %1717 = vst.msk [vmem:[#allocation2 + $0x158] sm:$0xff] %vm1673, %v1568
  %1718 = vst.msk [vmem:[#allocation2 + $0x160] sm:$0xff] %vm1673, %v1570
  %1719 = vst.msk [vmem:[#allocation2 + $0x168] sm:$0xff] %vm1673, %v1572
  %1720 = vst.msk [vmem:[#allocation2 + $0x170] sm:$0xff] %vm1673, %v1574
  %1721 = vst.msk [vmem:[#allocation2 + $0x178] sm:$0xff] %vm1673, %v1576
  %1722 = vst.msk [vmem:[#allocation2 + $0x180] sm:$0xff] %vm1673, %v1578
  %1723 = vst.msk [vmem:[#allocation2 + $0x188] sm:$0xff] %vm1673, %v1580
  %1724 = vst.msk [vmem:[#allocation2 + $0x190] sm:$0xff] %vm1673, %v1582
  %1725 = vst.msk [vmem:[#allocation2 + $0x198] sm:$0xff] %vm1673, %v1584
  %1726 = vst.msk [vmem:[#allocation2 + $0x1a0] sm:$0xff] %vm1673, %v1586
  %1727 = vst.msk [vmem:[#allocation2 + $0x1a8] sm:$0xff] %vm1673, %v1588
  %1728 = vst.msk [vmem:[#allocation2 + $0x1b0] sm:$0xff] %vm1673, %v1590
  %1729 = vst.msk [vmem:[#allocation2 + $0x1b8] sm:$0xff] %vm1673, %v1592
  %1730 = vst.msk [vmem:[#allocation2 + $0x1c0] sm:$0xff] %vm1673, %v1594
  %1731 = vst.msk [vmem:[#allocation2 + $0x1c8] sm:$0xff] %vm1673, %v1596
  %1732 = vst.msk [vmem:[#allocation2 + $0x1d0] sm:$0xff] %vm1673, %v1598
  %1733 = vst.msk [vmem:[#allocation2 + $0x1d8] sm:$0xff] %vm1673, %v1600
  %1734 = vst.msk [vmem:[#allocation2 + $0x1e0] sm:$0xff] %vm1673, %v1602
  %1735 = vst.msk [vmem:[#allocation2 + $0x1e8] sm:$0xff] %vm1673, %v1604
  %1736 = vst.msk [vmem:[#allocation2 + $0x1f0] sm:$0xff] %vm1673, %v1606
  %1737 = vst.msk [vmem:[#allocation2 + $0x1f8] sm:$0xff] %vm1673, %v1608
  %v1738 = vld [vmem:[%s0 + $0x1] sm:$0xff]
  %v1739 = vld [vmem:[%s0 + $0x9] sm:$0x7f]
  %v1740 = vld [vmem:[%s0 + $0x11] sm:$0xff]
  %v1741 = vld [vmem:[%s0 + $0x19] sm:$0x7f]
  %v1742 = vld [vmem:[%s0 + $0x21] sm:$0xff]
  %v1743 = vld [vmem:[%s0 + $0x29] sm:$0x7f]
  %v1744 = vld [vmem:[%s0 + $0x31] sm:$0xff]
  %v1745 = vld [vmem:[%s0 + $0x39] sm:$0x7f]
  %v1746 = vld [vmem:[%s0 + $0x41] sm:$0xff]
  %v1747 = vld [vmem:[%s0 + $0x49] sm:$0x7f]
  %v1748 = vld [vmem:[%s0 + $0x51] sm:$0xff]
  %v1749 = vld [vmem:[%s0 + $0x59] sm:$0x7f]
  %v1750 = vld [vmem:[%s0 + $0x61] sm:$0xff]
  %v1751 = vld [vmem:[%s0 + $0x69] sm:$0x7f]
  %v1752 = vld [vmem:[%s0 + $0x71] sm:$0xff]
  %v1753 = vld [vmem:[%s0 + $0x79] sm:$0x7f]
  %v1754 = vld [vmem:[%s0 + $0x81] sm:$0xff]
  %v1755 = vld [vmem:[%s0 + $0x89] sm:$0x7f]
  %v1756 = vld [vmem:[%s0 + $0x91] sm:$0xff]
  %v1757 = vld [vmem:[%s0 + $0x99] sm:$0x7f]
  %v1758 = vld [vmem:[%s0 + $0xa1] sm:$0xff]
  %v1759 = vld [vmem:[%s0 + $0xa9] sm:$0x7f]
  %v1760 = vld [vmem:[%s0 + $0xb1] sm:$0xff]
  %v1761 = vld [vmem:[%s0 + $0xb9] sm:$0x7f]
  %v1762 = vld [vmem:[%s0 + $0xc1] sm:$0xff]
  %v1763 = vld [vmem:[%s0 + $0xc9] sm:$0x7f]
  %v1764 = vld [vmem:[%s0 + $0xd1] sm:$0xff]
  %v1765 = vld [vmem:[%s0 + $0xd9] sm:$0x7f]
  %v1766 = vld [vmem:[%s0 + $0xe1] sm:$0xff]
  %v1767 = vld [vmem:[%s0 + $0xe9] sm:$0x7f]
  %v1768 = vld [vmem:[%s0 + $0xf1] sm:$0xff]
  %v1769 = vld [vmem:[%s0 + $0xf9] sm:$0x7f]
  %v1770 = vld [vmem:[%s0 + $0x101] sm:$0xff]
  %v1771 = vld [vmem:[%s0 + $0x109] sm:$0x7f]
  %v1772 = vld [vmem:[%s0 + $0x111] sm:$0xff]
  %v1773 = vld [vmem:[%s0 + $0x119] sm:$0x7f]
  %v1774 = vld [vmem:[%s0 + $0x121] sm:$0xff]
  %v1775 = vld [vmem:[%s0 + $0x129] sm:$0x7f]
  %v1776 = vld [vmem:[%s0 + $0x131] sm:$0xff]
  %v1777 = vld [vmem:[%s0 + $0x139] sm:$0x7f]
  %v1778 = vld [vmem:[%s0 + $0x141] sm:$0xff]
  %v1779 = vld [vmem:[%s0 + $0x149] sm:$0x7f]
  %v1780 = vld [vmem:[%s0 + $0x151] sm:$0xff]
  %v1781 = vld [vmem:[%s0 + $0x159] sm:$0x7f]
  %v1782 = vld [vmem:[%s0 + $0x161] sm:$0xff]
  %v1783 = vld [vmem:[%s0 + $0x169] sm:$0x7f]
  %v1784 = vld [vmem:[%s0 + $0x171] sm:$0xff]
  %v1785 = vld [vmem:[%s0 + $0x179] sm:$0x7f]
  %v1786 = vld [vmem:[%s0 + $0x181] sm:$0xff]
  %v1787 = vld [vmem:[%s0 + $0x189] sm:$0x7f]
  %v1788 = vld [vmem:[%s0 + $0x191] sm:$0xff]
  %v1789 = vld [vmem:[%s0 + $0x199] sm:$0x7f]
  %v1790 = vld [vmem:[%s0 + $0x1a1] sm:$0xff]
  %v1791 = vld [vmem:[%s0 + $0x1a9] sm:$0x7f]
  %v1792 = vld [vmem:[%s0 + $0x1b1] sm:$0xff]
  %v1793 = vld [vmem:[%s0 + $0x1b9] sm:$0x7f]
  %v1794 = vld [vmem:[%s0 + $0x1c1] sm:$0xff]
  %v1795 = vld [vmem:[%s0 + $0x1c9] sm:$0x7f]
  %v1796 = vld [vmem:[%s0 + $0x1d1] sm:$0xff]
  %v1797 = vld [vmem:[%s0 + $0x1d9] sm:$0x7f]
  %v1798 = vld [vmem:[%s0 + $0x1e1] sm:$0xff]
  %v1799 = vld [vmem:[%s0 + $0x1e9] sm:$0x7f]
  %v1800 = vld [vmem:[%s0 + $0x1f1] sm:$0xff]
  %v1801 = vld [vmem:[%s0 + $0x1f9] sm:$0x7f]
  %1866 = vrot.lane.b32.xlu0 %v1738, 20
  %v1867 = vpop.permute.xlu0 %1866
  %1868 = vrot.lane.b32.xlu0 %v1739, 20
  %v1869 = vpop.permute.xlu0 %1868
  %1870 = vrot.lane.b32.xlu0 %v1740, 20
  %v1871 = vpop.permute.xlu0 %1870
  %1872 = vrot.lane.b32.xlu0 %v1741, 20
  %v1873 = vpop.permute.xlu0 %1872
  %1874 = vrot.lane.b32.xlu0 %v1742, 20
  %v1875 = vpop.permute.xlu0 %1874
  %1876 = vrot.lane.b32.xlu0 %v1743, 20
  %v1877 = vpop.permute.xlu0 %1876
  %1878 = vrot.lane.b32.xlu0 %v1744, 20
  %v1879 = vpop.permute.xlu0 %1878
  %1880 = vrot.lane.b32.xlu0 %v1745, 20
  %v1881 = vpop.permute.xlu0 %1880
  %1882 = vrot.lane.b32.xlu0 %v1746, 20
  %v1883 = vpop.permute.xlu0 %1882
  %1884 = vrot.lane.b32.xlu0 %v1747, 20
  %v1885 = vpop.permute.xlu0 %1884
  %1886 = vrot.lane.b32.xlu0 %v1748, 20
  %v1887 = vpop.permute.xlu0 %1886
  %1888 = vrot.lane.b32.xlu0 %v1749, 20
  %v1889 = vpop.permute.xlu0 %1888
  %1890 = vrot.lane.b32.xlu0 %v1750, 20
  %v1891 = vpop.permute.xlu0 %1890
  %1892 = vrot.lane.b32.xlu0 %v1751, 20
  %v1893 = vpop.permute.xlu0 %1892
  %1894 = vrot.lane.b32.xlu0 %v1752, 20
  %v1895 = vpop.permute.xlu0 %1894
  %1896 = vrot.lane.b32.xlu0 %v1753, 20
  %v1897 = vpop.permute.xlu0 %1896
  %1898 = vrot.lane.b32.xlu0 %v1754, 20
  %v1899 = vpop.permute.xlu0 %1898
  %1900 = vrot.lane.b32.xlu0 %v1755, 20
  %v1901 = vpop.permute.xlu0 %1900
  %1902 = vrot.lane.b32.xlu0 %v1756, 20
  %v1903 = vpop.permute.xlu0 %1902
  %1904 = vrot.lane.b32.xlu0 %v1757, 20
  %v1905 = vpop.permute.xlu0 %1904
  %1906 = vrot.lane.b32.xlu0 %v1758, 20
  %v1907 = vpop.permute.xlu0 %1906
  %1908 = vrot.lane.b32.xlu0 %v1759, 20
  %v1909 = vpop.permute.xlu0 %1908
  %1910 = vrot.lane.b32.xlu0 %v1760, 20
  %v1911 = vpop.permute.xlu0 %1910
  %1912 = vrot.lane.b32.xlu0 %v1761, 20
  %v1913 = vpop.permute.xlu0 %1912
  %1914 = vrot.lane.b32.xlu0 %v1762, 20
  %v1915 = vpop.permute.xlu0 %1914
  %1916 = vrot.lane.b32.xlu0 %v1763, 20
  %v1917 = vpop.permute.xlu0 %1916
  %1918 = vrot.lane.b32.xlu0 %v1764, 20
  %v1919 = vpop.permute.xlu0 %1918
  %1920 = vrot.lane.b32.xlu0 %v1765, 20
  %v1921 = vpop.permute.xlu0 %1920
  %1922 = vrot.lane.b32.xlu0 %v1766, 20
  %v1923 = vpop.permute.xlu0 %1922
  %1924 = vrot.lane.b32.xlu0 %v1767, 20
  %v1925 = vpop.permute.xlu0 %1924
  %1926 = vrot.lane.b32.xlu0 %v1768, 20
  %v1927 = vpop.permute.xlu0 %1926
  %1928 = vrot.lane.b32.xlu0 %v1769, 20
  %v1929 = vpop.permute.xlu0 %1928
  %1930 = vrot.lane.b32.xlu0 %v1770, 20
  %v1931 = vpop.permute.xlu0 %1930
  %1932 = vrot.lane.b32.xlu0 %v1771, 20
  %v1933 = vpop.permute.xlu0 %1932
  %1934 = vrot.lane.b32.xlu0 %v1772, 20
  %v1935 = vpop.permute.xlu0 %1934
  %1936 = vrot.lane.b32.xlu0 %v1773, 20
  %v1937 = vpop.permute.xlu0 %1936
  %1938 = vrot.lane.b32.xlu0 %v1774, 20
  %v1939 = vpop.permute.xlu0 %1938
  %1940 = vrot.lane.b32.xlu0 %v1775, 20
  %v1941 = vpop.permute.xlu0 %1940
  %1942 = vrot.lane.b32.xlu0 %v1776, 20
  %v1943 = vpop.permute.xlu0 %1942
  %1944 = vrot.lane.b32.xlu0 %v1777, 20
  %v1945 = vpop.permute.xlu0 %1944
  %1946 = vrot.lane.b32.xlu0 %v1778, 20
  %v1947 = vpop.permute.xlu0 %1946
  %1948 = vrot.lane.b32.xlu0 %v1779, 20
  %v1949 = vpop.permute.xlu0 %1948
  %1950 = vrot.lane.b32.xlu0 %v1780, 20
  %v1951 = vpop.permute.xlu0 %1950
  %1952 = vrot.lane.b32.xlu0 %v1781, 20
  %v1953 = vpop.permute.xlu0 %1952
  %1954 = vrot.lane.b32.xlu0 %v1782, 20
  %v1955 = vpop.permute.xlu0 %1954
  %1956 = vrot.lane.b32.xlu0 %v1783, 20
  %v1957 = vpop.permute.xlu0 %1956
  %1958 = vrot.lane.b32.xlu0 %v1784, 20
  %v1959 = vpop.permute.xlu0 %1958
  %1960 = vrot.lane.b32.xlu0 %v1785, 20
  %v1961 = vpop.permute.xlu0 %1960
  %1962 = vrot.lane.b32.xlu0 %v1786, 20
  %v1963 = vpop.permute.xlu0 %1962
  %1964 = vrot.lane.b32.xlu0 %v1787, 20
  %v1965 = vpop.permute.xlu0 %1964
  %1966 = vrot.lane.b32.xlu0 %v1788, 20
  %v1967 = vpop.permute.xlu0 %1966
  %1968 = vrot.lane.b32.xlu0 %v1789, 20
  %v1969 = vpop.permute.xlu0 %1968
  %1970 = vrot.lane.b32.xlu0 %v1790, 20
  %v1971 = vpop.permute.xlu0 %1970
  %1972 = vrot.lane.b32.xlu0 %v1791, 20
  %v1973 = vpop.permute.xlu0 %1972
  %1974 = vrot.lane.b32.xlu0 %v1792, 20
  %v1975 = vpop.permute.xlu0 %1974
  %1976 = vrot.lane.b32.xlu0 %v1793, 20
  %v1977 = vpop.permute.xlu0 %1976
  %1978 = vrot.lane.b32.xlu0 %v1794, 20
  %v1979 = vpop.permute.xlu0 %1978
  %1980 = vrot.lane.b32.xlu0 %v1795, 20
  %v1981 = vpop.permute.xlu0 %1980
  %1982 = vrot.lane.b32.xlu0 %v1796, 20
  %v1983 = vpop.permute.xlu0 %1982
  %1984 = vrot.lane.b32.xlu0 %v1797, 20
  %v1985 = vpop.permute.xlu0 %1984
  %1986 = vrot.lane.b32.xlu0 %v1798, 20
  %v1987 = vpop.permute.xlu0 %1986
  %1988 = vrot.lane.b32.xlu0 %v1799, 20
  %v1989 = vpop.permute.xlu0 %1988
  %1990 = vrot.lane.b32.xlu0 %v1800, 20
  %v1991 = vpop.permute.xlu0 %1990
  %1992 = vrot.lane.b32.xlu0 %v1801, 20
  %v1993 = vpop.permute.xlu0 %1992
  %vm2058 = vcmask 195744
  %2059 = vst.msk [vmem:[#allocation2] sm:$0xff] %vm2058, %v1867
  %vm2060 = vcmask 194720
  %2061 = vst.msk [vmem:[#allocation2 + $0x8] sm:$0x7f] %vm2060, %v1869
  %2062 = vst.msk [vmem:[#allocation2 + $0x10] sm:$0xff] %vm2058, %v1871
  %2063 = vst.msk [vmem:[#allocation2 + $0x18] sm:$0x7f] %vm2060, %v1873
  %2064 = vst.msk [vmem:[#allocation2 + $0x20] sm:$0xff] %vm2058, %v1875
  %2065 = vst.msk [vmem:[#allocation2 + $0x28] sm:$0x7f] %vm2060, %v1877
  %2066 = vst.msk [vmem:[#allocation2 + $0x30] sm:$0xff] %vm2058, %v1879
  %2067 = vst.msk [vmem:[#allocation2 + $0x38] sm:$0x7f] %vm2060, %v1881
  %2068 = vst.msk [vmem:[#allocation2 + $0x40] sm:$0xff] %vm2058, %v1883
  %2069 = vst.msk [vmem:[#allocation2 + $0x48] sm:$0x7f] %vm2060, %v1885
  %2070 = vst.msk [vmem:[#allocation2 + $0x50] sm:$0xff] %vm2058, %v1887
  %2071 = vst.msk [vmem:[#allocation2 + $0x58] sm:$0x7f] %vm2060, %v1889
  %2072 = vst.msk [vmem:[#allocation2 + $0x60] sm:$0xff] %vm2058, %v1891
  %2073 = vst.msk [vmem:[#allocation2 + $0x68] sm:$0x7f] %vm2060, %v1893
  %2074 = vst.msk [vmem:[#allocation2 + $0x70] sm:$0xff] %vm2058, %v1895
  %2075 = vst.msk [vmem:[#allocation2 + $0x78] sm:$0x7f] %vm2060, %v1897
  %2076 = vst.msk [vmem:[#allocation2 + $0x80] sm:$0xff] %vm2058, %v1899
  %2077 = vst.msk [vmem:[#allocation2 + $0x88] sm:$0x7f] %vm2060, %v1901
  %2078 = vst.msk [vmem:[#allocation2 + $0x90] sm:$0xff] %vm2058, %v1903
  %2079 = vst.msk [vmem:[#allocation2 + $0x98] sm:$0x7f] %vm2060, %v1905
  %2080 = vst.msk [vmem:[#allocation2 + $0xa0] sm:$0xff] %vm2058, %v1907
  %2081 = vst.msk [vmem:[#allocation2 + $0xa8] sm:$0x7f] %vm2060, %v1909
  %2082 = vst.msk [vmem:[#allocation2 + $0xb0] sm:$0xff] %vm2058, %v1911
  %2083 = vst.msk [vmem:[#allocation2 + $0xb8] sm:$0x7f] %vm2060, %v1913
  %2084 = vst.msk [vmem:[#allocation2 + $0xc0] sm:$0xff] %vm2058, %v1915
  %2085 = vst.msk [vmem:[#allocation2 + $0xc8] sm:$0x7f] %vm2060, %v1917
  %2086 = vst.msk [vmem:[#allocation2 + $0xd0] sm:$0xff] %vm2058, %v1919
  %2087 = vst.msk [vmem:[#allocation2 + $0xd8] sm:$0x7f] %vm2060, %v1921
  %2088 = vst.msk [vmem:[#allocation2 + $0xe0] sm:$0xff] %vm2058, %v1923
  %2089 = vst.msk [vmem:[#allocation2 + $0xe8] sm:$0x7f] %vm2060, %v1925
  %2090 = vst.msk [vmem:[#allocation2 + $0xf0] sm:$0xff] %vm2058, %v1927
  %2091 = vst.msk [vmem:[#allocation2 + $0xf8] sm:$0x7f] %vm2060, %v1929
  %2092 = vst.msk [vmem:[#allocation2 + $0x100] sm:$0xff] %vm2058, %v1931
  %2093 = vst.msk [vmem:[#allocation2 + $0x108] sm:$0x7f] %vm2060, %v1933
  %2094 = vst.msk [vmem:[#allocation2 + $0x110] sm:$0xff] %vm2058, %v1935
  %2095 = vst.msk [vmem:[#allocation2 + $0x118] sm:$0x7f] %vm2060, %v1937
  %2096 = vst.msk [vmem:[#allocation2 + $0x120] sm:$0xff] %vm2058, %v1939
  %2097 = vst.msk [vmem:[#allocation2 + $0x128] sm:$0x7f] %vm2060, %v1941
  %2098 = vst.msk [vmem:[#allocation2 + $0x130] sm:$0xff] %vm2058, %v1943
  %2099 = vst.msk [vmem:[#allocation2 + $0x138] sm:$0x7f] %vm2060, %v1945
  %2100 = vst.msk [vmem:[#allocation2 + $0x140] sm:$0xff] %vm2058, %v1947
  %2101 = vst.msk [vmem:[#allocation2 + $0x148] sm:$0x7f] %vm2060, %v1949
  %2102 = vst.msk [vmem:[#allocation2 + $0x150] sm:$0xff] %vm2058, %v1951
  %2103 = vst.msk [vmem:[#allocation2 + $0x158] sm:$0x7f] %vm2060, %v1953
  %2104 = vst.msk [vmem:[#allocation2 + $0x160] sm:$0xff] %vm2058, %v1955
  %2105 = vst.msk [vmem:[#allocation2 + $0x168] sm:$0x7f] %vm2060, %v1957
  %2106 = vst.msk [vmem:[#allocation2 + $0x170] sm:$0xff] %vm2058, %v1959
  %2107 = vst.msk [vmem:[#allocation2 + $0x178] sm:$0x7f] %vm2060, %v1961
  %2108 = vst.msk [vmem:[#allocation2 + $0x180] sm:$0xff] %vm2058, %v1963
  %2109 = vst.msk [vmem:[#allocation2 + $0x188] sm:$0x7f] %vm2060, %v1965
  %2110 = vst.msk [vmem:[#allocation2 + $0x190] sm:$0xff] %vm2058, %v1967
  %2111 = vst.msk [vmem:[#allocation2 + $0x198] sm:$0x7f] %vm2060, %v1969
  %2112 = vst.msk [vmem:[#allocation2 + $0x1a0] sm:$0xff] %vm2058, %v1971
  %2113 = vst.msk [vmem:[#allocation2 + $0x1a8] sm:$0x7f] %vm2060, %v1973
  %2114 = vst.msk [vmem:[#allocation2 + $0x1b0] sm:$0xff] %vm2058, %v1975
  %2115 = vst.msk [vmem:[#allocation2 + $0x1b8] sm:$0x7f] %vm2060, %v1977
  %2116 = vst.msk [vmem:[#allocation2 + $0x1c0] sm:$0xff] %vm2058, %v1979
  %2117 = vst.msk [vmem:[#allocation2 + $0x1c8] sm:$0x7f] %vm2060, %v1981
  %2118 = vst.msk [vmem:[#allocation2 + $0x1d0] sm:$0xff] %vm2058, %v1983
  %2119 = vst.msk [vmem:[#allocation2 + $0x1d8] sm:$0x7f] %vm2060, %v1985
  %2120 = vst.msk [vmem:[#allocation2 + $0x1e0] sm:$0xff] %vm2058, %v1987
  %2121 = vst.msk [vmem:[#allocation2 + $0x1e8] sm:$0x7f] %vm2060, %v1989
  %2122 = vst.msk [vmem:[#allocation2 + $0x1f0] sm:$0xff] %vm2058, %v1991
  %2123 = vst.msk [vmem:[#allocation2 + $0x1f8] sm:$0x7f] %vm2060, %v1993
  %vm2124 = vcmask 188576
  %2125 = vst.msk [vmem:[#allocation2 + $0xf] sm:$0x1] %vm2124, 0.0
  %2126 = vst.msk [vmem:[#allocation2 + $0x1f] sm:$0x1] %vm2124, 0.0
  %2127 = vst.msk [vmem:[#allocation2 + $0x2f] sm:$0x1] %vm2124, 0.0
  %2128 = vst.msk [vmem:[#allocation2 + $0x3f] sm:$0x1] %vm2124, 0.0
  %2129 = vst.msk [vmem:[#allocation2 + $0x4f] sm:$0x1] %vm2124, 0.0
  %2130 = vst.msk [vmem:[#allocation2 + $0x5f] sm:$0x1] %vm2124, 0.0
  %2131 = vst.msk [vmem:[#allocation2 + $0x6f] sm:$0x1] %vm2124, 0.0
  %2132 = vst.msk [vmem:[#allocation2 + $0x7f] sm:$0x1] %vm2124, 0.0
  %2133 = vst.msk [vmem:[#allocation2 + $0x8f] sm:$0x1] %vm2124, 0.0
  %2134 = vst.msk [vmem:[#allocation2 + $0x9f] sm:$0x1] %vm2124, 0.0
  %2135 = vst.msk [vmem:[#allocation2 + $0xaf] sm:$0x1] %vm2124, 0.0
  %2136 = vst.msk [vmem:[#allocation2 + $0xbf] sm:$0x1] %vm2124, 0.0
  %2137 = vst.msk [vmem:[#allocation2 + $0xcf] sm:$0x1] %vm2124, 0.0
  %2138 = vst.msk [vmem:[#allocation2 + $0xdf] sm:$0x1] %vm2124, 0.0
  %2139 = vst.msk [vmem:[#allocation2 + $0xef] sm:$0x1] %vm2124, 0.0
  %2140 = vst.msk [vmem:[#allocation2 + $0xff] sm:$0x1] %vm2124, 0.0
  %2141 = vst.msk [vmem:[#allocation2 + $0x10f] sm:$0x1] %vm2124, 0.0
  %2142 = vst.msk [vmem:[#allocation2 + $0x11f] sm:$0x1] %vm2124, 0.0
  %2143 = vst.msk [vmem:[#allocation2 + $0x12f] sm:$0x1] %vm2124, 0.0
  %2144 = vst.msk [vmem:[#allocation2 + $0x13f] sm:$0x1] %vm2124, 0.0
  %2145 = vst.msk [vmem:[#allocation2 + $0x14f] sm:$0x1] %vm2124, 0.0
  %2146 = vst.msk [vmem:[#allocation2 + $0x15f] sm:$0x1] %vm2124, 0.0
  %2147 = vst.msk [vmem:[#allocation2 + $0x16f] sm:$0x1] %vm2124, 0.0
  %2148 = vst.msk [vmem:[#allocation2 + $0x17f] sm:$0x1] %vm2124, 0.0
  %2149 = vst.msk [vmem:[#allocation2 + $0x18f] sm:$0x1] %vm2124, 0.0
  %2150 = vst.msk [vmem:[#allocation2 + $0x19f] sm:$0x1] %vm2124, 0.0
  %2151 = vst.msk [vmem:[#allocation2 + $0x1af] sm:$0x1] %vm2124, 0.0
  %2152 = vst.msk [vmem:[#allocation2 + $0x1bf] sm:$0x1] %vm2124, 0.0
  %2153 = vst.msk [vmem:[#allocation2 + $0x1cf] sm:$0x1] %vm2124, 0.0
  %2154 = vst.msk [vmem:[#allocation2 + $0x1df] sm:$0x1] %vm2124, 0.0
  %2155 = vst.msk [vmem:[#allocation2 + $0x1ef] sm:$0x1] %vm2124, 0.0
  %2156 = vst.msk [vmem:[#allocation2 + $0x1ff] sm:$0x1] %vm2124, 0.0
  %s2157 = scalar_lea.vmem %s0, 16
  %v2158 = vld [vmem:[%s2157] sm:$0xff]
  %v2159 = vld [vmem:[%s2157 + $0x8] sm:$0x7f]
  %v2160 = vld [vmem:[%s2157 + $0x10] sm:$0xff]
  %v2161 = vld [vmem:[%s2157 + $0x18] sm:$0x7f]
  %v2162 = vld [vmem:[%s2157 + $0x20] sm:$0xff]
  %v2163 = vld [vmem:[%s2157 + $0x28] sm:$0x7f]
  %v2164 = vld [vmem:[%s2157 + $0x30] sm:$0xff]
  %v2165 = vld [vmem:[%s2157 + $0x38] sm:$0x7f]
  %v2166 = vld [vmem:[%s2157 + $0x40] sm:$0xff]
  %v2167 = vld [vmem:[%s2157 + $0x48] sm:$0x7f]
  %v2168 = vld [vmem:[%s2157 + $0x50] sm:$0xff]
  %v2169 = vld [vmem:[%s2157 + $0x58] sm:$0x7f]
  %v2170 = vld [vmem:[%s2157 + $0x60] sm:$0xff]
  %v2171 = vld [vmem:[%s2157 + $0x68] sm:$0x7f]
  %v2172 = vld [vmem:[%s2157 + $0x70] sm:$0xff]
  %v2173 = vld [vmem:[%s2157 + $0x78] sm:$0x7f]
  %v2174 = vld [vmem:[%s2157 + $0x80] sm:$0xff]
  %v2175 = vld [vmem:[%s2157 + $0x88] sm:$0x7f]
  %v2176 = vld [vmem:[%s2157 + $0x90] sm:$0xff]
  %v2177 = vld [vmem:[%s2157 + $0x98] sm:$0x7f]
  %v2178 = vld [vmem:[%s2157 + $0xa0] sm:$0xff]
  %v2179 = vld [vmem:[%s2157 + $0xa8] sm:$0x7f]
  %v2180 = vld [vmem:[%s2157 + $0xb0] sm:$0xff]
  %v2181 = vld [vmem:[%s2157 + $0xb8] sm:$0x7f]
  %v2182 = vld [vmem:[%s2157 + $0xc0] sm:$0xff]
  %v2183 = vld [vmem:[%s2157 + $0xc8] sm:$0x7f]
  %v2184 = vld [vmem:[%s2157 + $0xd0] sm:$0xff]
  %v2185 = vld [vmem:[%s2157 + $0xd8] sm:$0x7f]
  %v2186 = vld [vmem:[%s2157 + $0xe0] sm:$0xff]
  %v2187 = vld [vmem:[%s2157 + $0xe8] sm:$0x7f]
  %v2188 = vld [vmem:[%s2157 + $0x100] sm:$0xff]
  %v2189 = vld [vmem:[%s2157 + $0x108] sm:$0x7f]
  %v2190 = vld [vmem:[%s2157 + $0x110] sm:$0xff]
  %v2191 = vld [vmem:[%s2157 + $0x118] sm:$0x7f]
  %v2192 = vld [vmem:[%s2157 + $0x120] sm:$0xff]
  %v2193 = vld [vmem:[%s2157 + $0x128] sm:$0x7f]
  %v2194 = vld [vmem:[%s2157 + $0x130] sm:$0xff]
  %v2195 = vld [vmem:[%s2157 + $0x138] sm:$0x7f]
  %v2196 = vld [vmem:[%s2157 + $0x140] sm:$0xff]
  %v2197 = vld [vmem:[%s2157 + $0x148] sm:$0x7f]
  %v2198 = vld [vmem:[%s2157 + $0x150] sm:$0xff]
  %v2199 = vld [vmem:[%s2157 + $0x158] sm:$0x7f]
  %v2200 = vld [vmem:[%s2157 + $0x160] sm:$0xff]
  %v2201 = vld [vmem:[%s2157 + $0x168] sm:$0x7f]
  %v2202 = vld [vmem:[%s2157 + $0x170] sm:$0xff]
  %v2203 = vld [vmem:[%s2157 + $0x178] sm:$0x7f]
  %v2204 = vld [vmem:[%s2157 + $0x180] sm:$0xff]
  %v2205 = vld [vmem:[%s2157 + $0x188] sm:$0x7f]
  %v2206 = vld [vmem:[%s2157 + $0x190] sm:$0xff]
  %v2207 = vld [vmem:[%s2157 + $0x198] sm:$0x7f]
  %v2208 = vld [vmem:[%s2157 + $0x1a0] sm:$0xff]
  %v2209 = vld [vmem:[%s2157 + $0x1a8] sm:$0x7f]
  %v2210 = vld [vmem:[%s2157 + $0x1b0] sm:$0xff]
  %v2211 = vld [vmem:[%s2157 + $0x1b8] sm:$0x7f]
  %v2212 = vld [vmem:[%s2157 + $0x1c0] sm:$0xff]
  %v2213 = vld [vmem:[%s2157 + $0x1c8] sm:$0x7f]
  %v2214 = vld [vmem:[%s2157 + $0x1d0] sm:$0xff]
  %v2215 = vld [vmem:[%s2157 + $0x1d8] sm:$0x7f]
  %v2216 = vld [vmem:[%s2157 + $0x1e0] sm:$0xff]
  %v2217 = vld [vmem:[%s2157 + $0x1e8] sm:$0x7f]
  %2278 = vrot.lane.b32.xlu0 %v2158, 24
  %v2279 = vpop.permute.xlu0 %2278
  %2280 = vrot.lane.b32.xlu0 %v2159, 24
  %v2281 = vpop.permute.xlu0 %2280
  %2282 = vrot.lane.b32.xlu0 %v2160, 24
  %v2283 = vpop.permute.xlu0 %2282
  %2284 = vrot.lane.b32.xlu0 %v2161, 24
  %v2285 = vpop.permute.xlu0 %2284
  %2286 = vrot.lane.b32.xlu0 %v2162, 24
  %v2287 = vpop.permute.xlu0 %2286
  %2288 = vrot.lane.b32.xlu0 %v2163, 24
  %v2289 = vpop.permute.xlu0 %2288
  %2290 = vrot.lane.b32.xlu0 %v2164, 24
  %v2291 = vpop.permute.xlu0 %2290
  %2292 = vrot.lane.b32.xlu0 %v2165, 24
  %v2293 = vpop.permute.xlu0 %2292
  %2294 = vrot.lane.b32.xlu0 %v2166, 24
  %v2295 = vpop.permute.xlu0 %2294
  %2296 = vrot.lane.b32.xlu0 %v2167, 24
  %v2297 = vpop.permute.xlu0 %2296
  %2298 = vrot.lane.b32.xlu0 %v2168, 24
  %v2299 = vpop.permute.xlu0 %2298
  %2300 = vrot.lane.b32.xlu0 %v2169, 24
  %v2301 = vpop.permute.xlu0 %2300
  %2302 = vrot.lane.b32.xlu0 %v2170, 24
  %v2303 = vpop.permute.xlu0 %2302
  %2304 = vrot.lane.b32.xlu0 %v2171, 24
  %v2305 = vpop.permute.xlu0 %2304
  %2306 = vrot.lane.b32.xlu0 %v2172, 24
  %v2307 = vpop.permute.xlu0 %2306
  %2308 = vrot.lane.b32.xlu0 %v2173, 24
  %v2309 = vpop.permute.xlu0 %2308
  %2310 = vrot.lane.b32.xlu0 %v2174, 24
  %v2311 = vpop.permute.xlu0 %2310
  %2312 = vrot.lane.b32.xlu0 %v2175, 24
  %v2313 = vpop.permute.xlu0 %2312
  %2314 = vrot.lane.b32.xlu0 %v2176, 24
  %v2315 = vpop.permute.xlu0 %2314
  %2316 = vrot.lane.b32.xlu0 %v2177, 24
  %v2317 = vpop.permute.xlu0 %2316
  %2318 = vrot.lane.b32.xlu0 %v2178, 24
  %v2319 = vpop.permute.xlu0 %2318
  %2320 = vrot.lane.b32.xlu0 %v2179, 24
  %v2321 = vpop.permute.xlu0 %2320
  %2322 = vrot.lane.b32.xlu0 %v2180, 24
  %v2323 = vpop.permute.xlu0 %2322
  %2324 = vrot.lane.b32.xlu0 %v2181, 24
  %v2325 = vpop.permute.xlu0 %2324
  %2326 = vrot.lane.b32.xlu0 %v2182, 24
  %v2327 = vpop.permute.xlu0 %2326
  %2328 = vrot.lane.b32.xlu0 %v2183, 24
  %v2329 = vpop.permute.xlu0 %2328
  %2330 = vrot.lane.b32.xlu0 %v2184, 24
  %v2331 = vpop.permute.xlu0 %2330
  %2332 = vrot.lane.b32.xlu0 %v2185, 24
  %v2333 = vpop.permute.xlu0 %2332
  %2334 = vrot.lane.b32.xlu0 %v2186, 24
  %v2335 = vpop.permute.xlu0 %2334
  %2336 = vrot.lane.b32.xlu0 %v2187, 24
  %v2337 = vpop.permute.xlu0 %2336
  %2338 = vrot.lane.b32.xlu0 %v2188, 24
  %v2339 = vpop.permute.xlu0 %2338
  %2340 = vrot.lane.b32.xlu0 %v2189, 24
  %v2341 = vpop.permute.xlu0 %2340
  %2342 = vrot.lane.b32.xlu0 %v2190, 24
  %v2343 = vpop.permute.xlu0 %2342
  %2344 = vrot.lane.b32.xlu0 %v2191, 24
  %v2345 = vpop.permute.xlu0 %2344
  %2346 = vrot.lane.b32.xlu0 %v2192, 24
  %v2347 = vpop.permute.xlu0 %2346
  %2348 = vrot.lane.b32.xlu0 %v2193, 24
  %v2349 = vpop.permute.xlu0 %2348
  %2350 = vrot.lane.b32.xlu0 %v2194, 24
  %v2351 = vpop.permute.xlu0 %2350
  %2352 = vrot.lane.b32.xlu0 %v2195, 24
  %v2353 = vpop.permute.xlu0 %2352
  %2354 = vrot.lane.b32.xlu0 %v2196, 24
  %v2355 = vpop.permute.xlu0 %2354
  %2356 = vrot.lane.b32.xlu0 %v2197, 24
  %v2357 = vpop.permute.xlu0 %2356
  %2358 = vrot.lane.b32.xlu0 %v2198, 24
  %v2359 = vpop.permute.xlu0 %2358
  %2360 = vrot.lane.b32.xlu0 %v2199, 24
  %v2361 = vpop.permute.xlu0 %2360
  %2362 = vrot.lane.b32.xlu0 %v2200, 24
  %v2363 = vpop.permute.xlu0 %2362
  %2364 = vrot.lane.b32.xlu0 %v2201, 24
  %v2365 = vpop.permute.xlu0 %2364
  %2366 = vrot.lane.b32.xlu0 %v2202, 24
  %v2367 = vpop.permute.xlu0 %2366
  %2368 = vrot.lane.b32.xlu0 %v2203, 24
  %v2369 = vpop.permute.xlu0 %2368
  %2370 = vrot.lane.b32.xlu0 %v2204, 24
  %v2371 = vpop.permute.xlu0 %2370
  %2372 = vrot.lane.b32.xlu0 %v2205, 24
  %v2373 = vpop.permute.xlu0 %2372
  %2374 = vrot.lane.b32.xlu0 %v2206, 24
  %v2375 = vpop.permute.xlu0 %2374
  %2376 = vrot.lane.b32.xlu0 %v2207, 24
  %v2377 = vpop.permute.xlu0 %2376
  %2378 = vrot.lane.b32.xlu0 %v2208, 24
  %v2379 = vpop.permute.xlu0 %2378
  %2380 = vrot.lane.b32.xlu0 %v2209, 24
  %v2381 = vpop.permute.xlu0 %2380
  %2382 = vrot.lane.b32.xlu0 %v2210, 24
  %v2383 = vpop.permute.xlu0 %2382
  %2384 = vrot.lane.b32.xlu0 %v2211, 24
  %v2385 = vpop.permute.xlu0 %2384
  %2386 = vrot.lane.b32.xlu0 %v2212, 24
  %v2387 = vpop.permute.xlu0 %2386
  %2388 = vrot.lane.b32.xlu0 %v2213, 24
  %v2389 = vpop.permute.xlu0 %2388
  %2390 = vrot.lane.b32.xlu0 %v2214, 24
  %v2391 = vpop.permute.xlu0 %2390
  %2392 = vrot.lane.b32.xlu0 %v2215, 24
  %v2393 = vpop.permute.xlu0 %2392
  %2394 = vrot.lane.b32.xlu0 %v2216, 24
  %v2395 = vpop.permute.xlu0 %2394
  %2396 = vrot.lane.b32.xlu0 %v2217, 24
  %v2397 = vpop.permute.xlu0 %2396
  %vm2458 = vcmask 228544
  %2459 = vst.msk [vmem:[#allocation2 + $0x1] sm:$0xff] %vm2458, %v2279
  %vm2460 = vcmask 227520
  %2461 = vst.msk [vmem:[#allocation2 + $0x9] sm:$0x7f] %vm2460, %v2281
  %2462 = vst.msk [vmem:[#allocation2 + $0x11] sm:$0xff] %vm2458, %v2283
  %2463 = vst.msk [vmem:[#allocation2 + $0x19] sm:$0x7f] %vm2460, %v2285
  %2464 = vst.msk [vmem:[#allocation2 + $0x21] sm:$0xff] %vm2458, %v2287
  %2465 = vst.msk [vmem:[#allocation2 + $0x29] sm:$0x7f] %vm2460, %v2289
  %2466 = vst.msk [vmem:[#allocation2 + $0x31] sm:$0xff] %vm2458, %v2291
  %2467 = vst.msk [vmem:[#allocation2 + $0x39] sm:$0x7f] %vm2460, %v2293
  %2468 = vst.msk [vmem:[#allocation2 + $0x41] sm:$0xff] %vm2458, %v2295
  %2469 = vst.msk [vmem:[#allocation2 + $0x49] sm:$0x7f] %vm2460, %v2297
  %2470 = vst.msk [vmem:[#allocation2 + $0x51] sm:$0xff] %vm2458, %v2299
  %2471 = vst.msk [vmem:[#allocation2 + $0x59] sm:$0x7f] %vm2460, %v2301
  %2472 = vst.msk [vmem:[#allocation2 + $0x61] sm:$0xff] %vm2458, %v2303
  %2473 = vst.msk [vmem:[#allocation2 + $0x69] sm:$0x7f] %vm2460, %v2305
  %2474 = vst.msk [vmem:[#allocation2 + $0x71] sm:$0xff] %vm2458, %v2307
  %2475 = vst.msk [vmem:[#allocation2 + $0x79] sm:$0x7f] %vm2460, %v2309
  %2476 = vst.msk [vmem:[#allocation2 + $0x81] sm:$0xff] %vm2458, %v2311
  %2477 = vst.msk [vmem:[#allocation2 + $0x89] sm:$0x7f] %vm2460, %v2313
  %2478 = vst.msk [vmem:[#allocation2 + $0x91] sm:$0xff] %vm2458, %v2315
  %2479 = vst.msk [vmem:[#allocation2 + $0x99] sm:$0x7f] %vm2460, %v2317
  %2480 = vst.msk [vmem:[#allocation2 + $0xa1] sm:$0xff] %vm2458, %v2319
  %2481 = vst.msk [vmem:[#allocation2 + $0xa9] sm:$0x7f] %vm2460, %v2321
  %2482 = vst.msk [vmem:[#allocation2 + $0xb1] sm:$0xff] %vm2458, %v2323
  %2483 = vst.msk [vmem:[#allocation2 + $0xb9] sm:$0x7f] %vm2460, %v2325
  %2484 = vst.msk [vmem:[#allocation2 + $0xc1] sm:$0xff] %vm2458, %v2327
  %2485 = vst.msk [vmem:[#allocation2 + $0xc9] sm:$0x7f] %vm2460, %v2329
  %2486 = vst.msk [vmem:[#allocation2 + $0xd1] sm:$0xff] %vm2458, %v2331
  %2487 = vst.msk [vmem:[#allocation2 + $0xd9] sm:$0x7f] %vm2460, %v2333
  %2488 = vst.msk [vmem:[#allocation2 + $0xe1] sm:$0xff] %vm2458, %v2335
  %2489 = vst.msk [vmem:[#allocation2 + $0xe9] sm:$0x7f] %vm2460, %v2337
  %2490 = vst.msk [vmem:[#allocation2 + $0x101] sm:$0xff] %vm2458, %v2339
  %2491 = vst.msk [vmem:[#allocation2 + $0x109] sm:$0x7f] %vm2460, %v2341
  %2492 = vst.msk [vmem:[#allocation2 + $0x111] sm:$0xff] %vm2458, %v2343
  %2493 = vst.msk [vmem:[#allocation2 + $0x119] sm:$0x7f] %vm2460, %v2345
  %2494 = vst.msk [vmem:[#allocation2 + $0x121] sm:$0xff] %vm2458, %v2347
  %2495 = vst.msk [vmem:[#allocation2 + $0x129] sm:$0x7f] %vm2460, %v2349
  %2496 = vst.msk [vmem:[#allocation2 + $0x131] sm:$0xff] %vm2458, %v2351
  %2497 = vst.msk [vmem:[#allocation2 + $0x139] sm:$0x7f] %vm2460, %v2353
  %2498 = vst.msk [vmem:[#allocation2 + $0x141] sm:$0xff] %vm2458, %v2355
  %2499 = vst.msk [vmem:[#allocation2 + $0x149] sm:$0x7f] %vm2460, %v2357
  %2500 = vst.msk [vmem:[#allocation2 + $0x151] sm:$0xff] %vm2458, %v2359
  %2501 = vst.msk [vmem:[#allocation2 + $0x159] sm:$0x7f] %vm2460, %v2361
  %2502 = vst.msk [vmem:[#allocation2 + $0x161] sm:$0xff] %vm2458, %v2363
  %2503 = vst.msk [vmem:[#allocation2 + $0x169] sm:$0x7f] %vm2460, %v2365
  %2504 = vst.msk [vmem:[#allocation2 + $0x171] sm:$0xff] %vm2458, %v2367
  %2505 = vst.msk [vmem:[#allocation2 + $0x179] sm:$0x7f] %vm2460, %v2369
  %2506 = vst.msk [vmem:[#allocation2 + $0x181] sm:$0xff] %vm2458, %v2371
  %2507 = vst.msk [vmem:[#allocation2 + $0x189] sm:$0x7f] %vm2460, %v2373
  %2508 = vst.msk [vmem:[#allocation2 + $0x191] sm:$0xff] %vm2458, %v2375
  %2509 = vst.msk [vmem:[#allocation2 + $0x199] sm:$0x7f] %vm2460, %v2377
  %2510 = vst.msk [vmem:[#allocation2 + $0x1a1] sm:$0xff] %vm2458, %v2379
  %2511 = vst.msk [vmem:[#allocation2 + $0x1a9] sm:$0x7f] %vm2460, %v2381
  %2512 = vst.msk [vmem:[#allocation2 + $0x1b1] sm:$0xff] %vm2458, %v2383
  %2513 = vst.msk [vmem:[#allocation2 + $0x1b9] sm:$0x7f] %vm2460, %v2385
  %2514 = vst.msk [vmem:[#allocation2 + $0x1c1] sm:$0xff] %vm2458, %v2387
  %2515 = vst.msk [vmem:[#allocation2 + $0x1c9] sm:$0x7f] %vm2460, %v2389
  %2516 = vst.msk [vmem:[#allocation2 + $0x1d1] sm:$0xff] %vm2458, %v2391
  %2517 = vst.msk [vmem:[#allocation2 + $0x1d9] sm:$0x7f] %vm2460, %v2393
  %2518 = vst.msk [vmem:[#allocation2 + $0x1e1] sm:$0xff] %vm2458, %v2395
  %2519 = vst.msk [vmem:[#allocation2 + $0x1e9] sm:$0x7f] %vm2460, %v2397
  %s2520 = scalar_lea.vmem [#allocation2], 240
  %2521 = vst.msk [vmem:[%s2520] sm:$0xff] %vm2458, 0.0
  %2522 = vst.msk [vmem:[%s2520 + $0x8] sm:$0xff] %vm2458, 0.0
  %2523 = vst.msk [vmem:[%s2520 + $0x100] sm:$0xff] %vm2458, 0.0
  %2524 = vst.msk [vmem:[%s2520 + $0x108] sm:$0xff] %vm2458, 0.0
  %vm2525 = vcmask 221376
  %2526 = vst.msk [vmem:[#allocation2] sm:$0x1] %vm2525, 0.0
  %2527 = vst.msk [vmem:[#allocation2 + $0x10] sm:$0x1] %vm2525, 0.0
  %2528 = vst.msk [vmem:[#allocation2 + $0x20] sm:$0x1] %vm2525, 0.0
  %2529 = vst.msk [vmem:[#allocation2 + $0x30] sm:$0x1] %vm2525, 0.0
  %2530 = vst.msk [vmem:[#allocation2 + $0x40] sm:$0x1] %vm2525, 0.0
  %2531 = vst.msk [vmem:[#allocation2 + $0x50] sm:$0x1] %vm2525, 0.0
  %2532 = vst.msk [vmem:[#allocation2 + $0x60] sm:$0x1] %vm2525, 0.0
  %2533 = vst.msk [vmem:[#allocation2 + $0x70] sm:$0x1] %vm2525, 0.0
  %2534 = vst.msk [vmem:[#allocation2 + $0x80] sm:$0x1] %vm2525, 0.0
  %2535 = vst.msk [vmem:[#allocation2 + $0x90] sm:$0x1] %vm2525, 0.0
  %2536 = vst.msk [vmem:[#allocation2 + $0xa0] sm:$0x1] %vm2525, 0.0
  %2537 = vst.msk [vmem:[#allocation2 + $0xb0] sm:$0x1] %vm2525, 0.0
  %2538 = vst.msk [vmem:[#allocation2 + $0xc0] sm:$0x1] %vm2525, 0.0
  %2539 = vst.msk [vmem:[#allocation2 + $0xd0] sm:$0x1] %vm2525, 0.0
  %2540 = vst.msk [vmem:[#allocation2 + $0xe0] sm:$0x1] %vm2525, 0.0
  %2541 = vst.msk [vmem:[#allocation2 + $0x100] sm:$0x1] %vm2525, 0.0
  %2542 = vst.msk [vmem:[#allocation2 + $0x110] sm:$0x1] %vm2525, 0.0
  %2543 = vst.msk [vmem:[#allocation2 + $0x120] sm:$0x1] %vm2525, 0.0
  %2544 = vst.msk [vmem:[#allocation2 + $0x130] sm:$0x1] %vm2525, 0.0
  %2545 = vst.msk [vmem:[#allocation2 + $0x140] sm:$0x1] %vm2525, 0.0
  %2546 = vst.msk [vmem:[#allocation2 + $0x150] sm:$0x1] %vm2525, 0.0
  %2547 = vst.msk [vmem:[#allocation2 + $0x160] sm:$0x1] %vm2525, 0.0
  %2548 = vst.msk [vmem:[#allocation2 + $0x170] sm:$0x1] %vm2525, 0.0
  %2549 = vst.msk [vmem:[#allocation2 + $0x180] sm:$0x1] %vm2525, 0.0
  %2550 = vst.msk [vmem:[#allocation2 + $0x190] sm:$0x1] %vm2525, 0.0
  %2551 = vst.msk [vmem:[#allocation2 + $0x1a0] sm:$0x1] %vm2525, 0.0
  %2552 = vst.msk [vmem:[#allocation2 + $0x1b0] sm:$0x1] %vm2525, 0.0
  %2553 = vst.msk [vmem:[#allocation2 + $0x1c0] sm:$0x1] %vm2525, 0.0
  %2554 = vst.msk [vmem:[#allocation2 + $0x1d0] sm:$0x1] %vm2525, 0.0
  %2555 = vst.msk [vmem:[#allocation2 + $0x1e0] sm:$0x1] %vm2525, 0.0
  %v2556 = vld [vmem:[%s2157] sm:$0xff]
  %v2557 = vld [vmem:[%s2157 + $0x8] sm:$0xff]
  %v2558 = vld [vmem:[%s2157 + $0x10] sm:$0xff]
  %v2559 = vld [vmem:[%s2157 + $0x18] sm:$0xff]
  %v2560 = vld [vmem:[%s2157 + $0x20] sm:$0xff]
  %v2561 = vld [vmem:[%s2157 + $0x28] sm:$0xff]
  %v2562 = vld [vmem:[%s2157 + $0x30] sm:$0xff]
  %v2563 = vld [vmem:[%s2157 + $0x38] sm:$0xff]
  %v2564 = vld [vmem:[%s2157 + $0x40] sm:$0xff]
  %v2565 = vld [vmem:[%s2157 + $0x48] sm:$0xff]
  %v2566 = vld [vmem:[%s2157 + $0x50] sm:$0xff]
  %v2567 = vld [vmem:[%s2157 + $0x58] sm:$0xff]
  %v2568 = vld [vmem:[%s2157 + $0x60] sm:$0xff]
  %v2569 = vld [vmem:[%s2157 + $0x68] sm:$0xff]
  %v2570 = vld [vmem:[%s2157 + $0x70] sm:$0xff]
  %v2571 = vld [vmem:[%s2157 + $0x78] sm:$0xff]
  %v2572 = vld [vmem:[%s2157 + $0x80] sm:$0xff]
  %v2573 = vld [vmem:[%s2157 + $0x88] sm:$0xff]
  %v2574 = vld [vmem:[%s2157 + $0x90] sm:$0xff]
  %v2575 = vld [vmem:[%s2157 + $0x98] sm:$0xff]
  %v2576 = vld [vmem:[%s2157 + $0xa0] sm:$0xff]
  %v2577 = vld [vmem:[%s2157 + $0xa8] sm:$0xff]
  %v2578 = vld [vmem:[%s2157 + $0xb0] sm:$0xff]
  %v2579 = vld [vmem:[%s2157 + $0xb8] sm:$0xff]
  %v2580 = vld [vmem:[%s2157 + $0xc0] sm:$0xff]
  %v2581 = vld [vmem:[%s2157 + $0xc8] sm:$0xff]
  %v2582 = vld [vmem:[%s2157 + $0xd0] sm:$0xff]
  %v2583 = vld [vmem:[%s2157 + $0xd8] sm:$0xff]
  %v2584 = vld [vmem:[%s2157 + $0xe0] sm:$0xff]
  %v2585 = vld [vmem:[%s2157 + $0xe8] sm:$0xff]
  %v2586 = vld [vmem:[%s2157 + $0x100] sm:$0xff]
  %v2587 = vld [vmem:[%s2157 + $0x108] sm:$0xff]
  %v2588 = vld [vmem:[%s2157 + $0x110] sm:$0xff]
  %v2589 = vld [vmem:[%s2157 + $0x118] sm:$0xff]
  %v2590 = vld [vmem:[%s2157 + $0x120] sm:$0xff]
  %v2591 = vld [vmem:[%s2157 + $0x128] sm:$0xff]
  %v2592 = vld [vmem:[%s2157 + $0x130] sm:$0xff]
  %v2593 = vld [vmem:[%s2157 + $0x138] sm:$0xff]
  %v2594 = vld [vmem:[%s2157 + $0x140] sm:$0xff]
  %v2595 = vld [vmem:[%s2157 + $0x148] sm:$0xff]
  %v2596 = vld [vmem:[%s2157 + $0x150] sm:$0xff]
  %v2597 = vld [vmem:[%s2157 + $0x158] sm:$0xff]
  %v2598 = vld [vmem:[%s2157 + $0x160] sm:$0xff]
  %v2599 = vld [vmem:[%s2157 + $0x168] sm:$0xff]
  %v2600 = vld [vmem:[%s2157 + $0x170] sm:$0xff]
  %v2601 = vld [vmem:[%s2157 + $0x178] sm:$0xff]
  %v2602 = vld [vmem:[%s2157 + $0x180] sm:$0xff]
  %v2603 = vld [vmem:[%s2157 + $0x188] sm:$0xff]
  %v2604 = vld [vmem:[%s2157 + $0x190] sm:$0xff]
  %v2605 = vld [vmem:[%s2157 + $0x198] sm:$0xff]
  %v2606 = vld [vmem:[%s2157 + $0x1a0] sm:$0xff]
  %v2607 = vld [vmem:[%s2157 + $0x1a8] sm:$0xff]
  %v2608 = vld [vmem:[%s2157 + $0x1b0] sm:$0xff]
  %v2609 = vld [vmem:[%s2157 + $0x1b8] sm:$0xff]
  %v2610 = vld [vmem:[%s2157 + $0x1c0] sm:$0xff]
  %v2611 = vld [vmem:[%s2157 + $0x1c8] sm:$0xff]
  %v2612 = vld [vmem:[%s2157 + $0x1d0] sm:$0xff]
  %v2613 = vld [vmem:[%s2157 + $0x1d8] sm:$0xff]
  %v2614 = vld [vmem:[%s2157 + $0x1e0] sm:$0xff]
  %v2615 = vld [vmem:[%s2157 + $0x1e8] sm:$0xff]
  %2676 = vrot.lane.b32.xlu0 %v2556, 28
  %v2677 = vpop.permute.xlu0 %2676
  %2678 = vrot.lane.b32.xlu0 %v2557, 28
  %v2679 = vpop.permute.xlu0 %2678
  %2680 = vrot.lane.b32.xlu0 %v2558, 28
  %v2681 = vpop.permute.xlu0 %2680
  %2682 = vrot.lane.b32.xlu0 %v2559, 28
  %v2683 = vpop.permute.xlu0 %2682
  %2684 = vrot.lane.b32.xlu0 %v2560, 28
  %v2685 = vpop.permute.xlu0 %2684
  %2686 = vrot.lane.b32.xlu0 %v2561, 28
  %v2687 = vpop.permute.xlu0 %2686
  %2688 = vrot.lane.b32.xlu0 %v2562, 28
  %v2689 = vpop.permute.xlu0 %2688
  %2690 = vrot.lane.b32.xlu0 %v2563, 28
  %v2691 = vpop.permute.xlu0 %2690
  %2692 = vrot.lane.b32.xlu0 %v2564, 28
  %v2693 = vpop.permute.xlu0 %2692
  %2694 = vrot.lane.b32.xlu0 %v2565, 28
  %v2695 = vpop.permute.xlu0 %2694
  %2696 = vrot.lane.b32.xlu0 %v2566, 28
  %v2697 = vpop.permute.xlu0 %2696
  %2698 = vrot.lane.b32.xlu0 %v2567, 28
  %v2699 = vpop.permute.xlu0 %2698
  %2700 = vrot.lane.b32.xlu0 %v2568, 28
  %v2701 = vpop.permute.xlu0 %2700
  %2702 = vrot.lane.b32.xlu0 %v2569, 28
  %v2703 = vpop.permute.xlu0 %2702
  %2704 = vrot.lane.b32.xlu0 %v2570, 28
  %v2705 = vpop.permute.xlu0 %2704
  %2706 = vrot.lane.b32.xlu0 %v2571, 28
  %v2707 = vpop.permute.xlu0 %2706
  %2708 = vrot.lane.b32.xlu0 %v2572, 28
  %v2709 = vpop.permute.xlu0 %2708
  %2710 = vrot.lane.b32.xlu0 %v2573, 28
  %v2711 = vpop.permute.xlu0 %2710
  %2712 = vrot.lane.b32.xlu0 %v2574, 28
  %v2713 = vpop.permute.xlu0 %2712
  %2714 = vrot.lane.b32.xlu0 %v2575, 28
  %v2715 = vpop.permute.xlu0 %2714
  %2716 = vrot.lane.b32.xlu0 %v2576, 28
  %v2717 = vpop.permute.xlu0 %2716
  %2718 = vrot.lane.b32.xlu0 %v2577, 28
  %v2719 = vpop.permute.xlu0 %2718
  %2720 = vrot.lane.b32.xlu0 %v2578, 28
  %v2721 = vpop.permute.xlu0 %2720
  %2722 = vrot.lane.b32.xlu0 %v2579, 28
  %v2723 = vpop.permute.xlu0 %2722
  %2724 = vrot.lane.b32.xlu0 %v2580, 28
  %v2725 = vpop.permute.xlu0 %2724
  %2726 = vrot.lane.b32.xlu0 %v2581, 28
  %v2727 = vpop.permute.xlu0 %2726
  %2728 = vrot.lane.b32.xlu0 %v2582, 28
  %v2729 = vpop.permute.xlu0 %2728
  %2730 = vrot.lane.b32.xlu0 %v2583, 28
  %v2731 = vpop.permute.xlu0 %2730
  %2732 = vrot.lane.b32.xlu0 %v2584, 28
  %v2733 = vpop.permute.xlu0 %2732
  %2734 = vrot.lane.b32.xlu0 %v2585, 28
  %v2735 = vpop.permute.xlu0 %2734
  %2736 = vrot.lane.b32.xlu0 %v2586, 28
  %v2737 = vpop.permute.xlu0 %2736
  %2738 = vrot.lane.b32.xlu0 %v2587, 28
  %v2739 = vpop.permute.xlu0 %2738
  %2740 = vrot.lane.b32.xlu0 %v2588, 28
  %v2741 = vpop.permute.xlu0 %2740
  %2742 = vrot.lane.b32.xlu0 %v2589, 28
  %v2743 = vpop.permute.xlu0 %2742
  %2744 = vrot.lane.b32.xlu0 %v2590, 28
  %v2745 = vpop.permute.xlu0 %2744
  %2746 = vrot.lane.b32.xlu0 %v2591, 28
  %v2747 = vpop.permute.xlu0 %2746
  %2748 = vrot.lane.b32.xlu0 %v2592, 28
  %v2749 = vpop.permute.xlu0 %2748
  %2750 = vrot.lane.b32.xlu0 %v2593, 28
  %v2751 = vpop.permute.xlu0 %2750
  %2752 = vrot.lane.b32.xlu0 %v2594, 28
  %v2753 = vpop.permute.xlu0 %2752
  %2754 = vrot.lane.b32.xlu0 %v2595, 28
  %v2755 = vpop.permute.xlu0 %2754
  %2756 = vrot.lane.b32.xlu0 %v2596, 28
  %v2757 = vpop.permute.xlu0 %2756
  %2758 = vrot.lane.b32.xlu0 %v2597, 28
  %v2759 = vpop.permute.xlu0 %2758
  %2760 = vrot.lane.b32.xlu0 %v2598, 28
  %v2761 = vpop.permute.xlu0 %2760
  %2762 = vrot.lane.b32.xlu0 %v2599, 28
  %v2763 = vpop.permute.xlu0 %2762
  %2764 = vrot.lane.b32.xlu0 %v2600, 28
  %v2765 = vpop.permute.xlu0 %2764
  %2766 = vrot.lane.b32.xlu0 %v2601, 28
  %v2767 = vpop.permute.xlu0 %2766
  %2768 = vrot.lane.b32.xlu0 %v2602, 28
  %v2769 = vpop.permute.xlu0 %2768
  %2770 = vrot.lane.b32.xlu0 %v2603, 28
  %v2771 = vpop.permute.xlu0 %2770
  %2772 = vrot.lane.b32.xlu0 %v2604, 28
  %v2773 = vpop.permute.xlu0 %2772
  %2774 = vrot.lane.b32.xlu0 %v2605, 28
  %v2775 = vpop.permute.xlu0 %2774
  %2776 = vrot.lane.b32.xlu0 %v2606, 28
  %v2777 = vpop.permute.xlu0 %2776
  %2778 = vrot.lane.b32.xlu0 %v2607, 28
  %v2779 = vpop.permute.xlu0 %2778
  %2780 = vrot.lane.b32.xlu0 %v2608, 28
  %v2781 = vpop.permute.xlu0 %2780
  %2782 = vrot.lane.b32.xlu0 %v2609, 28
  %v2783 = vpop.permute.xlu0 %2782
  %2784 = vrot.lane.b32.xlu0 %v2610, 28
  %v2785 = vpop.permute.xlu0 %2784
  %2786 = vrot.lane.b32.xlu0 %v2611, 28
  %v2787 = vpop.permute.xlu0 %2786
  %2788 = vrot.lane.b32.xlu0 %v2612, 28
  %v2789 = vpop.permute.xlu0 %2788
  %2790 = vrot.lane.b32.xlu0 %v2613, 28
  %v2791 = vpop.permute.xlu0 %2790
  %2792 = vrot.lane.b32.xlu0 %v2614, 28
  %v2793 = vpop.permute.xlu0 %2792
  %2794 = vrot.lane.b32.xlu0 %v2615, 28
  %v2795 = vpop.permute.xlu0 %2794
  %vm2856 = vcmask 261344
  %2857 = vst.msk [vmem:[#allocation2] sm:$0xff] %vm2856, %v2677
  %2858 = vst.msk [vmem:[#allocation2 + $0x8] sm:$0xff] %vm2856, %v2679
  %2859 = vst.msk [vmem:[#allocation2 + $0x10] sm:$0xff] %vm2856, %v2681
  %2860 = vst.msk [vmem:[#allocation2 + $0x18] sm:$0xff] %vm2856, %v2683
  %2861 = vst.msk [vmem:[#allocation2 + $0x20] sm:$0xff] %vm2856, %v2685
  %2862 = vst.msk [vmem:[#allocation2 + $0x28] sm:$0xff] %vm2856, %v2687
  %2863 = vst.msk [vmem:[#allocation2 + $0x30] sm:$0xff] %vm2856, %v2689
  %2864 = vst.msk [vmem:[#allocation2 + $0x38] sm:$0xff] %vm2856, %v2691
  %2865 = vst.msk [vmem:[#allocation2 + $0x40] sm:$0xff] %vm2856, %v2693
  %2866 = vst.msk [vmem:[#allocation2 + $0x48] sm:$0xff] %vm2856, %v2695
  %2867 = vst.msk [vmem:[#allocation2 + $0x50] sm:$0xff] %vm2856, %v2697
  %2868 = vst.msk [vmem:[#allocation2 + $0x58] sm:$0xff] %vm2856, %v2699
  %2869 = vst.msk [vmem:[#allocation2 + $0x60] sm:$0xff] %vm2856, %v2701
  %2870 = vst.msk [vmem:[#allocation2 + $0x68] sm:$0xff] %vm2856, %v2703
  %2871 = vst.msk [vmem:[#allocation2 + $0x70] sm:$0xff] %vm2856, %v2705
  %2872 = vst.msk [vmem:[#allocation2 + $0x78] sm:$0xff] %vm2856, %v2707
  %2873 = vst.msk [vmem:[#allocation2 + $0x80] sm:$0xff] %vm2856, %v2709
  %2874 = vst.msk [vmem:[#allocation2 + $0x88] sm:$0xff] %vm2856, %v2711
  %2875 = vst.msk [vmem:[#allocation2 + $0x90] sm:$0xff] %vm2856, %v2713
  %2876 = vst.msk [vmem:[#allocation2 + $0x98] sm:$0xff] %vm2856, %v2715
  %2877 = vst.msk [vmem:[#allocation2 + $0xa0] sm:$0xff] %vm2856, %v2717
  %2878 = vst.msk [vmem:[#allocation2 + $0xa8] sm:$0xff] %vm2856, %v2719
  %2879 = vst.msk [vmem:[#allocation2 + $0xb0] sm:$0xff] %vm2856, %v2721
  %2880 = vst.msk [vmem:[#allocation2 + $0xb8] sm:$0xff] %vm2856, %v2723
  %2881 = vst.msk [vmem:[#allocation2 + $0xc0] sm:$0xff] %vm2856, %v2725
  %2882 = vst.msk [vmem:[#allocation2 + $0xc8] sm:$0xff] %vm2856, %v2727
  %2883 = vst.msk [vmem:[#allocation2 + $0xd0] sm:$0xff] %vm2856, %v2729
  %2884 = vst.msk [vmem:[#allocation2 + $0xd8] sm:$0xff] %vm2856, %v2731
  %2885 = vst.msk [vmem:[#allocation2 + $0xe0] sm:$0xff] %vm2856, %v2733
  %2886 = vst.msk [vmem:[#allocation2 + $0xe8] sm:$0xff] %vm2856, %v2735
  %2887 = vst.msk [vmem:[#allocation2 + $0x100] sm:$0xff] %vm2856, %v2737
  %2888 = vst.msk [vmem:[#allocation2 + $0x108] sm:$0xff] %vm2856, %v2739
  %2889 = vst.msk [vmem:[#allocation2 + $0x110] sm:$0xff] %vm2856, %v2741
  %2890 = vst.msk [vmem:[#allocation2 + $0x118] sm:$0xff] %vm2856, %v2743
  %2891 = vst.msk [vmem:[#allocation2 + $0x120] sm:$0xff] %vm2856, %v2745
  %2892 = vst.msk [vmem:[#allocation2 + $0x128] sm:$0xff] %vm2856, %v2747
  %2893 = vst.msk [vmem:[#allocation2 + $0x130] sm:$0xff] %vm2856, %v2749
  %2894 = vst.msk [vmem:[#allocation2 + $0x138] sm:$0xff] %vm2856, %v2751
  %2895 = vst.msk [vmem:[#allocation2 + $0x140] sm:$0xff] %vm2856, %v2753
  %2896 = vst.msk [vmem:[#allocation2 + $0x148] sm:$0xff] %vm2856, %v2755
  %2897 = vst.msk [vmem:[#allocation2 + $0x150] sm:$0xff] %vm2856, %v2757
  %2898 = vst.msk [vmem:[#allocation2 + $0x158] sm:$0xff] %vm2856, %v2759
  %2899 = vst.msk [vmem:[#allocation2 + $0x160] sm:$0xff] %vm2856, %v2761
  %2900 = vst.msk [vmem:[#allocation2 + $0x168] sm:$0xff] %vm2856, %v2763
  %2901 = vst.msk [vmem:[#allocation2 + $0x170] sm:$0xff] %vm2856, %v2765
  %2902 = vst.msk [vmem:[#allocation2 + $0x178] sm:$0xff] %vm2856, %v2767
  %2903 = vst.msk [vmem:[#allocation2 + $0x180] sm:$0xff] %vm2856, %v2769
  %2904 = vst.msk [vmem:[#allocation2 + $0x188] sm:$0xff] %vm2856, %v2771
  %2905 = vst.msk [vmem:[#allocation2 + $0x190] sm:$0xff] %vm2856, %v2773
  %2906 = vst.msk [vmem:[#allocation2 + $0x198] sm:$0xff] %vm2856, %v2775
  %2907 = vst.msk [vmem:[#allocation2 + $0x1a0] sm:$0xff] %vm2856, %v2777
  %2908 = vst.msk [vmem:[#allocation2 + $0x1a8] sm:$0xff] %vm2856, %v2779
  %2909 = vst.msk [vmem:[#allocation2 + $0x1b0] sm:$0xff] %vm2856, %v2781
  %2910 = vst.msk [vmem:[#allocation2 + $0x1b8] sm:$0xff] %vm2856, %v2783
  %2911 = vst.msk [vmem:[#allocation2 + $0x1c0] sm:$0xff] %vm2856, %v2785
  %2912 = vst.msk [vmem:[#allocation2 + $0x1c8] sm:$0xff] %vm2856, %v2787
  %2913 = vst.msk [vmem:[#allocation2 + $0x1d0] sm:$0xff] %vm2856, %v2789
  %2914 = vst.msk [vmem:[#allocation2 + $0x1d8] sm:$0xff] %vm2856, %v2791
  %2915 = vst.msk [vmem:[#allocation2 + $0x1e0] sm:$0xff] %vm2856, %v2793
  %2916 = vst.msk [vmem:[#allocation2 + $0x1e8] sm:$0xff] %vm2856, %v2795
  %2917 = vst.msk [vmem:[%s2520] sm:$0xff] %vm2856, 0.0
  %2918 = vst.msk [vmem:[%s2520 + $0x8] sm:$0xff] %vm2856, 0.0
  %2919 = vst.msk [vmem:[%s2520 + $0x100] sm:$0xff] %vm2856, 0.0
  %2920 = vst.msk [vmem:[%s2520 + $0x108] sm:$0xff] %vm2856, 0.0
  %v2921 = vld [vmem:[%s2157 + $0x1] sm:$0xff]
  %v2922 = vld [vmem:[%s2157 + $0x9] sm:$0x7f]
  %v2923 = vld [vmem:[%s2157 + $0x11] sm:$0xff]
  %v2924 = vld [vmem:[%s2157 + $0x19] sm:$0x7f]
  %v2925 = vld [vmem:[%s2157 + $0x21] sm:$0xff]
  %v2926 = vld [vmem:[%s2157 + $0x29] sm:$0x7f]
  %v2927 = vld [vmem:[%s2157 + $0x31] sm:$0xff]
  %v2928 = vld [vmem:[%s2157 + $0x39] sm:$0x7f]
  %v2929 = vld [vmem:[%s2157 + $0x41] sm:$0xff]
  %v2930 = vld [vmem:[%s2157 + $0x49] sm:$0x7f]
  %v2931 = vld [vmem:[%s2157 + $0x51] sm:$0xff]
  %v2932 = vld [vmem:[%s2157 + $0x59] sm:$0x7f]
  %v2933 = vld [vmem:[%s2157 + $0x61] sm:$0xff]
  %v2934 = vld [vmem:[%s2157 + $0x69] sm:$0x7f]
  %v2935 = vld [vmem:[%s2157 + $0x71] sm:$0xff]
  %v2936 = vld [vmem:[%s2157 + $0x79] sm:$0x7f]
  %v2937 = vld [vmem:[%s2157 + $0x81] sm:$0xff]
  %v2938 = vld [vmem:[%s2157 + $0x89] sm:$0x7f]
  %v2939 = vld [vmem:[%s2157 + $0x91] sm:$0xff]
  %v2940 = vld [vmem:[%s2157 + $0x99] sm:$0x7f]
  %v2941 = vld [vmem:[%s2157 + $0xa1] sm:$0xff]
  %v2942 = vld [vmem:[%s2157 + $0xa9] sm:$0x7f]
  %v2943 = vld [vmem:[%s2157 + $0xb1] sm:$0xff]
  %v2944 = vld [vmem:[%s2157 + $0xb9] sm:$0x7f]
  %v2945 = vld [vmem:[%s2157 + $0xc1] sm:$0xff]
  %v2946 = vld [vmem:[%s2157 + $0xc9] sm:$0x7f]
  %v2947 = vld [vmem:[%s2157 + $0xd1] sm:$0xff]
  %v2948 = vld [vmem:[%s2157 + $0xd9] sm:$0x7f]
  %v2949 = vld [vmem:[%s2157 + $0xe1] sm:$0xff]
  %v2950 = vld [vmem:[%s2157 + $0xe9] sm:$0x7f]
  %v2951 = vld [vmem:[%s2157 + $0x101] sm:$0xff]
  %v2952 = vld [vmem:[%s2157 + $0x109] sm:$0x7f]
  %v2953 = vld [vmem:[%s2157 + $0x111] sm:$0xff]
  %v2954 = vld [vmem:[%s2157 + $0x119] sm:$0x7f]
  %v2955 = vld [vmem:[%s2157 + $0x121] sm:$0xff]
  %v2956 = vld [vmem:[%s2157 + $0x129] sm:$0x7f]
  %v2957 = vld [vmem:[%s2157 + $0x131] sm:$0xff]
  %v2958 = vld [vmem:[%s2157 + $0x139] sm:$0x7f]
  %v2959 = vld [vmem:[%s2157 + $0x141] sm:$0xff]
  %v2960 = vld [vmem:[%s2157 + $0x149] sm:$0x7f]
  %v2961 = vld [vmem:[%s2157 + $0x151] sm:$0xff]
  %v2962 = vld [vmem:[%s2157 + $0x159] sm:$0x7f]
  %v2963 = vld [vmem:[%s2157 + $0x161] sm:$0xff]
  %v2964 = vld [vmem:[%s2157 + $0x169] sm:$0x7f]
  %v2965 = vld [vmem:[%s2157 + $0x171] sm:$0xff]
  %v2966 = vld [vmem:[%s2157 + $0x179] sm:$0x7f]
  %v2967 = vld [vmem:[%s2157 + $0x181] sm:$0xff]
  %v2968 = vld [vmem:[%s2157 + $0x189] sm:$0x7f]
  %v2969 = vld [vmem:[%s2157 + $0x191] sm:$0xff]
  %v2970 = vld [vmem:[%s2157 + $0x199] sm:$0x7f]
  %v2971 = vld [vmem:[%s2157 + $0x1a1] sm:$0xff]
  %v2972 = vld [vmem:[%s2157 + $0x1a9] sm:$0x7f]
  %v2973 = vld [vmem:[%s2157 + $0x1b1] sm:$0xff]
  %v2974 = vld [vmem:[%s2157 + $0x1b9] sm:$0x7f]
  %v2975 = vld [vmem:[%s2157 + $0x1c1] sm:$0xff]
  %v2976 = vld [vmem:[%s2157 + $0x1c9] sm:$0x7f]
  %v2977 = vld [vmem:[%s2157 + $0x1d1] sm:$0xff]
  %v2978 = vld [vmem:[%s2157 + $0x1d9] sm:$0x7f]
  %v2979 = vld [vmem:[%s2157 + $0x1e1] sm:$0xff]
  %v2980 = vld [vmem:[%s2157 + $0x1e9] sm:$0x7f]
  %3041 = vrot.lane.b32.xlu0 %v2921, 32
  %v3042 = vpop.permute.xlu0 %3041
  %3043 = vrot.lane.b32.xlu0 %v2922, 32
  %v3044 = vpop.permute.xlu0 %3043
  %3045 = vrot.lane.b32.xlu0 %v2923, 32
  %v3046 = vpop.permute.xlu0 %3045
  %3047 = vrot.lane.b32.xlu0 %v2924, 32
  %v3048 = vpop.permute.xlu0 %3047
  %3049 = vrot.lane.b32.xlu0 %v2925, 32
  %v3050 = vpop.permute.xlu0 %3049
  %3051 = vrot.lane.b32.xlu0 %v2926, 32
  %v3052 = vpop.permute.xlu0 %3051
  %3053 = vrot.lane.b32.xlu0 %v2927, 32
  %v3054 = vpop.permute.xlu0 %3053
  %3055 = vrot.lane.b32.xlu0 %v2928, 32
  %v3056 = vpop.permute.xlu0 %3055
  %3057 = vrot.lane.b32.xlu0 %v2929, 32
  %v3058 = vpop.permute.xlu0 %3057
  %3059 = vrot.lane.b32.xlu0 %v2930, 32
  %v3060 = vpop.permute.xlu0 %3059
  %3061 = vrot.lane.b32.xlu0 %v2931, 32
  %v3062 = vpop.permute.xlu0 %3061
  %3063 = vrot.lane.b32.xlu0 %v2932, 32
  %v3064 = vpop.permute.xlu0 %3063
  %3065 = vrot.lane.b32.xlu0 %v2933, 32
  %v3066 = vpop.permute.xlu0 %3065
  %3067 = vrot.lane.b32.xlu0 %v2934, 32
  %v3068 = vpop.permute.xlu0 %3067
  %3069 = vrot.lane.b32.xlu0 %v2935, 32
  %v3070 = vpop.permute.xlu0 %3069
  %3071 = vrot.lane.b32.xlu0 %v2936, 32
  %v3072 = vpop.permute.xlu0 %3071
  %3073 = vrot.lane.b32.xlu0 %v2937, 32
  %v3074 = vpop.permute.xlu0 %3073
  %3075 = vrot.lane.b32.xlu0 %v2938, 32
  %v3076 = vpop.permute.xlu0 %3075
  %3077 = vrot.lane.b32.xlu0 %v2939, 32
  %v3078 = vpop.permute.xlu0 %3077
  %3079 = vrot.lane.b32.xlu0 %v2940, 32
  %v3080 = vpop.permute.xlu0 %3079
  %3081 = vrot.lane.b32.xlu0 %v2941, 32
  %v3082 = vpop.permute.xlu0 %3081
  %3083 = vrot.lane.b32.xlu0 %v2942, 32
  %v3084 = vpop.permute.xlu0 %3083
  %3085 = vrot.lane.b32.xlu0 %v2943, 32
  %v3086 = vpop.permute.xlu0 %3085
  %3087 = vrot.lane.b32.xlu0 %v2944, 32
  %v3088 = vpop.permute.xlu0 %3087
  %3089 = vrot.lane.b32.xlu0 %v2945, 32
  %v3090 = vpop.permute.xlu0 %3089
  %3091 = vrot.lane.b32.xlu0 %v2946, 32
  %v3092 = vpop.permute.xlu0 %3091
  %3093 = vrot.lane.b32.xlu0 %v2947, 32
  %v3094 = vpop.permute.xlu0 %3093
  %3095 = vrot.lane.b32.xlu0 %v2948, 32
  %v3096 = vpop.permute.xlu0 %3095
  %3097 = vrot.lane.b32.xlu0 %v2949, 32
  %v3098 = vpop.permute.xlu0 %3097
  %3099 = vrot.lane.b32.xlu0 %v2950, 32
  %v3100 = vpop.permute.xlu0 %3099
  %3101 = vrot.lane.b32.xlu0 %v2951, 32
  %v3102 = vpop.permute.xlu0 %3101
  %3103 = vrot.lane.b32.xlu0 %v2952, 32
  %v3104 = vpop.permute.xlu0 %3103
  %3105 = vrot.lane.b32.xlu0 %v2953, 32
  %v3106 = vpop.permute.xlu0 %3105
  %3107 = vrot.lane.b32.xlu0 %v2954, 32
  %v3108 = vpop.permute.xlu0 %3107
  %3109 = vrot.lane.b32.xlu0 %v2955, 32
  %v3110 = vpop.permute.xlu0 %3109
  %3111 = vrot.lane.b32.xlu0 %v2956, 32
  %v3112 = vpop.permute.xlu0 %3111
  %3113 = vrot.lane.b32.xlu0 %v2957, 32
  %v3114 = vpop.permute.xlu0 %3113
  %3115 = vrot.lane.b32.xlu0 %v2958, 32
  %v3116 = vpop.permute.xlu0 %3115
  %3117 = vrot.lane.b32.xlu0 %v2959, 32
  %v3118 = vpop.permute.xlu0 %3117
  %3119 = vrot.lane.b32.xlu0 %v2960, 32
  %v3120 = vpop.permute.xlu0 %3119
  %3121 = vrot.lane.b32.xlu0 %v2961, 32
  %v3122 = vpop.permute.xlu0 %3121
  %3123 = vrot.lane.b32.xlu0 %v2962, 32
  %v3124 = vpop.permute.xlu0 %3123
  %3125 = vrot.lane.b32.xlu0 %v2963, 32
  %v3126 = vpop.permute.xlu0 %3125
  %3127 = vrot.lane.b32.xlu0 %v2964, 32
  %v3128 = vpop.permute.xlu0 %3127
  %3129 = vrot.lane.b32.xlu0 %v2965, 32
  %v3130 = vpop.permute.xlu0 %3129
  %3131 = vrot.lane.b32.xlu0 %v2966, 32
  %v3132 = vpop.permute.xlu0 %3131
  %3133 = vrot.lane.b32.xlu0 %v2967, 32
  %v3134 = vpop.permute.xlu0 %3133
  %3135 = vrot.lane.b32.xlu0 %v2968, 32
  %v3136 = vpop.permute.xlu0 %3135
  %3137 = vrot.lane.b32.xlu0 %v2969, 32
  %v3138 = vpop.permute.xlu0 %3137
  %3139 = vrot.lane.b32.xlu0 %v2970, 32
  %v3140 = vpop.permute.xlu0 %3139
  %3141 = vrot.lane.b32.xlu0 %v2971, 32
  %v3142 = vpop.permute.xlu0 %3141
  %3143 = vrot.lane.b32.xlu0 %v2972, 32
  %v3144 = vpop.permute.xlu0 %3143
  %3145 = vrot.lane.b32.xlu0 %v2973, 32
  %v3146 = vpop.permute.xlu0 %3145
  %3147 = vrot.lane.b32.xlu0 %v2974, 32
  %v3148 = vpop.permute.xlu0 %3147
  %3149 = vrot.lane.b32.xlu0 %v2975, 32
  %v3150 = vpop.permute.xlu0 %3149
  %3151 = vrot.lane.b32.xlu0 %v2976, 32
  %v3152 = vpop.permute.xlu0 %3151
  %3153 = vrot.lane.b32.xlu0 %v2977, 32
  %v3154 = vpop.permute.xlu0 %3153
  %3155 = vrot.lane.b32.xlu0 %v2978, 32
  %v3156 = vpop.permute.xlu0 %3155
  %3157 = vrot.lane.b32.xlu0 %v2979, 32
  %v3158 = vpop.permute.xlu0 %3157
  %3159 = vrot.lane.b32.xlu0 %v2980, 32
  %v3160 = vpop.permute.xlu0 %3159
  %vm3221 = vcmask 294144
  %3222 = vst.msk [vmem:[#allocation2] sm:$0xff] %vm3221, %v3042
  %vm3223 = vcmask 293120
  %3224 = vst.msk [vmem:[#allocation2 + $0x8] sm:$0x7f] %vm3223, %v3044
  %3225 = vst.msk [vmem:[#allocation2 + $0x10] sm:$0xff] %vm3221, %v3046
  %3226 = vst.msk [vmem:[#allocation2 + $0x18] sm:$0x7f] %vm3223, %v3048
  %3227 = vst.msk [vmem:[#allocation2 + $0x20] sm:$0xff] %vm3221, %v3050
  %3228 = vst.msk [vmem:[#allocation2 + $0x28] sm:$0x7f] %vm3223, %v3052
  %3229 = vst.msk [vmem:[#allocation2 + $0x30] sm:$0xff] %vm3221, %v3054
  %3230 = vst.msk [vmem:[#allocation2 + $0x38] sm:$0x7f] %vm3223, %v3056
  %3231 = vst.msk [vmem:[#allocation2 + $0x40] sm:$0xff] %vm3221, %v3058
  %3232 = vst.msk [vmem:[#allocation2 + $0x48] sm:$0x7f] %vm3223, %v3060
  %3233 = vst.msk [vmem:[#allocation2 + $0x50] sm:$0xff] %vm3221, %v3062
  %3234 = vst.msk [vmem:[#allocation2 + $0x58] sm:$0x7f] %vm3223, %v3064
  %3235 = vst.msk [vmem:[#allocation2 + $0x60] sm:$0xff] %vm3221, %v3066
  %3236 = vst.msk [vmem:[#allocation2 + $0x68] sm:$0x7f] %vm3223, %v3068
  %3237 = vst.msk [vmem:[#allocation2 + $0x70] sm:$0xff] %vm3221, %v3070
  %3238 = vst.msk [vmem:[#allocation2 + $0x78] sm:$0x7f] %vm3223, %v3072
  %3239 = vst.msk [vmem:[#allocation2 + $0x80] sm:$0xff] %vm3221, %v3074
  %3240 = vst.msk [vmem:[#allocation2 + $0x88] sm:$0x7f] %vm3223, %v3076
  %3241 = vst.msk [vmem:[#allocation2 + $0x90] sm:$0xff] %vm3221, %v3078
  %3242 = vst.msk [vmem:[#allocation2 + $0x98] sm:$0x7f] %vm3223, %v3080
  %3243 = vst.msk [vmem:[#allocation2 + $0xa0] sm:$0xff] %vm3221, %v3082
  %3244 = vst.msk [vmem:[#allocation2 + $0xa8] sm:$0x7f] %vm3223, %v3084
  %3245 = vst.msk [vmem:[#allocation2 + $0xb0] sm:$0xff] %vm3221, %v3086
  %3246 = vst.msk [vmem:[#allocation2 + $0xb8] sm:$0x7f] %vm3223, %v3088
  %3247 = vst.msk [vmem:[#allocation2 + $0xc0] sm:$0xff] %vm3221, %v3090
  %3248 = vst.msk [vmem:[#allocation2 + $0xc8] sm:$0x7f] %vm3223, %v3092
  %3249 = vst.msk [vmem:[#allocation2 + $0xd0] sm:$0xff] %vm3221, %v3094
  %3250 = vst.msk [vmem:[#allocation2 + $0xd8] sm:$0x7f] %vm3223, %v3096
  %3251 = vst.msk [vmem:[#allocation2 + $0xe0] sm:$0xff] %vm3221, %v3098
  %3252 = vst.msk [vmem:[#allocation2 + $0xe8] sm:$0x7f] %vm3223, %v3100
  %3253 = vst.msk [vmem:[#allocation2 + $0x100] sm:$0xff] %vm3221, %v3102
  %3254 = vst.msk [vmem:[#allocation2 + $0x108] sm:$0x7f] %vm3223, %v3104
  %3255 = vst.msk [vmem:[#allocation2 + $0x110] sm:$0xff] %vm3221, %v3106
  %3256 = vst.msk [vmem:[#allocation2 + $0x118] sm:$0x7f] %vm3223, %v3108
  %3257 = vst.msk [vmem:[#allocation2 + $0x120] sm:$0xff] %vm3221, %v3110
  %3258 = vst.msk [vmem:[#allocation2 + $0x128] sm:$0x7f] %vm3223, %v3112
  %3259 = vst.msk [vmem:[#allocation2 + $0x130] sm:$0xff] %vm3221, %v3114
  %3260 = vst.msk [vmem:[#allocation2 + $0x138] sm:$0x7f] %vm3223, %v3116
  %3261 = vst.msk [vmem:[#allocation2 + $0x140] sm:$0xff] %vm3221, %v3118
  %3262 = vst.msk [vmem:[#allocation2 + $0x148] sm:$0x7f] %vm3223, %v3120
  %3263 = vst.msk [vmem:[#allocation2 + $0x150] sm:$0xff] %vm3221, %v3122
  %3264 = vst.msk [vmem:[#allocation2 + $0x158] sm:$0x7f] %vm3223, %v3124
  %3265 = vst.msk [vmem:[#allocation2 + $0x160] sm:$0xff] %vm3221, %v3126
  %3266 = vst.msk [vmem:[#allocation2 + $0x168] sm:$0x7f] %vm3223, %v3128
  %3267 = vst.msk [vmem:[#allocation2 + $0x170] sm:$0xff] %vm3221, %v3130
  %3268 = vst.msk [vmem:[#allocation2 + $0x178] sm:$0x7f] %vm3223, %v3132
  %3269 = vst.msk [vmem:[#allocation2 + $0x180] sm:$0xff] %vm3221, %v3134
  %3270 = vst.msk [vmem:[#allocation2 + $0x188] sm:$0x7f] %vm3223, %v3136
  %3271 = vst.msk [vmem:[#allocation2 + $0x190] sm:$0xff] %vm3221, %v3138
  %3272 = vst.msk [vmem:[#allocation2 + $0x198] sm:$0x7f] %vm3223, %v3140
  %3273 = vst.msk [vmem:[#allocation2 + $0x1a0] sm:$0xff] %vm3221, %v3142
  %3274 = vst.msk [vmem:[#allocation2 + $0x1a8] sm:$0x7f] %vm3223, %v3144
  %3275 = vst.msk [vmem:[#allocation2 + $0x1b0] sm:$0xff] %vm3221, %v3146
  %3276 = vst.msk [vmem:[#allocation2 + $0x1b8] sm:$0x7f] %vm3223, %v3148
  %3277 = vst.msk [vmem:[#allocation2 + $0x1c0] sm:$0xff] %vm3221, %v3150
  %3278 = vst.msk [vmem:[#allocation2 + $0x1c8] sm:$0x7f] %vm3223, %v3152
  %3279 = vst.msk [vmem:[#allocation2 + $0x1d0] sm:$0xff] %vm3221, %v3154
  %3280 = vst.msk [vmem:[#allocation2 + $0x1d8] sm:$0x7f] %vm3223, %v3156
  %3281 = vst.msk [vmem:[#allocation2 + $0x1e0] sm:$0xff] %vm3221, %v3158
  %3282 = vst.msk [vmem:[#allocation2 + $0x1e8] sm:$0x7f] %vm3223, %v3160
  %3283 = vst.msk [vmem:[%s2520] sm:$0xff] %vm3221, 0.0
  %3284 = vst.msk [vmem:[%s2520 + $0x8] sm:$0xff] %vm3221, 0.0
  %3285 = vst.msk [vmem:[%s2520 + $0x100] sm:$0xff] %vm3221, 0.0
  %3286 = vst.msk [vmem:[%s2520 + $0x108] sm:$0xff] %vm3221, 0.0
  %vm3287 = vcmask 286976
  %3288 = vst.msk [vmem:[#allocation2 + $0xf] sm:$0x1] %vm3287, 0.0
  %3289 = vst.msk [vmem:[#allocation2 + $0x1f] sm:$0x1] %vm3287, 0.0
  %3290 = vst.msk [vmem:[#allocation2 + $0x2f] sm:$0x1] %vm3287, 0.0
  %3291 = vst.msk [vmem:[#allocation2 + $0x3f] sm:$0x1] %vm3287, 0.0
  %3292 = vst.msk [vmem:[#allocation2 + $0x4f] sm:$0x1] %vm3287, 0.0
  %3293 = vst.msk [vmem:[#allocation2 + $0x5f] sm:$0x1] %vm3287, 0.0
  %3294 = vst.msk [vmem:[#allocation2 + $0x6f] sm:$0x1] %vm3287, 0.0
  %3295 = vst.msk [vmem:[#allocation2 + $0x7f] sm:$0x1] %vm3287, 0.0
  %3296 = vst.msk [vmem:[#allocation2 + $0x8f] sm:$0x1] %vm3287, 0.0
  %3297 = vst.msk [vmem:[#allocation2 + $0x9f] sm:$0x1] %vm3287, 0.0
  %3298 = vst.msk [vmem:[#allocation2 + $0xaf] sm:$0x1] %vm3287, 0.0
  %3299 = vst.msk [vmem:[#allocation2 + $0xbf] sm:$0x1] %vm3287, 0.0
  %3300 = vst.msk [vmem:[#allocation2 + $0xcf] sm:$0x1] %vm3287, 0.0
  %3301 = vst.msk [vmem:[#allocation2 + $0xdf] sm:$0x1] %vm3287, 0.0
  %3302 = vst.msk [vmem:[#allocation2 + $0xef] sm:$0x1] %vm3287, 0.0
  %3303 = vst.msk [vmem:[#allocation2 + $0x10f] sm:$0x1] %vm3287, 0.0
  %3304 = vst.msk [vmem:[#allocation2 + $0x11f] sm:$0x1] %vm3287, 0.0
  %3305 = vst.msk [vmem:[#allocation2 + $0x12f] sm:$0x1] %vm3287, 0.0
  %3306 = vst.msk [vmem:[#allocation2 + $0x13f] sm:$0x1] %vm3287, 0.0
  %3307 = vst.msk [vmem:[#allocation2 + $0x14f] sm:$0x1] %vm3287, 0.0
  %3308 = vst.msk [vmem:[#allocation2 + $0x15f] sm:$0x1] %vm3287, 0.0
  %3309 = vst.msk [vmem:[#allocation2 + $0x16f] sm:$0x1] %vm3287, 0.0
  %3310 = vst.msk [vmem:[#allocation2 + $0x17f] sm:$0x1] %vm3287, 0.0
  %3311 = vst.msk [vmem:[#allocation2 + $0x18f] sm:$0x1] %vm3287, 0.0
  %3312 = vst.msk [vmem:[#allocation2 + $0x19f] sm:$0x1] %vm3287, 0.0
  %3313 = vst.msk [vmem:[#allocation2 + $0x1af] sm:$0x1] %vm3287, 0.0
  %3314 = vst.msk [vmem:[#allocation2 + $0x1bf] sm:$0x1] %vm3287, 0.0
  %3315 = vst.msk [vmem:[#allocation2 + $0x1cf] sm:$0x1] %vm3287, 0.0
  %3316 = vst.msk [vmem:[#allocation2 + $0x1df] sm:$0x1] %vm3287, 0.0
  %3317 = vst.msk [vmem:[#allocation2 + $0x1ef] sm:$0x1] %vm3287, 0.0
  %v3318 = vld [vmem:[#allocation2] sm:$0xff]
  %v3319 = vld [vmem:[#allocation2 + $0x8] sm:$0xff]
  %v3320 = vld [vmem:[#allocation2 + $0x10] sm:$0xff]
  %v3321 = vld [vmem:[#allocation2 + $0x18] sm:$0xff]
  %v3322 = vld [vmem:[#allocation2 + $0x20] sm:$0xff]
  %v3323 = vld [vmem:[#allocation2 + $0x28] sm:$0xff]
  %v3324 = vld [vmem:[#allocation2 + $0x30] sm:$0xff]
  %v3325 = vld [vmem:[#allocation2 + $0x38] sm:$0xff]
  %v3326 = vld [vmem:[#allocation2 + $0x40] sm:$0xff]
  %v3327 = vld [vmem:[#allocation2 + $0x48] sm:$0xff]
  %v3328 = vld [vmem:[#allocation2 + $0x50] sm:$0xff]
  %v3329 = vld [vmem:[#allocation2 + $0x58] sm:$0xff]
  %v3330 = vld [vmem:[#allocation2 + $0x60] sm:$0xff]
  %v3331 = vld [vmem:[#allocation2 + $0x68] sm:$0xff]
  %v3332 = vld [vmem:[#allocation2 + $0x70] sm:$0xff]
  %v3333 = vld [vmem:[#allocation2 + $0x78] sm:$0xff]
  %v3334 = vld [vmem:[#allocation2 + $0x80] sm:$0xff]
  %v3335 = vld [vmem:[#allocation2 + $0x88] sm:$0xff]
  %v3336 = vld [vmem:[#allocation2 + $0x90] sm:$0xff]
  %v3337 = vld [vmem:[#allocation2 + $0x98] sm:$0xff]
  %v3338 = vld [vmem:[#allocation2 + $0xa0] sm:$0xff]
  %v3339 = vld [vmem:[#allocation2 + $0xa8] sm:$0xff]
  %v3340 = vld [vmem:[#allocation2 + $0xb0] sm:$0xff]
  %v3341 = vld [vmem:[#allocation2 + $0xb8] sm:$0xff]
  %v3342 = vld [vmem:[#allocation2 + $0xc0] sm:$0xff]
  %v3343 = vld [vmem:[#allocation2 + $0xc8] sm:$0xff]
  %v3344 = vld [vmem:[#allocation2 + $0xd0] sm:$0xff]
  %v3345 = vld [vmem:[#allocation2 + $0xd8] sm:$0xff]
  %v3346 = vld [vmem:[#allocation2 + $0xe0] sm:$0xff]
  %v3347 = vld [vmem:[#allocation2 + $0xe8] sm:$0xff]
  %v3348 = vld [vmem:[#allocation2 + $0xf0] sm:$0xff]
  %v3349 = vld [vmem:[#allocation2 + $0xf8] sm:$0xff]
  %v3350 = vld [vmem:[#allocation2 + $0x100] sm:$0xff]
  %v3351 = vld [vmem:[#allocation2 + $0x108] sm:$0xff]
  %v3352 = vld [vmem:[#allocation2 + $0x110] sm:$0xff]
  %v3353 = vld [vmem:[#allocation2 + $0x118] sm:$0xff]
  %v3354 = vld [vmem:[#allocation2 + $0x120] sm:$0xff]
  %v3355 = vld [vmem:[#allocation2 + $0x128] sm:$0xff]
  %v3356 = vld [vmem:[#allocation2 + $0x130] sm:$0xff]
  %v3357 = vld [vmem:[#allocation2 + $0x138] sm:$0xff]
  %v3358 = vld [vmem:[#allocation2 + $0x140] sm:$0xff]
  %v3359 = vld [vmem:[#allocation2 + $0x148] sm:$0xff]
  %v3360 = vld [vmem:[#allocation2 + $0x150] sm:$0xff]
  %v3361 = vld [vmem:[#allocation2 + $0x158] sm:$0xff]
  %v3362 = vld [vmem:[#allocation2 + $0x160] sm:$0xff]
  %v3363 = vld [vmem:[#allocation2 + $0x168] sm:$0xff]
  %v3364 = vld [vmem:[#allocation2 + $0x170] sm:$0xff]
  %v3365 = vld [vmem:[#allocation2 + $0x178] sm:$0xff]
  %v3366 = vld [vmem:[#allocation2 + $0x180] sm:$0xff]
  %v3367 = vld [vmem:[#allocation2 + $0x188] sm:$0xff]
  %v3368 = vld [vmem:[#allocation2 + $0x190] sm:$0xff]
  %v3369 = vld [vmem:[#allocation2 + $0x198] sm:$0xff]
  %v3370 = vld [vmem:[#allocation2 + $0x1a0] sm:$0xff]
  %v3371 = vld [vmem:[#allocation2 + $0x1a8] sm:$0xff]
  %v3372 = vld [vmem:[#allocation2 + $0x1b0] sm:$0xff]
  %v3373 = vld [vmem:[#allocation2 + $0x1b8] sm:$0xff]
  %v3374 = vld [vmem:[#allocation2 + $0x1c0] sm:$0xff]
  %v3375 = vld [vmem:[#allocation2 + $0x1c8] sm:$0xff]
  %v3376 = vld [vmem:[#allocation2 + $0x1d0] sm:$0xff]
  %v3377 = vld [vmem:[#allocation2 + $0x1d8] sm:$0xff]
  %v3378 = vld [vmem:[#allocation2 + $0x1e0] sm:$0xff]
  %v3379 = vld [vmem:[#allocation2 + $0x1e8] sm:$0xff]
  %v3380 = vld [vmem:[#allocation2 + $0x1f0] sm:$0xff]
  %v3381 = vld [vmem:[#allocation2 + $0x1f8] sm:$0xff]
  %v3382 = vld [vmem:[%s1] sm:$0xff]
  %v3383 = vld [vmem:[%s1 + $0x8] sm:$0xff]
  %v3384 = vld [vmem:[%s1 + $0x10] sm:$0xff]
  %v3385 = vld [vmem:[%s1 + $0x18] sm:$0xff]
  %v3386 = vld [vmem:[%s1 + $0x20] sm:$0xf]
  %v3387 = vld [vmem:[%s2] sm:$0x1]
  %v3389 = vlaneseq
  %v3390 = vshrl.u32 %v3389, 7
  %v3391 = vsub.s32 0, %v3390
  %v3392 = vrot.slane %v3387, %v3391
  %vm3394 = vcmask 293888
  %v3396 = vsel %vm3394, %v3318, 0
  %v3399 = vsel %vm3394, %v3319, 0
  %v3402 = vsel %vm3394, %v3320, 0
  %v3405 = vsel %vm3394, %v3321, 0
  %v3408 = vsel %vm3394, %v3322, 0
  %v3411 = vsel %vm3394, %v3323, 0
  %v3414 = vsel %vm3394, %v3324, 0
  %v3417 = vsel %vm3394, %v3325, 0
  %v3420 = vsel %vm3394, %v3326, 0
  %v3423 = vsel %vm3394, %v3327, 0
  %v3426 = vsel %vm3394, %v3328, 0
  %v3429 = vsel %vm3394, %v3329, 0
  %v3432 = vsel %vm3394, %v3330, 0
  %v3435 = vsel %vm3394, %v3331, 0
  %v3438 = vsel %vm3394, %v3332, 0
  %v3441 = vsel %vm3394, %v3333, 0
  %v3444 = vsel %vm3394, %v3334, 0
  %v3447 = vsel %vm3394, %v3335, 0
  %v3450 = vsel %vm3394, %v3336, 0
  %v3453 = vsel %vm3394, %v3337, 0
  %v3456 = vsel %vm3394, %v3338, 0
  %v3459 = vsel %vm3394, %v3339, 0
  %v3462 = vsel %vm3394, %v3340, 0
  %v3465 = vsel %vm3394, %v3341, 0
  %v3468 = vsel %vm3394, %v3342, 0
  %v3471 = vsel %vm3394, %v3343, 0
  %v3474 = vsel %vm3394, %v3344, 0
  %v3477 = vsel %vm3394, %v3345, 0
  %v3480 = vsel %vm3394, %v3346, 0
  %v3483 = vsel %vm3394, %v3347, 0
  %v3486 = vsel %vm3394, %v3348, 0
  %v3489 = vsel %vm3394, %v3349, 0
  %v3492 = vsel %vm3394, %v3350, 0
  %v3495 = vsel %vm3394, %v3351, 0
  %v3498 = vsel %vm3394, %v3352, 0
  %v3501 = vsel %vm3394, %v3353, 0
  %v3504 = vsel %vm3394, %v3354, 0
  %v3507 = vsel %vm3394, %v3355, 0
  %v3510 = vsel %vm3394, %v3356, 0
  %v3513 = vsel %vm3394, %v3357, 0
  %v3516 = vsel %vm3394, %v3358, 0
  %v3519 = vsel %vm3394, %v3359, 0
  %v3522 = vsel %vm3394, %v3360, 0
  %v3525 = vsel %vm3394, %v3361, 0
  %v3528 = vsel %vm3394, %v3362, 0
  %v3531 = vsel %vm3394, %v3363, 0
  %v3534 = vsel %vm3394, %v3364, 0
  %v3537 = vsel %vm3394, %v3365, 0
  %v3540 = vsel %vm3394, %v3366, 0
  %v3543 = vsel %vm3394, %v3367, 0
  %v3546 = vsel %vm3394, %v3368, 0
  %v3549 = vsel %vm3394, %v3369, 0
  %v3552 = vsel %vm3394, %v3370, 0
  %v3555 = vsel %vm3394, %v3371, 0
  %v3558 = vsel %vm3394, %v3372, 0
  %v3561 = vsel %vm3394, %v3373, 0
  %v3564 = vsel %vm3394, %v3374, 0
  %v3567 = vsel %vm3394, %v3375, 0
  %v3570 = vsel %vm3394, %v3376, 0
  %v3573 = vsel %vm3394, %v3377, 0
  %v3576 = vsel %vm3394, %v3378, 0
  %v3579 = vsel %vm3394, %v3379, 0
  %v3582 = vsel %vm3394, %v3380, 0
  %v3585 = vsel %vm3394, %v3381, 0
  %vm3587 = vcmask 1043456
  %v3589 = vsel %vm3587, %v3386, 0
  %3591 = vmatprep.subr.mxu0 0.0
  %3592 = vmatpush1.msra.mxu0 0.0
  %3593 = vmatprep.subr.mxu0 0.0
  %3594 = vmatpush1.msra.mxu0 0.0
  %3595 = vmatprep.subr.mxu0 0.0
  %3596 = vmatpush1.msra.mxu0 0.0
  %3597 = vmatprep.subr.mxu0 0.0
  %3598 = vmatpush1.msra.mxu0 0.0
  %3599 = vmatprep.subr.mxu0 0.0
  %3600 = vmatpush1.msra.mxu0 0.0
  %3601 = vmatprep.subr.mxu0 0.0
  %3602 = vmatpush1.msra.mxu0 0.0
  %3603 = vmatprep.subr.mxu0 0.0
  %3604 = vmatpush1.msra.mxu0 0.0
  %3605 = vmatprep.subr.mxu0 0.0
  %3606 = vmatpush1.msra.mxu0 0.0
  %3607 = vmatprep.subr.mxu0 0.0
  %3608 = vmatpush1.msra.mxu0 0.0
  %3609 = vmatprep.subr.mxu0 0.0
  %3610 = vmatpush1.msra.mxu0 0.0
  %3611 = vmatprep.subr.mxu0 0.0
  %3612 = vmatpush1.msra.mxu0 0.0
  %3613 = vmatprep.subr.mxu0 0.0
  %3614 = vmatpush1.msra.mxu0 %v3589
  %3615 = vmatprep.subr.mxu0 0.0
  %3616 = vmatpush1.msra.mxu0 %v3385
  %3617 = vmatprep.subr.mxu0 0.0
  %3618 = vmatpush1.msra.mxu0 %v3384
  %3619 = vmatprep.subr.mxu0 0.0
  %3620 = vmatpush1.msra.mxu0 %v3383
  %3621 = vmatprep.subr.mxu0 0.0
  %3622 = vmatpush1.msra.mxu0 %v3382
  %3623 = vmatprep.subr.mxu0 0.0
  %3624 = vmatpush2.msra.mxu0 0.0
  %3625 = vmatprep.subr.mxu0 0.0
  %3626 = vmatpush2.msra.mxu0 0.0
  %3627 = vmatprep.subr.mxu0 0.0
  %3628 = vmatpush2.msra.mxu0 0.0
  %3629 = vmatprep.subr.mxu0 0.0
  %3630 = vmatpush2.msra.mxu0 0.0
  %3631 = vmatprep.subr.mxu0 0.0
  %3632 = vmatpush2.msra.mxu0 0.0
  %3633 = vmatprep.subr.mxu0 0.0
  %3634 = vmatpush2.msra.mxu0 0.0
  %3635 = vmatprep.subr.mxu0 0.0
  %3636 = vmatpush2.msra.mxu0 0.0
  %3637 = vmatprep.subr.mxu0 0.0
  %3638 = vmatpush2.msra.mxu0 0.0
  %3639 = vmatprep.subr.mxu0 0.0
  %3640 = vmatpush2.msra.mxu0 0.0
  %3641 = vmatprep.subr.mxu0 0.0
  %3642 = vmatpush2.msra.mxu0 0.0
  %3643 = vmatprep.subr.mxu0 0.0
  %3644 = vmatpush2.msra.mxu0 0.0
  %3645 = vmatprep.subr.mxu0 0.0
  %3646 = vmatpush2.msra.mxu0 0.0
  %3647 = vmatprep.subr.mxu0 0.0
  %3648 = vmatpush2.msra.mxu0 0.0
  %3649 = vmatprep.subr.mxu0 0.0
  %3650 = vmatpush2.msra.mxu0 0.0
  %3651 = vmatprep.subr.mxu0 0.0
  %3652 = vmatpush2.msra.mxu0 0.0
  %3653 = vmatprep.subr.mxu0 0.0
  %3654 = vmatpush2.msra.mxu0 0.0
  %3655 = vmatprep.mubr.f32.mxu0 0.0
  %3656 = vmatmul.mubr.f32.gmra.mxu0 %v3396
  %v3657 = vpop.f32.mrf.mxu0
  %v3658 = vadd.f32 %v3392, %v3657
  %v3659 = vpop.f32.mrf.mxu0
  %3660 = vmatprep.mubr.f32.mxu0 0.0
  %3661 = vmatmul.mubr.f32.gmra.mxu0 %v3399
  %v3662 = vpop.f32.mrf.mxu0
  %v3663 = vadd.f32 %v3392, %v3662
  %v3664 = vpop.f32.mrf.mxu0
  %3665 = vmatprep.mubr.f32.mxu0 0.0
  %3666 = vmatmul.mubr.f32.gmra.mxu0 %v3402
  %v3667 = vpop.f32.mrf.mxu0
  %v3668 = vadd.f32 %v3392, %v3667
  %v3669 = vpop.f32.mrf.mxu0
  %3670 = vmatprep.mubr.f32.mxu0 0.0
  %3671 = vmatmul.mubr.f32.gmra.mxu0 %v3405
  %v3672 = vpop.f32.mrf.mxu0
  %v3673 = vadd.f32 %v3392, %v3672
  %v3674 = vpop.f32.mrf.mxu0
  %3675 = vmatprep.mubr.f32.mxu0 0.0
  %3676 = vmatmul.mubr.f32.gmra.mxu0 %v3408
  %v3677 = vpop.f32.mrf.mxu0
  %v3678 = vadd.f32 %v3392, %v3677
  %v3679 = vpop.f32.mrf.mxu0
  %3680 = vmatprep.mubr.f32.mxu0 0.0
  %3681 = vmatmul.mubr.f32.gmra.mxu0 %v3411
  %v3682 = vpop.f32.mrf.mxu0
  %v3683 = vadd.f32 %v3392, %v3682
  %v3684 = vpop.f32.mrf.mxu0
  %3685 = vmatprep.mubr.f32.mxu0 0.0
  %3686 = vmatmul.mubr.f32.gmra.mxu0 %v3414
  %v3687 = vpop.f32.mrf.mxu0
  %v3688 = vadd.f32 %v3392, %v3687
  %v3689 = vpop.f32.mrf.mxu0
  %3690 = vmatprep.mubr.f32.mxu0 0.0
  %3691 = vmatmul.mubr.f32.gmra.mxu0 %v3417
  %v3692 = vpop.f32.mrf.mxu0
  %v3693 = vadd.f32 %v3392, %v3692
  %v3694 = vpop.f32.mrf.mxu0
  %3695 = vmatprep.mubr.f32.mxu0 0.0
  %3696 = vmatmul.mubr.f32.gmra.mxu0 %v3420
  %v3697 = vpop.f32.mrf.mxu0
  %v3698 = vadd.f32 %v3392, %v3697
  %v3699 = vpop.f32.mrf.mxu0
  %3700 = vmatprep.mubr.f32.mxu0 0.0
  %3701 = vmatmul.mubr.f32.gmra.mxu0 %v3423
  %v3702 = vpop.f32.mrf.mxu0
  %v3703 = vadd.f32 %v3392, %v3702
  %v3704 = vpop.f32.mrf.mxu0
  %3705 = vmatprep.mubr.f32.mxu0 0.0
  %3706 = vmatmul.mubr.f32.gmra.mxu0 %v3426
  %v3707 = vpop.f32.mrf.mxu0
  %v3708 = vadd.f32 %v3392, %v3707
  %v3709 = vpop.f32.mrf.mxu0
  %3710 = vmatprep.mubr.f32.mxu0 0.0
  %3711 = vmatmul.mubr.f32.gmra.mxu0 %v3429
  %v3712 = vpop.f32.mrf.mxu0
  %v3713 = vadd.f32 %v3392, %v3712
  %v3714 = vpop.f32.mrf.mxu0
  %3715 = vmatprep.mubr.f32.mxu0 0.0
  %3716 = vmatmul.mubr.f32.gmra.mxu0 %v3432
  %v3717 = vpop.f32.mrf.mxu0
  %v3718 = vadd.f32 %v3392, %v3717
  %v3719 = vpop.f32.mrf.mxu0
  %3720 = vmatprep.mubr.f32.mxu0 0.0
  %3721 = vmatmul.mubr.f32.gmra.mxu0 %v3435
  %v3722 = vpop.f32.mrf.mxu0
  %v3723 = vadd.f32 %v3392, %v3722
  %v3724 = vpop.f32.mrf.mxu0
  %3725 = vmatprep.mubr.f32.mxu0 0.0
  %3726 = vmatmul.mubr.f32.gmra.mxu0 %v3438
  %v3727 = vpop.f32.mrf.mxu0
  %v3728 = vadd.f32 %v3392, %v3727
  %v3729 = vpop.f32.mrf.mxu0
  %3730 = vmatprep.mubr.f32.mxu0 0.0
  %3731 = vmatmul.mubr.f32.gmra.mxu0 %v3441
  %v3732 = vpop.f32.mrf.mxu0
  %v3733 = vadd.f32 %v3392, %v3732
  %v3734 = vpop.f32.mrf.mxu0
  %3735 = vmatprep.mubr.f32.mxu0 0.0
  %3736 = vmatmul.mubr.f32.gmra.mxu0 %v3444
  %v3737 = vpop.f32.mrf.mxu0
  %v3738 = vadd.f32 %v3392, %v3737
  %v3739 = vpop.f32.mrf.mxu0
  %3740 = vmatprep.mubr.f32.mxu0 0.0
  %3741 = vmatmul.mubr.f32.gmra.mxu0 %v3447
  %v3742 = vpop.f32.mrf.mxu0
  %v3743 = vadd.f32 %v3392, %v3742
  %v3744 = vpop.f32.mrf.mxu0
  %3745 = vmatprep.mubr.f32.mxu0 0.0
  %3746 = vmatmul.mubr.f32.gmra.mxu0 %v3450
  %v3747 = vpop.f32.mrf.mxu0
  %v3748 = vadd.f32 %v3392, %v3747
  %v3749 = vpop.f32.mrf.mxu0
  %3750 = vmatprep.mubr.f32.mxu0 0.0
  %3751 = vmatmul.mubr.f32.gmra.mxu0 %v3453
  %v3752 = vpop.f32.mrf.mxu0
  %v3753 = vadd.f32 %v3392, %v3752
  %v3754 = vpop.f32.mrf.mxu0
  %3755 = vmatprep.mubr.f32.mxu0 0.0
  %3756 = vmatmul.mubr.f32.gmra.mxu0 %v3456
  %v3757 = vpop.f32.mrf.mxu0
  %v3758 = vadd.f32 %v3392, %v3757
  %v3759 = vpop.f32.mrf.mxu0
  %3760 = vmatprep.mubr.f32.mxu0 0.0
  %3761 = vmatmul.mubr.f32.gmra.mxu0 %v3459
  %v3762 = vpop.f32.mrf.mxu0
  %v3763 = vadd.f32 %v3392, %v3762
  %v3764 = vpop.f32.mrf.mxu0
  %3765 = vmatprep.mubr.f32.mxu0 0.0
  %3766 = vmatmul.mubr.f32.gmra.mxu0 %v3462
  %v3767 = vpop.f32.mrf.mxu0
  %v3768 = vadd.f32 %v3392, %v3767
  %v3769 = vpop.f32.mrf.mxu0
  %3770 = vmatprep.mubr.f32.mxu0 0.0
  %3771 = vmatmul.mubr.f32.gmra.mxu0 %v3465
  %v3772 = vpop.f32.mrf.mxu0
  %v3773 = vadd.f32 %v3392, %v3772
  %v3774 = vpop.f32.mrf.mxu0
  %3775 = vmatprep.mubr.f32.mxu0 0.0
  %3776 = vmatmul.mubr.f32.gmra.mxu0 %v3468
  %v3777 = vpop.f32.mrf.mxu0
  %v3778 = vadd.f32 %v3392, %v3777
  %v3779 = vpop.f32.mrf.mxu0
  %3780 = vmatprep.mubr.f32.mxu0 0.0
  %3781 = vmatmul.mubr.f32.gmra.mxu0 %v3471
  %v3782 = vpop.f32.mrf.mxu0
  %v3783 = vadd.f32 %v3392, %v3782
  %v3784 = vpop.f32.mrf.mxu0
  %3785 = vmatprep.mubr.f32.mxu0 0.0
  %3786 = vmatmul.mubr.f32.gmra.mxu0 %v3474
  %v3787 = vpop.f32.mrf.mxu0
  %v3788 = vadd.f32 %v3392, %v3787
  %v3789 = vpop.f32.mrf.mxu0
  %3790 = vmatprep.mubr.f32.mxu0 0.0
  %3791 = vmatmul.mubr.f32.gmra.mxu0 %v3477
  %v3792 = vpop.f32.mrf.mxu0
  %v3793 = vadd.f32 %v3392, %v3792
  %v3794 = vpop.f32.mrf.mxu0
  %3795 = vmatprep.mubr.f32.mxu0 0.0
  %3796 = vmatmul.mubr.f32.gmra.mxu0 %v3480
  %v3797 = vpop.f32.mrf.mxu0
  %v3798 = vadd.f32 %v3392, %v3797
  %v3799 = vpop.f32.mrf.mxu0
  %3800 = vmatprep.mubr.f32.mxu0 0.0
  %3801 = vmatmul.mubr.f32.gmra.mxu0 %v3483
  %v3802 = vpop.f32.mrf.mxu0
  %v3803 = vadd.f32 %v3392, %v3802
  %v3804 = vpop.f32.mrf.mxu0
  %3805 = vmatprep.mubr.f32.mxu0 0.0
  %3806 = vmatmul.mubr.f32.gmra.mxu0 %v3486
  %v3807 = vpop.f32.mrf.mxu0
  %v3808 = vadd.f32 %v3392, %v3807
  %v3809 = vpop.f32.mrf.mxu0
  %3810 = vmatprep.mubr.f32.mxu0 0.0
  %3811 = vmatmul.mubr.f32.gmra.mxu0 %v3489
  %v3812 = vpop.f32.mrf.mxu0
  %v3813 = vadd.f32 %v3392, %v3812
  %v3814 = vpop.f32.mrf.mxu0
  %3815 = vmatprep.mubr.f32.mxu0 0.0
  %3816 = vmatmul.mubr.f32.gmra.mxu0 %v3492
  %v3817 = vpop.f32.mrf.mxu0
  %v3818 = vadd.f32 %v3392, %v3817
  %v3819 = vpop.f32.mrf.mxu0
  %3820 = vmatprep.mubr.f32.mxu0 0.0
  %3821 = vmatmul.mubr.f32.gmra.mxu0 %v3495
  %v3822 = vpop.f32.mrf.mxu0
  %v3823 = vadd.f32 %v3392, %v3822
  %v3824 = vpop.f32.mrf.mxu0
  %3825 = vmatprep.mubr.f32.mxu0 0.0
  %3826 = vmatmul.mubr.f32.gmra.mxu0 %v3498
  %v3827 = vpop.f32.mrf.mxu0
  %v3828 = vadd.f32 %v3392, %v3827
  %v3829 = vpop.f32.mrf.mxu0
  %3830 = vmatprep.mubr.f32.mxu0 0.0
  %3831 = vmatmul.mubr.f32.gmra.mxu0 %v3501
  %v3832 = vpop.f32.mrf.mxu0
  %v3833 = vadd.f32 %v3392, %v3832
  %v3834 = vpop.f32.mrf.mxu0
  %3835 = vmatprep.mubr.f32.mxu0 0.0
  %3836 = vmatmul.mubr.f32.gmra.mxu0 %v3504
  %v3837 = vpop.f32.mrf.mxu0
  %v3838 = vadd.f32 %v3392, %v3837
  %v3839 = vpop.f32.mrf.mxu0
  %3840 = vmatprep.mubr.f32.mxu0 0.0
  %3841 = vmatmul.mubr.f32.gmra.mxu0 %v3507
  %v3842 = vpop.f32.mrf.mxu0
  %v3843 = vadd.f32 %v3392, %v3842
  %v3844 = vpop.f32.mrf.mxu0
  %3845 = vmatprep.mubr.f32.mxu0 0.0
  %3846 = vmatmul.mubr.f32.gmra.mxu0 %v3510
  %v3847 = vpop.f32.mrf.mxu0
  %v3848 = vadd.f32 %v3392, %v3847
  %v3849 = vpop.f32.mrf.mxu0
  %3850 = vmatprep.mubr.f32.mxu0 0.0
  %3851 = vmatmul.mubr.f32.gmra.mxu0 %v3513
  %v3852 = vpop.f32.mrf.mxu0
  %v3853 = vadd.f32 %v3392, %v3852
  %v3854 = vpop.f32.mrf.mxu0
  %3855 = vmatprep.mubr.f32.mxu0 0.0
  %3856 = vmatmul.mubr.f32.gmra.mxu0 %v3516
  %v3857 = vpop.f32.mrf.mxu0
  %v3858 = vadd.f32 %v3392, %v3857
  %v3859 = vpop.f32.mrf.mxu0
  %3860 = vmatprep.mubr.f32.mxu0 0.0
  %3861 = vmatmul.mubr.f32.gmra.mxu0 %v3519
  %v3862 = vpop.f32.mrf.mxu0
  %v3863 = vadd.f32 %v3392, %v3862
  %v3864 = vpop.f32.mrf.mxu0
  %3865 = vmatprep.mubr.f32.mxu0 0.0
  %3866 = vmatmul.mubr.f32.gmra.mxu0 %v3522
  %v3867 = vpop.f32.mrf.mxu0
  %v3868 = vadd.f32 %v3392, %v3867
  %v3869 = vpop.f32.mrf.mxu0
  %3870 = vmatprep.mubr.f32.mxu0 0.0
  %3871 = vmatmul.mubr.f32.gmra.mxu0 %v3525
  %v3872 = vpop.f32.mrf.mxu0
  %v3873 = vadd.f32 %v3392, %v3872
  %v3874 = vpop.f32.mrf.mxu0
  %3875 = vmatprep.mubr.f32.mxu0 0.0
  %3876 = vmatmul.mubr.f32.gmra.mxu0 %v3528
  %v3877 = vpop.f32.mrf.mxu0
  %v3878 = vadd.f32 %v3392, %v3877
  %v3879 = vpop.f32.mrf.mxu0
  %3880 = vmatprep.mubr.f32.mxu0 0.0
  %3881 = vmatmul.mubr.f32.gmra.mxu0 %v3531
  %v3882 = vpop.f32.mrf.mxu0
  %v3883 = vadd.f32 %v3392, %v3882
  %v3884 = vpop.f32.mrf.mxu0
  %3885 = vmatprep.mubr.f32.mxu0 0.0
  %3886 = vmatmul.mubr.f32.gmra.mxu0 %v3534
  %v3887 = vpop.f32.mrf.mxu0
  %v3888 = vadd.f32 %v3392, %v3887
  %v3889 = vpop.f32.mrf.mxu0
  %3890 = vmatprep.mubr.f32.mxu0 0.0
  %3891 = vmatmul.mubr.f32.gmra.mxu0 %v3537
  %v3892 = vpop.f32.mrf.mxu0
  %v3893 = vadd.f32 %v3392, %v3892
  %v3894 = vpop.f32.mrf.mxu0
  %3895 = vmatprep.mubr.f32.mxu0 0.0
  %3896 = vmatmul.mubr.f32.gmra.mxu0 %v3540
  %v3897 = vpop.f32.mrf.mxu0
  %v3898 = vadd.f32 %v3392, %v3897
  %v3899 = vpop.f32.mrf.mxu0
  %3900 = vmatprep.mubr.f32.mxu0 0.0
  %3901 = vmatmul.mubr.f32.gmra.mxu0 %v3543
  %v3902 = vpop.f32.mrf.mxu0
  %v3903 = vadd.f32 %v3392, %v3902
  %v3904 = vpop.f32.mrf.mxu0
  %3905 = vmatprep.mubr.f32.mxu0 0.0
  %3906 = vmatmul.mubr.f32.gmra.mxu0 %v3546
  %v3907 = vpop.f32.mrf.mxu0
  %v3908 = vadd.f32 %v3392, %v3907
  %v3909 = vpop.f32.mrf.mxu0
  %3910 = vmatprep.mubr.f32.mxu0 0.0
  %3911 = vmatmul.mubr.f32.gmra.mxu0 %v3549
  %v3912 = vpop.f32.mrf.mxu0
  %v3913 = vadd.f32 %v3392, %v3912
  %v3914 = vpop.f32.mrf.mxu0
  %3915 = vmatprep.mubr.f32.mxu0 0.0
  %3916 = vmatmul.mubr.f32.gmra.mxu0 %v3552
  %v3917 = vpop.f32.mrf.mxu0
  %v3918 = vadd.f32 %v3392, %v3917
  %v3919 = vpop.f32.mrf.mxu0
  %3920 = vmatprep.mubr.f32.mxu0 0.0
  %3921 = vmatmul.mubr.f32.gmra.mxu0 %v3555
  %v3922 = vpop.f32.mrf.mxu0
  %v3923 = vadd.f32 %v3392, %v3922
  %v3924 = vpop.f32.mrf.mxu0
  %3925 = vmatprep.mubr.f32.mxu0 0.0
  %3926 = vmatmul.mubr.f32.gmra.mxu0 %v3558
  %v3927 = vpop.f32.mrf.mxu0
  %v3928 = vadd.f32 %v3392, %v3927
  %v3929 = vpop.f32.mrf.mxu0
  %3930 = vmatprep.mubr.f32.mxu0 0.0
  %3931 = vmatmul.mubr.f32.gmra.mxu0 %v3561
  %v3932 = vpop.f32.mrf.mxu0
  %v3933 = vadd.f32 %v3392, %v3932
  %v3934 = vpop.f32.mrf.mxu0
  %3935 = vmatprep.mubr.f32.mxu0 0.0
  %3936 = vmatmul.mubr.f32.gmra.mxu0 %v3564
  %v3937 = vpop.f32.mrf.mxu0
  %v3938 = vadd.f32 %v3392, %v3937
  %v3939 = vpop.f32.mrf.mxu0
  %3940 = vmatprep.mubr.f32.mxu0 0.0
  %3941 = vmatmul.mubr.f32.gmra.mxu0 %v3567
  %v3942 = vpop.f32.mrf.mxu0
  %v3943 = vadd.f32 %v3392, %v3942
  %v3944 = vpop.f32.mrf.mxu0
  %3945 = vmatprep.mubr.f32.mxu0 0.0
  %3946 = vmatmul.mubr.f32.gmra.mxu0 %v3570
  %v3947 = vpop.f32.mrf.mxu0
  %v3948 = vadd.f32 %v3392, %v3947
  %v3949 = vpop.f32.mrf.mxu0
  %3950 = vmatprep.mubr.f32.mxu0 0.0
  %3951 = vmatmul.mubr.f32.gmra.mxu0 %v3573
  %v3952 = vpop.f32.mrf.mxu0
  %v3953 = vadd.f32 %v3392, %v3952
  %v3954 = vpop.f32.mrf.mxu0
  %3955 = vmatprep.mubr.f32.mxu0 0.0
  %3956 = vmatmul.mubr.f32.gmra.mxu0 %v3576
  %v3957 = vpop.f32.mrf.mxu0
  %v3958 = vadd.f32 %v3392, %v3957
  %v3959 = vpop.f32.mrf.mxu0
  %3960 = vmatprep.mubr.f32.mxu0 0.0
  %3961 = vmatmul.mubr.f32.gmra.mxu0 %v3579
  %v3962 = vpop.f32.mrf.mxu0
  %v3963 = vadd.f32 %v3392, %v3962
  %v3964 = vpop.f32.mrf.mxu0
  %3965 = vmatprep.mubr.f32.mxu0 0.0
  %3966 = vmatmul.mubr.f32.gmra.mxu0 %v3582
  %v3967 = vpop.f32.mrf.mxu0
  %v3968 = vadd.f32 %v3392, %v3967
  %v3969 = vpop.f32.mrf.mxu0
  %3970 = vmatprep.mubr.f32.mxu0 0.0
  %3971 = vmatmul.mubr.f32.gmra.mxu0 %v3585
  %v3972 = vpop.f32.mrf.mxu0
  %v3973 = vadd.f32 %v3392, %v3972
  %v3974 = vpop.f32.mrf.mxu0
  %3975 = vdwg.mxu0
  %v3976 = vmax.f32 %v3658, 0.0
  %v3977 = vmax.f32 %v3663, 0.0
  %v3978 = vmax.f32 %v3668, 0.0
  %v3979 = vmax.f32 %v3673, 0.0
  %v3980 = vmax.f32 %v3678, 0.0
  %v3981 = vmax.f32 %v3683, 0.0
  %v3982 = vmax.f32 %v3688, 0.0
  %v3983 = vmax.f32 %v3693, 0.0
  %v3984 = vmax.f32 %v3698, 0.0
  %v3985 = vmax.f32 %v3703, 0.0
  %v3986 = vmax.f32 %v3708, 0.0
  %v3987 = vmax.f32 %v3713, 0.0
  %v3988 = vmax.f32 %v3718, 0.0
  %v3989 = vmax.f32 %v3723, 0.0
  %v3990 = vmax.f32 %v3728, 0.0
  %v3991 = vmax.f32 %v3733, 0.0
  %v3992 = vmax.f32 %v3738, 0.0
  %v3993 = vmax.f32 %v3743, 0.0
  %v3994 = vmax.f32 %v3748, 0.0
  %v3995 = vmax.f32 %v3753, 0.0
  %v3996 = vmax.f32 %v3758, 0.0
  %v3997 = vmax.f32 %v3763, 0.0
  %v3998 = vmax.f32 %v3768, 0.0
  %v3999 = vmax.f32 %v3773, 0.0
  %v4000 = vmax.f32 %v3778, 0.0
  %v4001 = vmax.f32 %v3783, 0.0
  %v4002 = vmax.f32 %v3788, 0.0
  %v4003 = vmax.f32 %v3793, 0.0
  %v4004 = vmax.f32 %v3798, 0.0
  %v4005 = vmax.f32 %v3803, 0.0
  %v4006 = vmax.f32 %v3808, 0.0
  %v4007 = vmax.f32 %v3813, 0.0
  %v4008 = vmax.f32 %v3818, 0.0
  %v4009 = vmax.f32 %v3823, 0.0
  %v4010 = vmax.f32 %v3828, 0.0
  %v4011 = vmax.f32 %v3833, 0.0
  %v4012 = vmax.f32 %v3838, 0.0
  %v4013 = vmax.f32 %v3843, 0.0
  %v4014 = vmax.f32 %v3848, 0.0
  %v4015 = vmax.f32 %v3853, 0.0
  %v4016 = vmax.f32 %v3858, 0.0
  %v4017 = vmax.f32 %v3863, 0.0
  %v4018 = vmax.f32 %v3868, 0.0
  %v4019 = vmax.f32 %v3873, 0.0
  %v4020 = vmax.f32 %v3878, 0.0
  %v4021 = vmax.f32 %v3883, 0.0
  %v4022 = vmax.f32 %v3888, 0.0
  %v4023 = vmax.f32 %v3893, 0.0
  %v4024 = vmax.f32 %v3898, 0.0
  %v4025 = vmax.f32 %v3903, 0.0
  %v4026 = vmax.f32 %v3908, 0.0
  %v4027 = vmax.f32 %v3913, 0.0
  %v4028 = vmax.f32 %v3918, 0.0
  %v4029 = vmax.f32 %v3923, 0.0
  %v4030 = vmax.f32 %v3928, 0.0
  %v4031 = vmax.f32 %v3933, 0.0
  %v4032 = vmax.f32 %v3938, 0.0
  %v4033 = vmax.f32 %v3943, 0.0
  %v4034 = vmax.f32 %v3948, 0.0
  %v4035 = vmax.f32 %v3953, 0.0
  %v4036 = vmax.f32 %v3958, 0.0
  %v4037 = vmax.f32 %v3963, 0.0
  %v4038 = vmax.f32 %v3968, 0.0
  %v4039 = vmax.f32 %v3973, 0.0
  %vm4040 = vcmask 64512
  %4041 = vst.msk [vmem:[%s3] sm:$0xff] %vm4040, %v3976
  %4042 = vst.msk [vmem:[%s3 + $0x8] sm:$0xff] %vm4040, %v3977
  %4043 = vst.msk [vmem:[%s3 + $0x10] sm:$0xff] %vm4040, %v3978
  %4044 = vst.msk [vmem:[%s3 + $0x18] sm:$0xff] %vm4040, %v3979
  %4045 = vst.msk [vmem:[%s3 + $0x20] sm:$0xff] %vm4040, %v3980
  %4046 = vst.msk [vmem:[%s3 + $0x28] sm:$0xff] %vm4040, %v3981
  %4047 = vst.msk [vmem:[%s3 + $0x30] sm:$0xff] %vm4040, %v3982
  %4048 = vst.msk [vmem:[%s3 + $0x38] sm:$0xff] %vm4040, %v3983
  %4049 = vst.msk [vmem:[%s3 + $0x40] sm:$0xff] %vm4040, %v3984
  %4050 = vst.msk [vmem:[%s3 + $0x48] sm:$0xff] %vm4040, %v3985
  %4051 = vst.msk [vmem:[%s3 + $0x50] sm:$0xff] %vm4040, %v3986
  %4052 = vst.msk [vmem:[%s3 + $0x58] sm:$0xff] %vm4040, %v3987
  %4053 = vst.msk [vmem:[%s3 + $0x60] sm:$0xff] %vm4040, %v3988
  %4054 = vst.msk [vmem:[%s3 + $0x68] sm:$0xff] %vm4040, %v3989
  %4055 = vst.msk [vmem:[%s3 + $0x70] sm:$0xff] %vm4040, %v3990
  %4056 = vst.msk [vmem:[%s3 + $0x78] sm:$0xff] %vm4040, %v3991
  %4057 = vst.msk [vmem:[%s3 + $0x80] sm:$0xff] %vm4040, %v3992
  %4058 = vst.msk [vmem:[%s3 + $0x88] sm:$0xff] %vm4040, %v3993
  %4059 = vst.msk [vmem:[%s3 + $0x90] sm:$0xff] %vm4040, %v3994
  %4060 = vst.msk [vmem:[%s3 + $0x98] sm:$0xff] %vm4040, %v3995
  %4061 = vst.msk [vmem:[%s3 + $0xa0] sm:$0xff] %vm4040, %v3996
  %4062 = vst.msk [vmem:[%s3 + $0xa8] sm:$0xff] %vm4040, %v3997
  %4063 = vst.msk [vmem:[%s3 + $0xb0] sm:$0xff] %vm4040, %v3998
  %4064 = vst.msk [vmem:[%s3 + $0xb8] sm:$0xff] %vm4040, %v3999
  %4065 = vst.msk [vmem:[%s3 + $0xc0] sm:$0xff] %vm4040, %v4000
  %4066 = vst.msk [vmem:[%s3 + $0xc8] sm:$0xff] %vm4040, %v4001
  %4067 = vst.msk [vmem:[%s3 + $0xd0] sm:$0xff] %vm4040, %v4002
  %4068 = vst.msk [vmem:[%s3 + $0xd8] sm:$0xff] %vm4040, %v4003
  %4069 = vst.msk [vmem:[%s3 + $0xe0] sm:$0xff] %vm4040, %v4004
  %4070 = vst.msk [vmem:[%s3 + $0xe8] sm:$0xff] %vm4040, %v4005
  %4071 = vst.msk [vmem:[%s3 + $0xf0] sm:$0xff] %vm4040, %v4006
  %4072 = vst.msk [vmem:[%s3 + $0xf8] sm:$0xff] %vm4040, %v4007
  %4073 = vst.msk [vmem:[%s3 + $0x100] sm:$0xff] %vm4040, %v4008
  %4074 = vst.msk [vmem:[%s3 + $0x108] sm:$0xff] %vm4040, %v4009
  %4075 = vst.msk [vmem:[%s3 + $0x110] sm:$0xff] %vm4040, %v4010
  %4076 = vst.msk [vmem:[%s3 + $0x118] sm:$0xff] %vm4040, %v4011
  %4077 = vst.msk [vmem:[%s3 + $0x120] sm:$0xff] %vm4040, %v4012
  %4078 = vst.msk [vmem:[%s3 + $0x128] sm:$0xff] %vm4040, %v4013
  %4079 = vst.msk [vmem:[%s3 + $0x130] sm:$0xff] %vm4040, %v4014
  %4080 = vst.msk [vmem:[%s3 + $0x138] sm:$0xff] %vm4040, %v4015
  %4081 = vst.msk [vmem:[%s3 + $0x140] sm:$0xff] %vm4040, %v4016
  %4082 = vst.msk [vmem:[%s3 + $0x148] sm:$0xff] %vm4040, %v4017
  %4083 = vst.msk [vmem:[%s3 + $0x150] sm:$0xff] %vm4040, %v4018
  %4084 = vst.msk [vmem:[%s3 + $0x158] sm:$0xff] %vm4040, %v4019
  %4085 = vst.msk [vmem:[%s3 + $0x160] sm:$0xff] %vm4040, %v4020
  %4086 = vst.msk [vmem:[%s3 + $0x168] sm:$0xff] %vm4040, %v4021
  %4087 = vst.msk [vmem:[%s3 + $0x170] sm:$0xff] %vm4040, %v4022
  %4088 = vst.msk [vmem:[%s3 + $0x178] sm:$0xff] %vm4040, %v4023
  %4089 = vst.msk [vmem:[%s3 + $0x180] sm:$0xff] %vm4040, %v4024
  %4090 = vst.msk [vmem:[%s3 + $0x188] sm:$0xff] %vm4040, %v4025
  %4091 = vst.msk [vmem:[%s3 + $0x190] sm:$0xff] %vm4040, %v4026
  %4092 = vst.msk [vmem:[%s3 + $0x198] sm:$0xff] %vm4040, %v4027
  %4093 = vst.msk [vmem:[%s3 + $0x1a0] sm:$0xff] %vm4040, %v4028
  %4094 = vst.msk [vmem:[%s3 + $0x1a8] sm:$0xff] %vm4040, %v4029
  %4095 = vst.msk [vmem:[%s3 + $0x1b0] sm:$0xff] %vm4040, %v4030
  %4096 = vst.msk [vmem:[%s3 + $0x1b8] sm:$0xff] %vm4040, %v4031
  %4097 = vst.msk [vmem:[%s3 + $0x1c0] sm:$0xff] %vm4040, %v4032
  %4098 = vst.msk [vmem:[%s3 + $0x1c8] sm:$0xff] %vm4040, %v4033
  %4099 = vst.msk [vmem:[%s3 + $0x1d0] sm:$0xff] %vm4040, %v4034
  %4100 = vst.msk [vmem:[%s3 + $0x1d8] sm:$0xff] %vm4040, %v4035
  %4101 = vst.msk [vmem:[%s3 + $0x1e0] sm:$0xff] %vm4040, %v4036
  %4102 = vst.msk [vmem:[%s3 + $0x1e8] sm:$0xff] %vm4040, %v4037
  %4103 = vst.msk [vmem:[%s3 + $0x1f0] sm:$0xff] %vm4040, %v4038
  %4104 = vst.msk [vmem:[%s3 + $0x1f8] sm:$0xff] %vm4040, %v4039
  // Predicated region
  $region14: #{tpu_custom_call.1} parent=0 // pred_check
    _
  $region15: #{tpu_custom_call.1} parent=0 // pred_check_branch
    %4106 = sbr.rel (0) target = $region17
  $region16: #{tpu_custom_call.1} parent=0 // pred_region
    _
  $region17: #{tpu_custom_call.1} parent=0 // pred_fallthru
    _
  // Predicated region
  $region18: #{tpu_custom_call.1} parent=0 // pred_check
    _
  $region19: #{tpu_custom_call.1} parent=0 // pred_check_branch
    %4108 = sbr.rel (0) target = $region21
  $region20: #{tpu_custom_call.1} parent=0 // pred_region
    _
  $region21: #{tpu_custom_call.1} parent=0 // pred_fallthru
    _

</llo_original>
